<compile_context>
chip_gen: v5e
topology: v5e:2x2
jax: 0.10.0
libtpu: 0.0.40
codegen_flags: <defaults>
</compile_context>

<pallas_src>
import functools

import jax
import jax.numpy as jnp
from jax.experimental import pallas as pl
from jax.experimental.pallas import tpu as pltpu

TOKEN_DIM = 512      # token_embedding_size
TEXT_DIM = 512       # text_vector_size
BACKBONE_CH = 1536   # EfficientNetB3 output feature channels (conv1x1 in_channels)
PATCH = 8            # stand-in backbone spatial downsampling factor
SPATIAL_TILE = 512   # rows (spatial positions) per grid step (cap)


def _round_up(x, m):
    return ((x + m - 1) // m) * m


def _vmem_limit_bytes():
    # Generation-aware VMEM budget: 96 MiB is fine on v5e/v6e (128 MiB VMEM)
    # but exceeds v7x's 64 MiB physical VMEM, so cap at ~75% of capacity.
    try:
        cap = int(pltpu.get_tpu_info().vmem_capacity_bytes)
    except Exception:
        cap = 64 * 1024 * 1024
    return min(96 * 1024 * 1024, (cap * 3) // 4)


def _encoder_kernel(patches_ref, gs_ref, bs_ref, g_ref, a_ref,
                    wstem_ref, w1_ref, out_ref, acc_ref,
                    *, s_valid, ts, needs_mask):
    # patches_ref : (TS, PDIM_PAD) bf16   flattened, zero-padded image patches
    # gs_ref/bs_ref : (1, 1536) f32       hoisted early-FiLM scale / shift
    # g_ref/a_ref   : (1, 512)  f32       hoisted output-FiLM scale / shift
    # wstem_ref : (PDIM_PAD, 1536) bf16,  w1_ref : (1536, 512) bf16
    # out_ref   : (1, 512) f32,           acc_ref: (1, 512) f32 scratch
    si = pl.program_id(1)

    @pl.when(si == 0)
    def _init():
        acc_ref[...] = jnp.zeros_like(acc_ref)

    # ---- stand-in EfficientNetB3 stem with early FiLM (bf16 MXU, f32 acc) ---
    # TODO(synk): the real EfficientNetB3 backbone (MBConv stacks, imagenet
    # weights) is not reproduced; a patchify-projection + early FiLM + ReLU
    # stands in and produces the same 1536-channel feature-map contract.
    h = jnp.dot(patches_ref[...], wstem_ref[...],
                preferred_element_type=jnp.float32)                 # (TS, 1536) f32
    h = gs_ref[...] * h + bs_ref[...]                               # early FiLM (f32 VPU)
    h = jnp.maximum(h, 0.0)

    # ---- conv1x1 (1536 -> 512, bias=False): per-pixel channel matmul --------
    y = jnp.dot(h.astype(jnp.bfloat16), w1_ref[...],
                preferred_element_type=jnp.float32)                 # (TS, 512) f32

    # ---- FilmConditioning: (1 + mult(ctx)) * y + add(ctx), hoisted to g/a ---
    z = g_ref[...] * y + a_ref[...]                                 # (TS, 512) f32

    # ---- spatial mean: accumulate masked row-sum, divide on last tile -------
    if needs_mask:
        row = si * ts + jax.lax.broadcasted_iota(jnp.int32, z.shape, 0)
        z = jnp.where(row < s_valid, z, 0.0)
    acc_ref[...] += jnp.sum(z, axis=0, keepdims=True)

    @pl.when(si == pl.num_programs(1) - 1)
    def _finalize():
        out_ref[...] = acc_ref[...] * jnp.float32(1.0 / s_valid)


def init_params(key):
    """Deterministic synthetic parameters matching the module's shapes (f32)."""
    ks = jax.random.split(key, 10)
    pdim = 3 * PATCH * PATCH
    scale = 0.02
    wstem = scale * jax.random.normal(ks[0], (pdim, BACKBONE_CH), jnp.float32)
    wms   = scale * jax.random.normal(ks[1], (TEXT_DIM, BACKBONE_CH), jnp.float32)
    bms   = scale * jax.random.normal(ks[2], (1, BACKBONE_CH), jnp.float32)
    was   = scale * jax.random.normal(ks[3], (TEXT_DIM, BACKBONE_CH), jnp.float32)
    bas   = scale * jax.random.normal(ks[4], (1, BACKBONE_CH), jnp.float32)
    w1    = scale * jax.random.normal(ks[5], (BACKBONE_CH, TOKEN_DIM), jnp.float32)
    wm    = scale * jax.random.normal(ks[6], (TEXT_DIM, TOKEN_DIM), jnp.float32)
    bm    = scale * jax.random.normal(ks[7], (1, TOKEN_DIM), jnp.float32)
    wa    = scale * jax.random.normal(ks[8], (TEXT_DIM, TOKEN_DIM), jnp.float32)
    ba    = scale * jax.random.normal(ks[9], (1, TOKEN_DIM), jnp.float32)
    return (wstem, wms, bms, was, bas, w1, wm, bm, wa, ba)


def efficientnet_encoder(image, context, params):
    """image: [B, 3, H, W] (NCHW, like PyTorch); context: [B, 512] -> [B, 512]."""
    (wstem, wms, bms, was, bas, w1, wm, bm, wa, ba) = params
    B, C, H, W = image.shape
    assert H % PATCH == 0 and W % PATCH == 0
    hp, wp = H // PATCH, W // PATCH
    S = hp * wp
    pdim = C * PATCH * PATCH

    # Lane/MXU-friendly padded sizes and spatial tiling.
    pdim_pad = _round_up(pdim, 128)                 # 192 -> 256
    ts = min(SPATIAL_TILE, _round_up(S, 8))
    s_pad = _round_up(S, ts)
    num_s_tiles = s_pad // ts

    # ---- JAX-side glue ------------------------------------------------------
    # Patchify NCHW -> (B, S, pdim), zero-pad to (B, s_pad, pdim_pad), bf16.
    patches = image.reshape(B, C, hp, PATCH, wp, PATCH)
    patches = patches.transpose(0, 2, 4, 1, 3, 5).reshape(B, S, pdim)
    patches = jnp.pad(patches, ((0, 0), (0, s_pad - S), (0, pdim_pad - pdim)))
    patches = patches.astype(jnp.bfloat16)

    # Hoisted context FiLM projections (batched M=B matmuls, f32).
    ctx = context.astype(jnp.float32)
    scale_s = (1.0 + ctx @ wms + bms).reshape(B, 1, BACKBONE_CH)   # early FiLM scale
    shift_s = (ctx @ was + bas).reshape(B, 1, BACKBONE_CH)         # early FiLM shift
    scale_o = (1.0 + ctx @ wm + bm).reshape(B, 1, TOKEN_DIM)       # output FiLM scale
    shift_o = (ctx @ wa + ba).reshape(B, 1, TOKEN_DIM)             # output FiLM shift

    # bf16 matmul weights (stem rows zero-padded to pdim_pad).
    wstem_b = jnp.pad(wstem, ((0, pdim_pad - pdim), (0, 0))).astype(jnp.bfloat16)
    w1_b = w1.astype(jnp.bfloat16)

    kernel = functools.partial(
        _encoder_kernel, s_valid=S, ts=ts, needs_mask=(s_pad != S))

    grid_spec = pltpu.PrefetchScalarGridSpec(
        num_scalar_prefetch=0,
        grid=(B, num_s_tiles),
        in_specs=[
            pl.BlockSpec((None, ts, pdim_pad), lambda b, s: (b, s, 0)),      # patches
            pl.BlockSpec((None, 1, BACKBONE_CH), lambda b, s: (b, 0, 0)),    # scale_s
            pl.BlockSpec((None, 1, BACKBONE_CH), lambda b, s: (b, 0, 0)),    # shift_s
            pl.BlockSpec((None, 1, TOKEN_DIM), lambda b, s: (b, 0, 0)),      # scale_o
            pl.BlockSpec((None, 1, TOKEN_DIM), lambda b, s: (b, 0, 0)),      # shift_o
            pl.BlockSpec((pdim_pad, BACKBONE_CH), lambda b, s: (0, 0)),      # wstem (bf16)
            pl.BlockSpec((BACKBONE_CH, TOKEN_DIM), lambda b, s: (0, 0)),     # w1    (bf16)
        ],
        out_specs=pl.BlockSpec((None, 1, TOKEN_DIM), lambda b, s: (b, 0, 0)),
        scratch_shapes=[pltpu.VMEM((1, TOKEN_DIM), jnp.float32)],
    )

    out = pl.pallas_call(
        kernel,
        out_shape=jax.ShapeDtypeStruct((B, 1, TOKEN_DIM), jnp.float32),
        grid_spec=grid_spec,
        compiler_params=pltpu.CompilerParams(
            # B across megacores; S carries the mean accumulator -> arbitrary.
            # (On v7x with B==1 deployments, swap parallelism to the S axis.)
            dimension_semantics=("parallel", "arbitrary"),
            vmem_limit_bytes=_vmem_limit_bytes(),
        ),
    )(patches, scale_s, shift_s, scale_o, shift_o, wstem_b, w1_b)
    return out.reshape(B, TOKEN_DIM)


if __name__ == "__main__":
    key = jax.random.PRNGKey(0)
    k_img, k_ctx = jax.random.split(key)
    image = jax.random.normal(k_img, (2, 3, 16, 16), jnp.float32)   # NCHW
    context = jax.random.normal(k_ctx, (2, TEXT_DIM), jnp.float32)

    params = init_params(jax.random.PRNGKey(1))

    out = efficientnet_encoder(image, context, params)
    out = jax.block_until_ready(out)

    assert out.shape == (2, TOKEN_DIM), out.shape
    assert bool(jnp.all(jnp.isfinite(out)))
    print("KERNEL_OK")
</pallas_src>

<mosaic_0001>
module attributes {stable_mosaic.version = 11 : i64} {
  func.func @_encoder_kernel(%arg0: i32, %arg1: i32, %arg2: memref<1x8x256xbf16, #tpu.memory_space<vmem>>, %arg3: memref<1x1x1536xf32, #tpu.memory_space<vmem>>, %arg4: memref<1x1x1536xf32, #tpu.memory_space<vmem>>, %arg5: memref<1x1x512xf32, #tpu.memory_space<vmem>>, %arg6: memref<1x1x512xf32, #tpu.memory_space<vmem>>, %arg7: memref<256x1536xbf16, #tpu.memory_space<vmem>>, %arg8: memref<1536x512xbf16, #tpu.memory_space<vmem>>, %arg9: memref<1x1x512xf32, #tpu.memory_space<vmem>>, %arg10: memref<1x512xf32, #tpu.memory_space<vmem>>) attributes {dimension_semantics = [#tpu.dimension_semantics<parallel>, #tpu.dimension_semantics<arbitrary>], iteration_bounds = array<i64: 2, 1>, scalar_prefetch = 0 : i64, scratch_operands = 1 : i64, tpu.core_type = #tpu.core_type<tc>, window_params = [{transform_indices = @transform_0, window_bounds = array<i64: 1, 8, 256>}, {transform_indices = @transform_1, window_bounds = array<i64: 1, 1, 1536>}, {transform_indices = @transform_2, window_bounds = array<i64: 1, 1, 1536>}, {transform_indices = @transform_3, window_bounds = array<i64: 1, 1, 512>}, {transform_indices = @transform_4, window_bounds = array<i64: 1, 1, 512>}, {pipeline_mode = #tpu.pipeline_mode<synchronous>, transform_indices = @transform_5, window_bounds = array<i64: 256, 1536>}, {pipeline_mode = #tpu.pipeline_mode<synchronous>, transform_indices = @transform_6, window_bounds = array<i64: 1536, 512>}, {transform_indices = @transform_7, window_bounds = array<i64: 1, 1, 512>}]} {
    %c0_i32 = arith.constant 0 : i32
    %0 = arith.cmpi eq, %arg1, %c0_i32 : i32
    %1 = arith.extui %0 : i1 to i32
    %c0_i32_0 = arith.constant 0 : i32
    %2 = arith.cmpi ne, %1, %c0_i32_0 : i32
    scf.if %2 {
      %cst_29 = arith.constant 0.000000e+00 : f32
      %44 = vector.broadcast %cst_29 : f32 to vector<1x512xf32>
      %c0_30 = arith.constant 0 : index
      %c0_31 = arith.constant 0 : index
      %45 = vector.load %arg10[%c0_30, %c0_31] : memref<1x512xf32, #tpu.memory_space<vmem>>, vector<1x512xf32>
      tpu.vector_store %arg10[%c0_30, %c0_31], %44 {strides = array<i32>} : memref<1x512xf32, #tpu.memory_space<vmem>>, vector<1x512xf32>,
    } else {
    }
    %c0 = arith.constant 0 : index
    %c0_1 = arith.constant 0 : index
    %c0_2 = arith.constant 0 : index
    %3 = vector.load %arg2[%c0, %c0_1, %c0_2] : memref<1x8x256xbf16, #tpu.memory_space<vmem>>, vector<1x8x256xbf16>
    %4 = vector.shape_cast %3 : vector<1x8x256xbf16> to vector<8x256xbf16>
    %c0_3 = arith.constant 0 : index
    %c0_4 = arith.constant 0 : index
    %5 = vector.load %arg7[%c0_3, %c0_4] : memref<256x1536xbf16, #tpu.memory_space<vmem>>, vector<256x1536xbf16>
    %cst = arith.constant dense<0.000000e+00> : vector<8x1536xf32>
    %6 = tpu.matmul %4, %5, %cst {dimension_numbers = #tpu.dot_dimension_numbers<[1], [0], [0], [1], [0, 0, 1, 1], [], []>} : vector<8x256xbf16>, vector<256x1536xbf16>, vector<8x1536xf32> -> vector<8x1536xf32>
    %c0_5 = arith.constant 0 : index
    %c0_6 = arith.constant 0 : index
    %c0_7 = arith.constant 0 : index
    %7 = vector.load %arg3[%c0_5, %c0_6, %c0_7] : memref<1x1x1536xf32, #tpu.memory_space<vmem>>, vector<1x1x1536xf32>
    %8 = vector.shape_cast %7 : vector<1x1x1536xf32> to vector<1x1536xf32>
    %9 = vector.broadcast %8 : vector<1x1536xf32> to vector<8x1536xf32>
    %10 = arith.mulf %9, %6 : vector<8x1536xf32>
    %c0_8 = arith.constant 0 : index
    %c0_9 = arith.constant 0 : index
    %c0_10 = arith.constant 0 : index
    %11 = vector.load %arg4[%c0_8, %c0_9, %c0_10] : memref<1x1x1536xf32, #tpu.memory_space<vmem>>, vector<1x1x1536xf32>
    %12 = vector.shape_cast %11 : vector<1x1x1536xf32> to vector<1x1536xf32>
    %13 = vector.broadcast %12 : vector<1x1536xf32> to vector<8x1536xf32>
    %14 = arith.addf %10, %13 : vector<8x1536xf32>
    %cst_11 = arith.constant 0.000000e+00 : f32
    %15 = vector.broadcast %cst_11 : f32 to vector<8x1536xf32>
    %16 = arith.maximumf %14, %15 : vector<8x1536xf32>
    %17 = arith.truncf %16 : vector<8x1536xf32> to vector<8x1536xbf16>
    %c0_12 = arith.constant 0 : index
    %c0_13 = arith.constant 0 : index
    %18 = vector.load %arg8[%c0_12, %c0_13] : memref<1536x512xbf16, #tpu.memory_space<vmem>>, vector<1536x512xbf16>
    %cst_14 = arith.constant dense<0.000000e+00> : vector<8x512xf32>
    %19 = tpu.matmul %17, %18, %cst_14 {dimension_numbers = #tpu.dot_dimension_numbers<[1], [0], [0], [1], [0, 0, 1, 1], [], []>} : vector<8x1536xbf16>, vector<1536x512xbf16>, vector<8x512xf32> -> vector<8x512xf32>
    %c0_15 = arith.constant 0 : index
    %c0_16 = arith.constant 0 : index
    %c0_17 = arith.constant 0 : index
    %20 = vector.load %arg5[%c0_15, %c0_16, %c0_17] : memref<1x1x512xf32, #tpu.memory_space<vmem>>, vector<1x1x512xf32>
    %21 = vector.shape_cast %20 : vector<1x1x512xf32> to vector<1x512xf32>
    %22 = vector.broadcast %21 : vector<1x512xf32> to vector<8x512xf32>
    %23 = arith.mulf %22, %19 : vector<8x512xf32>
    %c0_18 = arith.constant 0 : index
    %c0_19 = arith.constant 0 : index
    %c0_20 = arith.constant 0 : index
    %24 = vector.load %arg6[%c0_18, %c0_19, %c0_20] : memref<1x1x512xf32, #tpu.memory_space<vmem>>, vector<1x1x512xf32>
    %25 = vector.shape_cast %24 : vector<1x1x512xf32> to vector<1x512xf32>
    %26 = vector.broadcast %25 : vector<1x512xf32> to vector<8x512xf32>
    %27 = arith.addf %23, %26 : vector<8x512xf32>
    %c8_i32 = arith.constant 8 : i32
    %28 = arith.muli %arg1, %c8_i32 : i32
    %29 = tpu.iota {dimensions = array<i32: 0>} : vector<8x512xi32>
    %30 = vector.broadcast %28 : i32 to vector<8x512xi32>
    %31 = arith.addi %30, %29 : vector<8x512xi32>
    %c4_i32 = arith.constant 4 : i32
    %32 = vector.broadcast %c4_i32 : i32 to vector<8x512xi32>
    %33 = arith.cmpi slt, %31, %32 : vector<8x512xi32>
    %cst_21 = arith.constant 0.000000e+00 : f32
    %34 = vector.broadcast %cst_21 : f32 to vector<8x512xf32>
    %35 = arith.select %33, %27, %34 : vector<8x512xi1>, vector<8x512xf32>
    %c0_22 = arith.constant 0 : index
    %c0_23 = arith.constant 0 : index
    %36 = vector.load %arg10[%c0_22, %c0_23] : memref<1x512xf32, #tpu.memory_space<vmem>>, vector<1x512xf32>
    %cst_24 = arith.constant dense<0.000000e+00> : vector<512xf32>
    %37 = vector.multi_reduction <add>, %35, %cst_24 [0] : vector<8x512xf32> to vector<512xf32>
    %38 = vector.shape_cast %37 : vector<512xf32> to vector<1x512xf32>
    %39 = arith.addf %36, %38 : vector<1x512xf32>
    %c0_25 = arith.constant 0 : index
    %c0_26 = arith.constant 0 : index
    %40 = vector.load %arg10[%c0_25, %c0_26] : memref<1x512xf32, #tpu.memory_space<vmem>>, vector<1x512xf32>
    tpu.vector_store %arg10[%c0_25, %c0_26], %39 {strides = array<i32>} : memref<1x512xf32, #tpu.memory_space<vmem>>, vector<1x512xf32>,
    %c0_i32_27 = arith.constant 0 : i32
    %41 = arith.cmpi eq, %arg1, %c0_i32_27 : i32
    %42 = arith.extui %41 : i1 to i32
    %c0_i32_28 = arith.constant 0 : i32
    %43 = arith.cmpi ne, %42, %c0_i32_28 : i32
    scf.if %43 {
      %c0_29 = arith.constant 0 : index
      %c0_30 = arith.constant 0 : index
      %44 = vector.load %arg10[%c0_29, %c0_30] : memref<1x512xf32, #tpu.memory_space<vmem>>, vector<1x512xf32>
      %cst_31 = arith.constant 2.500000e-01 : f32
      %45 = vector.broadcast %cst_31 : f32 to vector<1x512xf32>
      %46 = arith.mulf %44, %45 : vector<1x512xf32>
      %c0_32 = arith.constant 0 : index
      %c0_33 = arith.constant 0 : index
      %c0_34 = arith.constant 0 : index
      %47 = vector.load %arg9[%c0_32, %c0_33, %c0_34] : memref<1x1x512xf32, #tpu.memory_space<vmem>>, vector<1x1x512xf32>
      %48 = vector.shape_cast %47 : vector<1x1x512xf32> to vector<1x512xf32>
      %49 = vector.shape_cast %46 : vector<1x512xf32> to vector<1x1x512xf32>
      tpu.vector_store %arg9[%c0_32, %c0_33, %c0_34], %49 {strides = array<i32>} : memref<1x1x512xf32, #tpu.memory_space<vmem>>, vector<1x1x512xf32>,
    } else {
    }
    return
  }
  func.func @transform_0(%arg0: i32, %arg1: i32) -> (i32, i32, i32) {
    %c0_i32 = arith.constant 0 : i32
    %c0_i32_0 = arith.constant 0 : i32
    return %arg0, %arg1, %c0_i32 : i32, i32, i32
  }
  func.func @transform_1(%arg0: i32, %arg1: i32) -> (i32, i32, i32) {
    %c0_i32 = arith.constant 0 : i32
    %c0_i32_0 = arith.constant 0 : i32
    %c0_i32_1 = arith.constant 0 : i32
    return %arg0, %c0_i32, %c0_i32_0 : i32, i32, i32
  }
  func.func @transform_2(%arg0: i32, %arg1: i32) -> (i32, i32, i32) {
    %c0_i32 = arith.constant 0 : i32
    %c0_i32_0 = arith.constant 0 : i32
    %c0_i32_1 = arith.constant 0 : i32
    return %arg0, %c0_i32, %c0_i32_0 : i32, i32, i32
  }
  func.func @transform_3(%arg0: i32, %arg1: i32) -> (i32, i32, i32) {
    %c0_i32 = arith.constant 0 : i32
    %c0_i32_0 = arith.constant 0 : i32
    %c0_i32_1 = arith.constant 0 : i32
    return %arg0, %c0_i32, %c0_i32_0 : i32, i32, i32
  }
  func.func @transform_4(%arg0: i32, %arg1: i32) -> (i32, i32, i32) {
    %c0_i32 = arith.constant 0 : i32
    %c0_i32_0 = arith.constant 0 : i32
    %c0_i32_1 = arith.constant 0 : i32
    return %arg0, %c0_i32, %c0_i32_0 : i32, i32, i32
  }
  func.func @transform_5(%arg0: i32, %arg1: i32) -> (i32, i32) {
    %c0_i32 = arith.constant 0 : i32
    %c0_i32_0 = arith.constant 0 : i32
    %c0_i32_1 = arith.constant 0 : i32
    return %c0_i32, %c0_i32_0 : i32, i32
  }
  func.func @transform_6(%arg0: i32, %arg1: i32) -> (i32, i32) {
    %c0_i32 = arith.constant 0 : i32
    %c0_i32_0 = arith.constant 0 : i32
    %c0_i32_1 = arith.constant 0 : i32
    return %c0_i32, %c0_i32_0 : i32, i32
  }
  func.func @transform_7(%arg0: i32, %arg1: i32) -> (i32, i32, i32) {
    %c0_i32 = arith.constant 0 : i32
    %c0_i32_0 = arith.constant 0 : i32
    %c0_i32_1 = arith.constant 0 : i32
    return %arg0, %c0_i32, %c0_i32_0 : i32, i32, i32
  }
}

</mosaic_0001>

<llo_original>
// kernel: tpu_custom_call.1
$region0: #{tpu_custom_call.1}
  #allocation0 [shape = 'u32[]', space=smem, size = 0x4, offset = 0x4, fixed_abs, tag = 'smem constant byte address 0x4 - core index']
  #allocation1 [shape = 'u32[72,128]{1,0:T(1,128)}', space=vmem, size = 0x9000, scoped, tag = 'internal scratch']
  #allocation2 [shape = 'f32[1,512]{1,0:T(1,128)}', space=vmem, size = 0x800, scoped, tag = 'scratch operand']
  %s0 = inlined_call_operand.hbm [shape: bf16[2,8,256], index: 0, kind: input, shape index: {}]
  %s1 = inlined_call_operand.hbm [shape: f32[2,1,1536], index: 1, kind: input, shape index: {}]
  %s2 = inlined_call_operand.hbm [shape: f32[2,1,1536], index: 2, kind: input, shape index: {}]
  %s3 = inlined_call_operand.hbm [shape: f32[2,1,512], index: 3, kind: input, shape index: {}]
  %s4 = inlined_call_operand.hbm [shape: f32[2,1,512], index: 4, kind: input, shape index: {}]
  %s5 = inlined_call_operand.hbm [shape: bf16[256,1536], index: 5, kind: input, shape index: {}]
  %s6 = inlined_call_operand.hbm [shape: bf16[1536,512], index: 6, kind: input, shape index: {}]
  %s7 = inlined_call_operand.hbm [shape: f32[2,1,512], index: 7, kind: output, shape index: {}]
  %s8 = sld [smem:[#allocation0]]
  $region97: #{tpu_custom_call.1} parent=0
    _
  %s10 = ssub.s32 1, %s8
  %s11 = scalar_select 0, %s10, %s8
  $region1: #{tpu_custom_call.1} parent=0
    #allocation3 [shape = 'u8[8192]{0}', space=vmem, size = 0x2000, scoped, tag = 'input window, operand 0']
    #allocation4 [shape = 's32[2]{0}', space=sflag, size = 0x8, scoped, tag = 'scoped memory for tpu_custom_call.1']
    #allocation5 [shape = 's32[2]{0}', space=sflag, size = 0x8, scoped, tag = 'scoped memory for tpu_custom_call.1']
    #allocation6 [shape = 'u8[12288]{0}', space=vmem, size = 0x3000, scoped, tag = 'input window, operand 1']
    #allocation7 [shape = 's32[2]{0}', space=sflag, size = 0x8, scoped, tag = 'scoped memory for tpu_custom_call.1']
    #allocation8 [shape = 'u8[12288]{0}', space=vmem, size = 0x3000, scoped, tag = 'input window, operand 2']
    #allocation9 [shape = 'u8[4096]{0}', space=vmem, size = 0x1000, scoped, tag = 'input window, operand 3']
    #allocation10 [shape = 's32[2]{0}', space=sflag, size = 0x8, scoped, tag = 'scoped memory for tpu_custom_call.1']
    #allocation11 [shape = 'u8[4096]{0}', space=vmem, size = 0x1000, scoped, tag = 'input window, operand 4']
    #allocation12 [shape = 'u8[786432]{0}', space=vmem, size = 0xc0000, scoped, tag = 'input window, operand 5, single buffered']
    #allocation13 [shape = 's32[1]{0}', space=sflag, size = 0x4, scoped, tag = 'scoped memory for tpu_custom_call.1']
    #allocation14 [shape = 'u8[1572864]{0}', space=vmem, size = 0x180000, scoped, tag = 'input window, operand 6, single buffered']
    #allocation15 [shape = 'u8[4096]{0}', space=vmem, size = 0x1000, scoped, tag = 'output window, operand 0']
    %12 = vsyncpa [#allocation4], 0
    %s13 = scalar_lea.sflag [#allocation4], 1
    %14 = vsyncpa %s13, 0
    %15 = vsyncpa [#allocation7], 0
    %s16 = scalar_lea.sflag [#allocation7], 1
    %17 = vsyncpa %s16, 0
    %18 = vsyncpa [#allocation10], 0
    %s19 = scalar_lea.sflag [#allocation10], 1
    %20 = vsyncpa %s19, 0
    %21 = vsyncpa [#allocation13], 0
    %22 = vsyncpa [#allocation5], 0
    %s23 = scalar_lea.sflag [#allocation5], 1
    %24 = vsyncpa %s23, 0
    loop: start=0, step=1, limit=4
    $region2: #{tpu_custom_call.1} parent=1 // loop_pre_header
      _
    $region3: #{tpu_custom_call.1} parent=1 // loop_header
      %s26 = sphi 0, %s30
      %p27 = scmp.ge.s32.totalorder %s26, 4
      %s33 = sphi 0, %s45
      %s34 = sphi 0, %s41
      %s35 = sphi 0, %s33
      %s36 = sphi 0, %s34
      %s37 = sphi 0, %s35
      %s38 = sphi 0, %s36
      %s50 = sphi 0, %s52
      %s53 = sphi 0, %s50
      %s54 = sphi 0, %s53
      %s70 = sphi 0, %s54
      %s76 = sphi 0, %s78
      %s79 = sphi 0, %s76
      %s80 = sphi 0, %s79
      %s96 = sphi 0, %s80
      %s102 = sphi 0, %s104
      %s105 = sphi 0, %s102
      %s106 = sphi 0, %s105
      %s122 = sphi 0, %s106
      %s128 = sphi 0, %s130
      %s131 = sphi 0, %s128
      %s132 = sphi 0, %s131
      %s148 = sphi 0, %s132
      %s154 = sphi 0, %s156
      %s157 = sphi 0, %s154
      %s158 = sphi 0, %s157
      %s174 = sphi 0, %s158
      %s178 = sphi 0, %s178
      %s180 = sphi 0, %s178
      %s181 = sphi 0, %s180
      %s195 = sphi 0, %s181
      %s199 = sphi 0, %s199
      %s201 = sphi 0, %s199
      %s202 = sphi 0, %s201
      %s216 = sphi 0, %s202
      %s222 = sphi 0, %s224
      %s225 = sphi 0, %s222
      %s226 = sphi 0, %s225
      %s242 = sphi 0, %s226
    $region4: #{tpu_custom_call.1} parent=1 // loop_header_branch
      %29 = sbr.rel (%p27) target = $region8
    $region5: #{tpu_custom_call.1} parent=1 // loop_body
      %s31 = ssub.s32 %s26, 1
      %s32 = ssub.s32 %s26, 2
      %s39 = sadd.s32 1, %s34
      %p40 = scmp.ge.s32.totalorder %s39, 1
      %s41 = scalar_select %p40, 0, %s39
      %s42 = sadd.s32 1, %s33
      %s43 = scalar_select %p40, %s42, %s33
      %p44 = scmp.ge.s32.totalorder %s43, 2
      %s45 = scalar_select %p44, 0, %s43
      %s46 = ssub.s32 %s33, %s45
      %s47 = ssub.s32 %s34, %s41
      %s48 = sor.u32 %s46, %s47
      %p49 = scmp.eq.s32.totalorder %s48, 0
      %s51 = sadd.s32 %s50, 1
      %s52 = scalar_select %p49, %s50, %s51
      %p55 = pneg %p49
      %p56 = scmp.eq.s32.totalorder %s26, 1
      %p57 = por %p55, %p56
      %p58 = scmp.ne.s32.totalorder %s50, %s53
      %p59 = scmp.eq.s32.totalorder %s26, 0
      %p60 = por %p58, %p59
      %p61 = scmp.ne.s32.totalorder %s50, %s53
      %p62 = scmp.eq.s32.totalorder %s31, 1
      %p63 = por %p61, %p62
      %p64 = scmp.ne.s32.totalorder %s53, %s54
      %p65 = scmp.eq.s32.totalorder %s31, 0
      %p66 = por %p64, %p65
      %p67 = scmp.ne.s32.totalorder %s53, %s54
      %p68 = scmp.eq.s32.totalorder %s32, 1
      %p69 = por %p67, %p68
      %p71 = scmp.ne.s32.totalorder %s54, %s70
      %p72 = scmp.eq.s32.totalorder %s32, 0
      %p73 = por %p71, %p72
      %s74 = ssub.s32 %s33, %s45
      %p75 = scmp.eq.s32.totalorder %s74, 0
      %s77 = sadd.s32 %s76, 1
      %s78 = scalar_select %p75, %s76, %s77
      %p81 = pneg %p75
      %p82 = scmp.eq.s32.totalorder %s26, 1
      %p83 = por %p81, %p82
      %p84 = scmp.ne.s32.totalorder %s76, %s79
      %p85 = scmp.eq.s32.totalorder %s26, 0
      %p86 = por %p84, %p85
      %p87 = scmp.ne.s32.totalorder %s76, %s79
      %p88 = scmp.eq.s32.totalorder %s31, 1
      %p89 = por %p87, %p88
      %p90 = scmp.ne.s32.totalorder %s79, %s80
      %p91 = scmp.eq.s32.totalorder %s31, 0
      %p92 = por %p90, %p91
      %p93 = scmp.ne.s32.totalorder %s79, %s80
      %p94 = scmp.eq.s32.totalorder %s32, 1
      %p95 = por %p93, %p94
      %p97 = scmp.ne.s32.totalorder %s80, %s96
      %p98 = scmp.eq.s32.totalorder %s32, 0
      %p99 = por %p97, %p98
      %s100 = ssub.s32 %s33, %s45
      %p101 = scmp.eq.s32.totalorder %s100, 0
      %s103 = sadd.s32 %s102, 1
      %s104 = scalar_select %p101, %s102, %s103
      %p107 = pneg %p101
      %p108 = scmp.eq.s32.totalorder %s26, 1
      %p109 = por %p107, %p108
      %p110 = scmp.ne.s32.totalorder %s102, %s105
      %p111 = scmp.eq.s32.totalorder %s26, 0
      %p112 = por %p110, %p111
      %p113 = scmp.ne.s32.totalorder %s102, %s105
      %p114 = scmp.eq.s32.totalorder %s31, 1
      %p115 = por %p113, %p114
      %p116 = scmp.ne.s32.totalorder %s105, %s106
      %p117 = scmp.eq.s32.totalorder %s31, 0
      %p118 = por %p116, %p117
      %p119 = scmp.ne.s32.totalorder %s105, %s106
      %p120 = scmp.eq.s32.totalorder %s32, 1
      %p121 = por %p119, %p120
      %p123 = scmp.ne.s32.totalorder %s106, %s122
      %p124 = scmp.eq.s32.totalorder %s32, 0
      %p125 = por %p123, %p124
      %s126 = ssub.s32 %s33, %s45
      %p127 = scmp.eq.s32.totalorder %s126, 0
      %s129 = sadd.s32 %s128, 1
      %s130 = scalar_select %p127, %s128, %s129
      %p133 = pneg %p127
      %p134 = scmp.eq.s32.totalorder %s26, 1
      %p135 = por %p133, %p134
      %p136 = scmp.ne.s32.totalorder %s128, %s131
      %p137 = scmp.eq.s32.totalorder %s26, 0
      %p138 = por %p136, %p137
      %p139 = scmp.ne.s32.totalorder %s128, %s131
      %p140 = scmp.eq.s32.totalorder %s31, 1
      %p141 = por %p139, %p140
      %p142 = scmp.ne.s32.totalorder %s131, %s132
      %p143 = scmp.eq.s32.totalorder %s31, 0
      %p144 = por %p142, %p143
      %p145 = scmp.ne.s32.totalorder %s131, %s132
      %p146 = scmp.eq.s32.totalorder %s32, 1
      %p147 = por %p145, %p146
      %p149 = scmp.ne.s32.totalorder %s132, %s148
      %p150 = scmp.eq.s32.totalorder %s32, 0
      %p151 = por %p149, %p150
      %s152 = ssub.s32 %s33, %s45
      %p153 = scmp.eq.s32.totalorder %s152, 0
      %s155 = sadd.s32 %s154, 1
      %s156 = scalar_select %p153, %s154, %s155
      %p159 = pneg %p153
      %p160 = scmp.eq.s32.totalorder %s26, 1
      %p161 = por %p159, %p160
      %p162 = scmp.ne.s32.totalorder %s154, %s157
      %p163 = scmp.eq.s32.totalorder %s26, 0
      %p164 = por %p162, %p163
      %p165 = scmp.ne.s32.totalorder %s154, %s157
      %p166 = scmp.eq.s32.totalorder %s31, 1
      %p167 = por %p165, %p166
      %p168 = scmp.ne.s32.totalorder %s157, %s158
      %p169 = scmp.eq.s32.totalorder %s31, 0
      %p170 = por %p168, %p169
      %p171 = scmp.ne.s32.totalorder %s157, %s158
      %p172 = scmp.eq.s32.totalorder %s32, 1
      %p173 = por %p171, %p172
      %p175 = scmp.ne.s32.totalorder %s158, %s174
      %p176 = scmp.eq.s32.totalorder %s32, 0
      %p177 = por %p175, %p176
      %s179 = sadd.s32 %s178, 1
      %p182 = scmp.eq.s32.totalorder %s26, 1
      %p183 = scmp.ne.s32.totalorder %s178, %s180
      %p184 = scmp.eq.s32.totalorder %s26, 0
      %p185 = por %p183, %p184
      %p186 = scmp.ne.s32.totalorder %s178, %s180
      %p187 = scmp.eq.s32.totalorder %s31, 1
      %p188 = por %p186, %p187
      %p189 = scmp.ne.s32.totalorder %s180, %s181
      %p190 = scmp.eq.s32.totalorder %s31, 0
      %p191 = por %p189, %p190
      %p192 = scmp.ne.s32.totalorder %s180, %s181
      %p193 = scmp.eq.s32.totalorder %s32, 1
      %p194 = por %p192, %p193
      %p196 = scmp.ne.s32.totalorder %s181, %s195
      %p197 = scmp.eq.s32.totalorder %s32, 0
      %p198 = por %p196, %p197
      %s200 = sadd.s32 %s199, 1
      %p203 = scmp.eq.s32.totalorder %s26, 1
      %p204 = scmp.ne.s32.totalorder %s199, %s201
      %p205 = scmp.eq.s32.totalorder %s26, 0
      %p206 = por %p204, %p205
      %p207 = scmp.ne.s32.totalorder %s199, %s201
      %p208 = scmp.eq.s32.totalorder %s31, 1
      %p209 = por %p207, %p208
      %p210 = scmp.ne.s32.totalorder %s201, %s202
      %p211 = scmp.eq.s32.totalorder %s31, 0
      %p212 = por %p210, %p211
      %p213 = scmp.ne.s32.totalorder %s201, %s202
      %p214 = scmp.eq.s32.totalorder %s32, 1
      %p215 = por %p213, %p214
      %p217 = scmp.ne.s32.totalorder %s202, %s216
      %p218 = scmp.eq.s32.totalorder %s32, 0
      %p219 = por %p217, %p218
      %s220 = ssub.s32 %s33, %s45
      %p221 = scmp.eq.s32.totalorder %s220, 0
      %s223 = sadd.s32 %s222, 1
      %s224 = scalar_select %p221, %s222, %s223
      %p227 = pneg %p221
      %p228 = scmp.eq.s32.totalorder %s26, 1
      %p229 = por %p227, %p228
      %p230 = scmp.ne.s32.totalorder %s222, %s225
      %p231 = scmp.eq.s32.totalorder %s26, 0
      %p232 = por %p230, %p231
      %p233 = scmp.ne.s32.totalorder %s222, %s225
      %p234 = scmp.eq.s32.totalorder %s31, 1
      %p235 = por %p233, %p234
      %p236 = scmp.ne.s32.totalorder %s225, %s226
      %p237 = scmp.eq.s32.totalorder %s31, 0
      %p238 = por %p236, %p237
      %p239 = scmp.ne.s32.totalorder %s225, %s226
      %p240 = scmp.eq.s32.totalorder %s32, 1
      %p241 = por %p239, %p240
      %p243 = scmp.ne.s32.totalorder %s226, %s242
      %p244 = scmp.eq.s32.totalorder %s32, 0
      %p245 = por %p243, %p244
      %p246 = scmp.le.s32.totalorder 1, %s26
      %p247 = scmp.lt.s32.totalorder %s26, 3
      %p248 = pnand %p246, %p247
      %p249 = pneg %p248
      // Predicated region
      $region9: #{tpu_custom_call.1} parent=5 // pred_check
        _
      $region10: #{tpu_custom_call.1} parent=5 // pred_check_branch
        %251 = sbr.rel (%p248) target = $region12
      $region11: #{tpu_custom_call.1} parent=5 // pred_region
        %s252 = ssub.s32 %s26, 1
        // Predicated region
        $region13: #{tpu_custom_call.1} parent=11 // pred_check
          %p253 = pneg %p191
        $region14: #{tpu_custom_call.1} parent=11 // pred_check_branch
          %255 = sbr.rel (%p253) target = $region16
        $region15: #{tpu_custom_call.1} parent=11 // pred_region
          %257 = vsyncadd [#allocation13], 0
          %s258 = sshll.u32 %s5, 4
          %s259 = int_to_ptr.hbm [resolvable:$true] %s258
          %s260 = sshll.u32 [#allocation12], 4
          %s261 = int_to_ptr.vmem [resolvable:$true] %s260
          %266 = dma.hbm_to_vmem [thread:$0]  %s259, 24576, %s261, [#allocation13], 768, 768, 48
        $region16: #{tpu_custom_call.1} parent=11 // pred_fallthru
          _
        // Predicated region
        $region17: #{tpu_custom_call.1} parent=11 // pred_check
          %p267 = pneg %p212
        $region18: #{tpu_custom_call.1} parent=11 // pred_check_branch
          %269 = sbr.rel (%p267) target = $region20
        $region19: #{tpu_custom_call.1} parent=11 // pred_region
          %271 = vsyncadd [#allocation13], 0
          %s272 = sshll.u32 %s6, 4
          %s273 = int_to_ptr.hbm [resolvable:$true] %s272
          %s274 = sshll.u32 [#allocation14], 4
          %s275 = int_to_ptr.vmem [resolvable:$true] %s274
          %280 = dma.hbm_to_vmem [thread:$0]  %s273, 49152, %s275, [#allocation13], 256, 256, 16
        $region20: #{tpu_custom_call.1} parent=11 // pred_fallthru
          _
      $region12: #{tpu_custom_call.1} parent=5 // pred_fallthru
        _
      %p281 = scmp.lt.s32.totalorder %s26, 2
      // Predicated region
      $region21: #{tpu_custom_call.1} parent=5 // pred_check
        %p282 = pneg %p281
      $region22: #{tpu_custom_call.1} parent=5 // pred_check_branch
        %284 = sbr.rel (%p282) target = $region24
      $region23: #{tpu_custom_call.1} parent=5 // pred_region
        // Predicated region
        $region25: #{tpu_custom_call.1} parent=23 // pred_check
          %p285 = pneg %p60
        $region26: #{tpu_custom_call.1} parent=23 // pred_check_branch
          %287 = sbr.rel (%p285) target = $region28
        $region27: #{tpu_custom_call.1} parent=23 // pred_region
          %s288 = sand.u32 %s50, 1
          %s289 = scalar_lea.sflag [#allocation4], %s288
          %s290 = sand.u32 %s50, 1
          %s291 = smul.addr %s290, 8
          %s292 = scalar_lea.vmem [#allocation3], %s291
          %294 = vsyncadd %s289, 0
          %s295 = smul.addr %s34, 2
          %s296 = smul.addr %s33, 2
          %s297 = sadd.s32 %s295, %s296
          %s298 = smul.addr %s297, 4
          %s299 = scalar_lea.hbm %s0, %s298
          %s301 = sshll.u32 %s299, 4
          %s302 = int_to_ptr.hbm [resolvable:$true] %s301
          %s303 = sshll.u32 %s292, 4
          %s304 = int_to_ptr.vmem [resolvable:$true] %s303
          %306 = dma.hbm_to_vmem [thread:$0]  %s302, 128, %s304, %s289
        $region28: #{tpu_custom_call.1} parent=23 // pred_fallthru
          _
        // Predicated region
        $region29: #{tpu_custom_call.1} parent=23 // pred_check
          %p307 = pneg %p86
        $region30: #{tpu_custom_call.1} parent=23 // pred_check_branch
          %309 = sbr.rel (%p307) target = $region32
        $region31: #{tpu_custom_call.1} parent=23 // pred_region
          %s310 = sand.u32 %s26, 1
          %s311 = scalar_lea.sflag [#allocation7], %s310
          %s312 = sand.u32 %s76, 1
          %s313 = smul.addr %s312, 12
          %s314 = scalar_lea.vmem [#allocation6], %s313
          %316 = vsyncadd %s311, 0
          %s317 = smul.addr %s33, 12
          %s318 = scalar_lea.hbm %s1, %s317
          %s320 = sshll.u32 %s318, 4
          %s321 = int_to_ptr.hbm [resolvable:$true] %s320
          %s322 = sshll.u32 %s314, 4
          %s323 = int_to_ptr.vmem [resolvable:$true] %s322
          %325 = dma.hbm_to_vmem [thread:$0]  %s321, 192, %s323, %s311
        $region32: #{tpu_custom_call.1} parent=23 // pred_fallthru
          _
        // Predicated region
        $region33: #{tpu_custom_call.1} parent=23 // pred_check
          %p326 = pneg %p112
        $region34: #{tpu_custom_call.1} parent=23 // pred_check_branch
          %328 = sbr.rel (%p326) target = $region36
        $region35: #{tpu_custom_call.1} parent=23 // pred_region
          %s329 = sand.u32 %s26, 1
          %s330 = scalar_lea.sflag [#allocation7], %s329
          %s331 = sand.u32 %s102, 1
          %s332 = smul.addr %s331, 12
          %s333 = scalar_lea.vmem [#allocation8], %s332
          %335 = vsyncadd %s330, 0
          %s336 = smul.addr %s33, 12
          %s337 = scalar_lea.hbm %s2, %s336
          %s339 = sshll.u32 %s337, 4
          %s340 = int_to_ptr.hbm [resolvable:$true] %s339
          %s341 = sshll.u32 %s333, 4
          %s342 = int_to_ptr.vmem [resolvable:$true] %s341
          %344 = dma.hbm_to_vmem [thread:$0]  %s340, 192, %s342, %s330
        $region36: #{tpu_custom_call.1} parent=23 // pred_fallthru
          _
        // Predicated region
        $region37: #{tpu_custom_call.1} parent=23 // pred_check
          %p345 = pneg %p138
        $region38: #{tpu_custom_call.1} parent=23 // pred_check_branch
          %347 = sbr.rel (%p345) target = $region40
        $region39: #{tpu_custom_call.1} parent=23 // pred_region
          %s348 = sand.u32 %s26, 1
          %s349 = scalar_lea.sflag [#allocation10], %s348
          %s350 = sand.u32 %s128, 1
          %s351 = smul.addr %s350, 4
          %s352 = scalar_lea.vmem [#allocation9], %s351
          %354 = vsyncadd %s349, 0
          %s355 = smul.addr %s33, 4
          %s356 = scalar_lea.hbm %s3, %s355
          %s358 = sshll.u32 %s356, 4
          %s359 = int_to_ptr.hbm [resolvable:$true] %s358
          %s360 = sshll.u32 %s352, 4
          %s361 = int_to_ptr.vmem [resolvable:$true] %s360
          %363 = dma.hbm_to_vmem [thread:$0]  %s359, 64, %s361, %s349
        $region40: #{tpu_custom_call.1} parent=23 // pred_fallthru
          _
        // Predicated region
        $region41: #{tpu_custom_call.1} parent=23 // pred_check
          %p364 = pneg %p164
        $region42: #{tpu_custom_call.1} parent=23 // pred_check_branch
          %366 = sbr.rel (%p364) target = $region44
        $region43: #{tpu_custom_call.1} parent=23 // pred_region
          %s367 = sand.u32 %s26, 1
          %s368 = scalar_lea.sflag [#allocation10], %s367
          %s369 = sand.u32 %s154, 1
          %s370 = smul.addr %s369, 4
          %s371 = scalar_lea.vmem [#allocation11], %s370
          %373 = vsyncadd %s368, 0
          %s374 = smul.addr %s33, 4
          %s375 = scalar_lea.hbm %s4, %s374
          %s377 = sshll.u32 %s375, 4
          %s378 = int_to_ptr.hbm [resolvable:$true] %s377
          %s379 = sshll.u32 %s371, 4
          %s380 = int_to_ptr.vmem [resolvable:$true] %s379
          %382 = dma.hbm_to_vmem [thread:$0]  %s378, 64, %s380, %s368
        $region44: #{tpu_custom_call.1} parent=23 // pred_fallthru
          _
      $region24: #{tpu_custom_call.1} parent=5 // pred_fallthru
        _
      %p383 = scmp.le.s32.totalorder 1, %s26
      %p384 = scmp.lt.s32.totalorder %s26, 3
      %p385 = pnand %p383, %p384
      %p386 = pneg %p385
      // Predicated region
      $region45: #{tpu_custom_call.1} parent=5 // pred_check
        _
      $region46: #{tpu_custom_call.1} parent=5 // pred_check_branch
        %388 = sbr.rel (%p385) target = $region48
      $region47: #{tpu_custom_call.1} parent=5 // pred_region
        %s389 = ssub.s32 %s26, 1
        %s390 = sand.u32 %s53, 1
        %s391 = scalar_lea.sflag [#allocation4], %s390
        %s392 = sand.u32 %s53, 1
        %s393 = smul.addr %s392, 8
        %s394 = scalar_lea.vmem [#allocation3], %s393
        // Predicated region
        $region49: #{tpu_custom_call.1} parent=47 // pred_check
          %p395 = pneg %p66
        $region50: #{tpu_custom_call.1} parent=47 // pred_check_branch
          %397 = sbr.rel (%p395) target = $region52
        $region51: #{tpu_custom_call.1} parent=47 // pred_region
          %399 = dma.done %s391, 128
        $region52: #{tpu_custom_call.1} parent=47 // pred_fallthru
          _
        %s400 = sand.u32 %s31, 1
        %s401 = scalar_lea.sflag [#allocation7], %s400
        %s402 = sand.u32 %s79, 1
        %s403 = smul.addr %s402, 12
        %s404 = scalar_lea.vmem [#allocation6], %s403
        // Predicated region
        $region53: #{tpu_custom_call.1} parent=47 // pred_check
          %p405 = pneg %p92
        $region54: #{tpu_custom_call.1} parent=47 // pred_check_branch
          %407 = sbr.rel (%p405) target = $region56
        $region55: #{tpu_custom_call.1} parent=47 // pred_region
          %409 = dma.done %s401, 192
        $region56: #{tpu_custom_call.1} parent=47 // pred_fallthru
          _
        %s410 = sand.u32 %s31, 1
        %s411 = scalar_lea.sflag [#allocation7], %s410
        %s412 = sand.u32 %s105, 1
        %s413 = smul.addr %s412, 12
        %s414 = scalar_lea.vmem [#allocation8], %s413
        // Predicated region
        $region57: #{tpu_custom_call.1} parent=47 // pred_check
          %p415 = pneg %p118
        $region58: #{tpu_custom_call.1} parent=47 // pred_check_branch
          %417 = sbr.rel (%p415) target = $region60
        $region59: #{tpu_custom_call.1} parent=47 // pred_region
          %419 = dma.done %s411, 192
        $region60: #{tpu_custom_call.1} parent=47 // pred_fallthru
          _
        %s420 = sand.u32 %s31, 1
        %s421 = scalar_lea.sflag [#allocation10], %s420
        %s422 = sand.u32 %s131, 1
        %s423 = smul.addr %s422, 4
        %s424 = scalar_lea.vmem [#allocation9], %s423
        // Predicated region
        $region61: #{tpu_custom_call.1} parent=47 // pred_check
          %p425 = pneg %p144
        $region62: #{tpu_custom_call.1} parent=47 // pred_check_branch
          %427 = sbr.rel (%p425) target = $region64
        $region63: #{tpu_custom_call.1} parent=47 // pred_region
          %429 = dma.done %s421, 64
        $region64: #{tpu_custom_call.1} parent=47 // pred_fallthru
          _
        %s430 = sand.u32 %s31, 1
        %s431 = scalar_lea.sflag [#allocation10], %s430
        %s432 = sand.u32 %s157, 1
        %s433 = smul.addr %s432, 4
        %s434 = scalar_lea.vmem [#allocation11], %s433
        // Predicated region
        $region65: #{tpu_custom_call.1} parent=47 // pred_check
          %p435 = pneg %p170
        $region66: #{tpu_custom_call.1} parent=47 // pred_check_branch
          %437 = sbr.rel (%p435) target = $region68
        $region67: #{tpu_custom_call.1} parent=47 // pred_region
          %439 = dma.done %s431, 64
        $region68: #{tpu_custom_call.1} parent=47 // pred_fallthru
          _
        // Predicated region
        $region69: #{tpu_custom_call.1} parent=47 // pred_check
          %p440 = pneg %p191
        $region70: #{tpu_custom_call.1} parent=47 // pred_check_branch
          %442 = sbr.rel (%p440) target = $region72
        $region71: #{tpu_custom_call.1} parent=47 // pred_region
          %444 = dma.done [#allocation13], 24576
        $region72: #{tpu_custom_call.1} parent=47 // pred_fallthru
          _
        // Predicated region
        $region73: #{tpu_custom_call.1} parent=47 // pred_check
          %p445 = pneg %p212
        $region74: #{tpu_custom_call.1} parent=47 // pred_check_branch
          %447 = sbr.rel (%p445) target = $region76
        $region75: #{tpu_custom_call.1} parent=47 // pred_region
          %449 = dma.done [#allocation13], 49152
        $region76: #{tpu_custom_call.1} parent=47 // pred_fallthru
          _
        %s450 = sand.u32 %s53, 1
        %s451 = scalar_lea.sflag [#allocation4], %s450
        %s452 = sand.u32 %s53, 1
        %s453 = smul.addr %s452, 8
        %s454 = scalar_lea.vmem [#allocation3], %s453
        %p455 = pneg %p66
        %p456 = pneg %p63
        %s457 = sand.u32 %s31, 1
        %s458 = scalar_lea.sflag [#allocation7], %s457
        %s459 = sand.u32 %s79, 1
        %s460 = smul.addr %s459, 12
        %s461 = scalar_lea.vmem [#allocation6], %s460
        %p462 = pneg %p92
        %p463 = pneg %p89
        %s464 = sand.u32 %s31, 1
        %s465 = scalar_lea.sflag [#allocation7], %s464
        %s466 = sand.u32 %s105, 1
        %s467 = smul.addr %s466, 12
        %s468 = scalar_lea.vmem [#allocation8], %s467
        %p469 = pneg %p118
        %p470 = pneg %p115
        %s471 = sand.u32 %s31, 1
        %s472 = scalar_lea.sflag [#allocation10], %s471
        %s473 = sand.u32 %s131, 1
        %s474 = smul.addr %s473, 4
        %s475 = scalar_lea.vmem [#allocation9], %s474
        %p476 = pneg %p144
        %p477 = pneg %p141
        %s478 = sand.u32 %s31, 1
        %s479 = scalar_lea.sflag [#allocation10], %s478
        %s480 = sand.u32 %s157, 1
        %s481 = smul.addr %s480, 4
        %s482 = scalar_lea.vmem [#allocation11], %s481
        %p483 = pneg %p170
        %p484 = pneg %p167
        %p485 = pneg %p191
        %p486 = pneg %p188
        %p487 = pneg %p212
        %p488 = pneg %p209
        %p489 = pneg %p238
        %p490 = pneg %p235
        %s491 = sand.u32 %s225, 1
        %s492 = scalar_lea.sflag [#allocation5], %s491
        %s493 = sand.u32 %s225, 1
        %s494 = smul.addr %s493, 4
        %s495 = scalar_lea.vmem [#allocation15], %s494
        %p496 = scmp.eq.s32.totalorder %s36, 0
        // Predicated region
        $region77: #{tpu_custom_call.1} parent=47 // pred_check
          %p497 = pneg %p496
        $region78: #{tpu_custom_call.1} parent=47 // pred_check_branch
          %499 = sbr.rel (%p497) target = $region80
        $region79: #{tpu_custom_call.1} parent=47 // pred_region
          %v500 = vlaneseq
          %vm501 = vcmp.ge.s32.totalorder %v500, 0
          %vm502 = vcmp.lt.s32.totalorder %v500, 512
          %vm503 = vmand %vm501, %vm502
          %504 = vst.msk [vmem:[#allocation2] sm:$0xf] %vm503, 0.0
        $region80: #{tpu_custom_call.1} parent=47 // pred_fallthru
          _
        %v505 = vld [vmem:[%s394] sm:$0xff]
        %v506 = vld [vmem:[#allocation12] sm:$0xff]
        %v507 = vld [vmem:[#allocation12 + $0x8] sm:$0xff]
        %v508 = vld [vmem:[#allocation12 + $0x10] sm:$0xff]
        %v509 = vld [vmem:[#allocation12 + $0x18] sm:$0xff]
        %v510 = vld [vmem:[#allocation12 + $0x20] sm:$0xff]
        %v511 = vld [vmem:[#allocation12 + $0x28] sm:$0xff]
        %v512 = vld [vmem:[#allocation12 + $0x30] sm:$0xff]
        %v513 = vld [vmem:[#allocation12 + $0x38] sm:$0xff]
        %v514 = vld [vmem:[#allocation12 + $0x40] sm:$0xff]
        %v515 = vld [vmem:[#allocation12 + $0x48] sm:$0xff]
        %v516 = vld [vmem:[#allocation12 + $0x50] sm:$0xff]
        %v517 = vld [vmem:[#allocation12 + $0x58] sm:$0xff]
        %v518 = vld [vmem:[#allocation12 + $0x60] sm:$0xff]
        %v519 = vld [vmem:[#allocation12 + $0x68] sm:$0xff]
        %v520 = vld [vmem:[#allocation12 + $0x70] sm:$0xff]
        %v521 = vld [vmem:[#allocation12 + $0x78] sm:$0xff]
        %v522 = vld [vmem:[#allocation12 + $0x80] sm:$0xff]
        %v523 = vld [vmem:[#allocation12 + $0x88] sm:$0xff]
        %v524 = vld [vmem:[#allocation12 + $0x90] sm:$0xff]
        %v525 = vld [vmem:[#allocation12 + $0x98] sm:$0xff]
        %v526 = vld [vmem:[#allocation12 + $0xa0] sm:$0xff]
        %v527 = vld [vmem:[#allocation12 + $0xa8] sm:$0xff]
        %v528 = vld [vmem:[#allocation12 + $0xb0] sm:$0xff]
        %v529 = vld [vmem:[#allocation12 + $0xb8] sm:$0xff]
        %v530 = vld [vmem:[#allocation12 + $0xc0] sm:$0xff]
        %v531 = vld [vmem:[#allocation12 + $0xc8] sm:$0xff]
        %v532 = vld [vmem:[#allocation12 + $0xd0] sm:$0xff]
        %v533 = vld [vmem:[#allocation12 + $0xd8] sm:$0xff]
        %v534 = vld [vmem:[#allocation12 + $0xe0] sm:$0xff]
        %v535 = vld [vmem:[#allocation12 + $0xe8] sm:$0xff]
        %v536 = vld [vmem:[#allocation12 + $0xf0] sm:$0xff]
        %v537 = vld [vmem:[#allocation12 + $0xf8] sm:$0xff]
        %v538 = vld [vmem:[#allocation12 + $0x100] sm:$0xff]
        %v539 = vld [vmem:[#allocation12 + $0x108] sm:$0xff]
        %v540 = vld [vmem:[#allocation12 + $0x110] sm:$0xff]
        %v541 = vld [vmem:[#allocation12 + $0x118] sm:$0xff]
        %v542 = vld [vmem:[#allocation12 + $0x120] sm:$0xff]
        %v543 = vld [vmem:[#allocation12 + $0x128] sm:$0xff]
        %v544 = vld [vmem:[#allocation12 + $0x130] sm:$0xff]
        %v545 = vld [vmem:[#allocation12 + $0x138] sm:$0xff]
        %v546 = vld [vmem:[#allocation12 + $0x140] sm:$0xff]
        %v547 = vld [vmem:[#allocation12 + $0x148] sm:$0xff]
        %v548 = vld [vmem:[#allocation12 + $0x150] sm:$0xff]
        %v549 = vld [vmem:[#allocation12 + $0x158] sm:$0xff]
        %v550 = vld [vmem:[#allocation12 + $0x160] sm:$0xff]
        %v551 = vld [vmem:[#allocation12 + $0x168] sm:$0xff]
        %v552 = vld [vmem:[#allocation12 + $0x170] sm:$0xff]
        %v553 = vld [vmem:[#allocation12 + $0x178] sm:$0xff]
        %v554 = vld [vmem:[#allocation12 + $0x180] sm:$0xff]
        %v555 = vld [vmem:[#allocation12 + $0x188] sm:$0xff]
        %v556 = vld [vmem:[#allocation12 + $0x190] sm:$0xff]
        %v557 = vld [vmem:[#allocation12 + $0x198] sm:$0xff]
        %v558 = vld [vmem:[#allocation12 + $0x1a0] sm:$0xff]
        %v559 = vld [vmem:[#allocation12 + $0x1a8] sm:$0xff]
        %v560 = vld [vmem:[#allocation12 + $0x1b0] sm:$0xff]
        %v561 = vld [vmem:[#allocation12 + $0x1b8] sm:$0xff]
        %v562 = vld [vmem:[#allocation12 + $0x1c0] sm:$0xff]
        %v563 = vld [vmem:[#allocation12 + $0x1c8] sm:$0xff]
        %v564 = vld [vmem:[#allocation12 + $0x1d0] sm:$0xff]
        %v565 = vld [vmem:[#allocation12 + $0x1d8] sm:$0xff]
        %v566 = vld [vmem:[#allocation12 + $0x1e0] sm:$0xff]
        %v567 = vld [vmem:[#allocation12 + $0x1e8] sm:$0xff]
        %v568 = vld [vmem:[#allocation12 + $0x1f0] sm:$0xff]
        %v569 = vld [vmem:[#allocation12 + $0x1f8] sm:$0xff]
        %v570 = vld [vmem:[#allocation12 + $0x200] sm:$0xff]
        %v571 = vld [vmem:[#allocation12 + $0x208] sm:$0xff]
        %v572 = vld [vmem:[#allocation12 + $0x210] sm:$0xff]
        %v573 = vld [vmem:[#allocation12 + $0x218] sm:$0xff]
        %v574 = vld [vmem:[#allocation12 + $0x220] sm:$0xff]
        %v575 = vld [vmem:[#allocation12 + $0x228] sm:$0xff]
        %v576 = vld [vmem:[#allocation12 + $0x230] sm:$0xff]
        %v577 = vld [vmem:[#allocation12 + $0x238] sm:$0xff]
        %v578 = vld [vmem:[#allocation12 + $0x240] sm:$0xff]
        %v579 = vld [vmem:[#allocation12 + $0x248] sm:$0xff]
        %v580 = vld [vmem:[#allocation12 + $0x250] sm:$0xff]
        %v581 = vld [vmem:[#allocation12 + $0x258] sm:$0xff]
        %v582 = vld [vmem:[#allocation12 + $0x260] sm:$0xff]
        %v583 = vld [vmem:[#allocation12 + $0x268] sm:$0xff]
        %v584 = vld [vmem:[#allocation12 + $0x270] sm:$0xff]
        %v585 = vld [vmem:[#allocation12 + $0x278] sm:$0xff]
        %v586 = vld [vmem:[#allocation12 + $0x280] sm:$0xff]
        %v587 = vld [vmem:[#allocation12 + $0x288] sm:$0xff]
        %v588 = vld [vmem:[#allocation12 + $0x290] sm:$0xff]
        %v589 = vld [vmem:[#allocation12 + $0x298] sm:$0xff]
        %v590 = vld [vmem:[#allocation12 + $0x2a0] sm:$0xff]
        %v591 = vld [vmem:[#allocation12 + $0x2a8] sm:$0xff]
        %v592 = vld [vmem:[#allocation12 + $0x2b0] sm:$0xff]
        %v593 = vld [vmem:[#allocation12 + $0x2b8] sm:$0xff]
        %v594 = vld [vmem:[#allocation12 + $0x2c0] sm:$0xff]
        %v595 = vld [vmem:[#allocation12 + $0x2c8] sm:$0xff]
        %v596 = vld [vmem:[#allocation12 + $0x2d0] sm:$0xff]
        %v597 = vld [vmem:[#allocation12 + $0x2d8] sm:$0xff]
        %v598 = vld [vmem:[#allocation12 + $0x2e0] sm:$0xff]
        %v599 = vld [vmem:[#allocation12 + $0x2e8] sm:$0xff]
        %v600 = vld [vmem:[#allocation12 + $0x2f0] sm:$0xff]
        %v601 = vld [vmem:[#allocation12 + $0x2f8] sm:$0xff]
        %v602 = vld [vmem:[#allocation12 + $0x300] sm:$0xff]
        %v603 = vld [vmem:[#allocation12 + $0x308] sm:$0xff]
        %v604 = vld [vmem:[#allocation12 + $0x310] sm:$0xff]
        %v605 = vld [vmem:[#allocation12 + $0x318] sm:$0xff]
        %v606 = vld [vmem:[#allocation12 + $0x320] sm:$0xff]
        %v607 = vld [vmem:[#allocation12 + $0x328] sm:$0xff]
        %v608 = vld [vmem:[#allocation12 + $0x330] sm:$0xff]
        %v609 = vld [vmem:[#allocation12 + $0x338] sm:$0xff]
        %v610 = vld [vmem:[#allocation12 + $0x340] sm:$0xff]
        %v611 = vld [vmem:[#allocation12 + $0x348] sm:$0xff]
        %v612 = vld [vmem:[#allocation12 + $0x350] sm:$0xff]
        %v613 = vld [vmem:[#allocation12 + $0x358] sm:$0xff]
        %v614 = vld [vmem:[#allocation12 + $0x360] sm:$0xff]
        %v615 = vld [vmem:[#allocation12 + $0x368] sm:$0xff]
        %v616 = vld [vmem:[#allocation12 + $0x370] sm:$0xff]
        %v617 = vld [vmem:[#allocation12 + $0x378] sm:$0xff]
        %v618 = vld [vmem:[#allocation12 + $0x380] sm:$0xff]
        %v619 = vld [vmem:[#allocation12 + $0x388] sm:$0xff]
        %v620 = vld [vmem:[#allocation12 + $0x390] sm:$0xff]
        %v621 = vld [vmem:[#allocation12 + $0x398] sm:$0xff]
        %v622 = vld [vmem:[#allocation12 + $0x3a0] sm:$0xff]
        %v623 = vld [vmem:[#allocation12 + $0x3a8] sm:$0xff]
        %v624 = vld [vmem:[#allocation12 + $0x3b0] sm:$0xff]
        %v625 = vld [vmem:[#allocation12 + $0x3b8] sm:$0xff]
        %v626 = vld [vmem:[#allocation12 + $0x3c0] sm:$0xff]
        %v627 = vld [vmem:[#allocation12 + $0x3c8] sm:$0xff]
        %v628 = vld [vmem:[#allocation12 + $0x3d0] sm:$0xff]
        %v629 = vld [vmem:[#allocation12 + $0x3d8] sm:$0xff]
        %v630 = vld [vmem:[#allocation12 + $0x3e0] sm:$0xff]
        %v631 = vld [vmem:[#allocation12 + $0x3e8] sm:$0xff]
        %v632 = vld [vmem:[#allocation12 + $0x3f0] sm:$0xff]
        %v633 = vld [vmem:[#allocation12 + $0x3f8] sm:$0xff]
        %v634 = vld [vmem:[#allocation12 + $0x400] sm:$0xff]
        %v635 = vld [vmem:[#allocation12 + $0x408] sm:$0xff]
        %v636 = vld [vmem:[#allocation12 + $0x410] sm:$0xff]
        %v637 = vld [vmem:[#allocation12 + $0x418] sm:$0xff]
        %v638 = vld [vmem:[#allocation12 + $0x420] sm:$0xff]
        %v639 = vld [vmem:[#allocation12 + $0x428] sm:$0xff]
        %v640 = vld [vmem:[#allocation12 + $0x430] sm:$0xff]
        %v641 = vld [vmem:[#allocation12 + $0x438] sm:$0xff]
        %v642 = vld [vmem:[#allocation12 + $0x440] sm:$0xff]
        %v643 = vld [vmem:[#allocation12 + $0x448] sm:$0xff]
        %v644 = vld [vmem:[#allocation12 + $0x450] sm:$0xff]
        %v645 = vld [vmem:[#allocation12 + $0x458] sm:$0xff]
        %v646 = vld [vmem:[#allocation12 + $0x460] sm:$0xff]
        %v647 = vld [vmem:[#allocation12 + $0x468] sm:$0xff]
        %v648 = vld [vmem:[#allocation12 + $0x470] sm:$0xff]
        %v649 = vld [vmem:[#allocation12 + $0x478] sm:$0xff]
        %v650 = vld [vmem:[#allocation12 + $0x480] sm:$0xff]
        %v651 = vld [vmem:[#allocation12 + $0x488] sm:$0xff]
        %v652 = vld [vmem:[#allocation12 + $0x490] sm:$0xff]
        %v653 = vld [vmem:[#allocation12 + $0x498] sm:$0xff]
        %v654 = vld [vmem:[#allocation12 + $0x4a0] sm:$0xff]
        %v655 = vld [vmem:[#allocation12 + $0x4a8] sm:$0xff]
        %v656 = vld [vmem:[#allocation12 + $0x4b0] sm:$0xff]
        %v657 = vld [vmem:[#allocation12 + $0x4b8] sm:$0xff]
        %v658 = vld [vmem:[#allocation12 + $0x4c0] sm:$0xff]
        %v659 = vld [vmem:[#allocation12 + $0x4c8] sm:$0xff]
        %v660 = vld [vmem:[#allocation12 + $0x4d0] sm:$0xff]
        %v661 = vld [vmem:[#allocation12 + $0x4d8] sm:$0xff]
        %v662 = vld [vmem:[#allocation12 + $0x4e0] sm:$0xff]
        %v663 = vld [vmem:[#allocation12 + $0x4e8] sm:$0xff]
        %v664 = vld [vmem:[#allocation12 + $0x4f0] sm:$0xff]
        %v665 = vld [vmem:[#allocation12 + $0x4f8] sm:$0xff]
        %v666 = vld [vmem:[#allocation12 + $0x500] sm:$0xff]
        %v667 = vld [vmem:[#allocation12 + $0x508] sm:$0xff]
        %v668 = vld [vmem:[#allocation12 + $0x510] sm:$0xff]
        %v669 = vld [vmem:[#allocation12 + $0x518] sm:$0xff]
        %v670 = vld [vmem:[#allocation12 + $0x520] sm:$0xff]
        %v671 = vld [vmem:[#allocation12 + $0x528] sm:$0xff]
        %v672 = vld [vmem:[#allocation12 + $0x530] sm:$0xff]
        %v673 = vld [vmem:[#allocation12 + $0x538] sm:$0xff]
        %v674 = vld [vmem:[#allocation12 + $0x540] sm:$0xff]
        %v675 = vld [vmem:[#allocation12 + $0x548] sm:$0xff]
        %v676 = vld [vmem:[#allocation12 + $0x550] sm:$0xff]
        %v677 = vld [vmem:[#allocation12 + $0x558] sm:$0xff]
        %v678 = vld [vmem:[#allocation12 + $0x560] sm:$0xff]
        %v679 = vld [vmem:[#allocation12 + $0x568] sm:$0xff]
        %v680 = vld [vmem:[#allocation12 + $0x570] sm:$0xff]
        %v681 = vld [vmem:[#allocation12 + $0x578] sm:$0xff]
        %v682 = vld [vmem:[#allocation12 + $0x580] sm:$0xff]
        %v683 = vld [vmem:[#allocation12 + $0x588] sm:$0xff]
        %v684 = vld [vmem:[#allocation12 + $0x590] sm:$0xff]
        %v685 = vld [vmem:[#allocation12 + $0x598] sm:$0xff]
        %v686 = vld [vmem:[#allocation12 + $0x5a0] sm:$0xff]
        %v687 = vld [vmem:[#allocation12 + $0x5a8] sm:$0xff]
        %v688 = vld [vmem:[#allocation12 + $0x5b0] sm:$0xff]
        %v689 = vld [vmem:[#allocation12 + $0x5b8] sm:$0xff]
        %v690 = vld [vmem:[#allocation12 + $0x5c0] sm:$0xff]
        %v691 = vld [vmem:[#allocation12 + $0x5c8] sm:$0xff]
        %v692 = vld [vmem:[#allocation12 + $0x5d0] sm:$0xff]
        %v693 = vld [vmem:[#allocation12 + $0x5d8] sm:$0xff]
        %v694 = vld [vmem:[#allocation12 + $0x5e0] sm:$0xff]
        %v695 = vld [vmem:[#allocation12 + $0x5e8] sm:$0xff]
        %v696 = vld [vmem:[#allocation12 + $0x5f0] sm:$0xff]
        %v697 = vld [vmem:[#allocation12 + $0x5f8] sm:$0xff]
        %v699 = vunpack.c.l.b16 %v505
        %v700 = vunpack.c.h.b16 %v505
        %v701 = vpack.c.b16 %v699, %v699
        %v702 = vpack.c.b16 %v700, %v700
        %v897 = vunpack.c.l.b16 %v506
        %v898 = vunpack.c.h.b16 %v506
        %v899 = vunpack.c.l.b16 %v507
        %v900 = vunpack.c.h.b16 %v507
        %v901 = vunpack.c.l.b16 %v508
        %v902 = vunpack.c.h.b16 %v508
        %v903 = vunpack.c.l.b16 %v509
        %v904 = vunpack.c.h.b16 %v509
        %v905 = vunpack.c.l.b16 %v510
        %v906 = vunpack.c.h.b16 %v510
        %v907 = vunpack.c.l.b16 %v511
        %v908 = vunpack.c.h.b16 %v511
        %v909 = vunpack.c.l.b16 %v512
        %v910 = vunpack.c.h.b16 %v512
        %v911 = vunpack.c.l.b16 %v513
        %v912 = vunpack.c.h.b16 %v513
        %v913 = vunpack.c.l.b16 %v514
        %v914 = vunpack.c.h.b16 %v514
        %v915 = vunpack.c.l.b16 %v515
        %v916 = vunpack.c.h.b16 %v515
        %v917 = vunpack.c.l.b16 %v516
        %v918 = vunpack.c.h.b16 %v516
        %v919 = vunpack.c.l.b16 %v517
        %v920 = vunpack.c.h.b16 %v517
        %v921 = vunpack.c.l.b16 %v518
        %v922 = vunpack.c.h.b16 %v518
        %v923 = vunpack.c.l.b16 %v519
        %v924 = vunpack.c.h.b16 %v519
        %v925 = vunpack.c.l.b16 %v520
        %v926 = vunpack.c.h.b16 %v520
        %v927 = vunpack.c.l.b16 %v521
        %v928 = vunpack.c.h.b16 %v521
        %v929 = vunpack.c.l.b16 %v522
        %v930 = vunpack.c.h.b16 %v522
        %v931 = vunpack.c.l.b16 %v523
        %v932 = vunpack.c.h.b16 %v523
        %v933 = vunpack.c.l.b16 %v524
        %v934 = vunpack.c.h.b16 %v524
        %v935 = vunpack.c.l.b16 %v525
        %v936 = vunpack.c.h.b16 %v525
        %v937 = vunpack.c.l.b16 %v526
        %v938 = vunpack.c.h.b16 %v526
        %v939 = vunpack.c.l.b16 %v527
        %v940 = vunpack.c.h.b16 %v527
        %v941 = vunpack.c.l.b16 %v528
        %v942 = vunpack.c.h.b16 %v528
        %v943 = vunpack.c.l.b16 %v529
        %v944 = vunpack.c.h.b16 %v529
        %v945 = vunpack.c.l.b16 %v530
        %v946 = vunpack.c.h.b16 %v530
        %v947 = vunpack.c.l.b16 %v531
        %v948 = vunpack.c.h.b16 %v531
        %v949 = vunpack.c.l.b16 %v532
        %v950 = vunpack.c.h.b16 %v532
        %v951 = vunpack.c.l.b16 %v533
        %v952 = vunpack.c.h.b16 %v533
        %v953 = vunpack.c.l.b16 %v534
        %v954 = vunpack.c.h.b16 %v534
        %v955 = vunpack.c.l.b16 %v535
        %v956 = vunpack.c.h.b16 %v535
        %v957 = vunpack.c.l.b16 %v536
        %v958 = vunpack.c.h.b16 %v536
        %v959 = vunpack.c.l.b16 %v537
        %v960 = vunpack.c.h.b16 %v537
        %v961 = vunpack.c.l.b16 %v538
        %v962 = vunpack.c.h.b16 %v538
        %v963 = vunpack.c.l.b16 %v539
        %v964 = vunpack.c.h.b16 %v539
        %v965 = vunpack.c.l.b16 %v540
        %v966 = vunpack.c.h.b16 %v540
        %v967 = vunpack.c.l.b16 %v541
        %v968 = vunpack.c.h.b16 %v541
        %v969 = vunpack.c.l.b16 %v542
        %v970 = vunpack.c.h.b16 %v542
        %v971 = vunpack.c.l.b16 %v543
        %v972 = vunpack.c.h.b16 %v543
        %v973 = vunpack.c.l.b16 %v544
        %v974 = vunpack.c.h.b16 %v544
        %v975 = vunpack.c.l.b16 %v545
        %v976 = vunpack.c.h.b16 %v545
        %v977 = vunpack.c.l.b16 %v546
        %v978 = vunpack.c.h.b16 %v546
        %v979 = vunpack.c.l.b16 %v547
        %v980 = vunpack.c.h.b16 %v547
        %v981 = vunpack.c.l.b16 %v548
        %v982 = vunpack.c.h.b16 %v548
        %v983 = vunpack.c.l.b16 %v549
        %v984 = vunpack.c.h.b16 %v549
        %v985 = vunpack.c.l.b16 %v550
        %v986 = vunpack.c.h.b16 %v550
        %v987 = vunpack.c.l.b16 %v551
        %v988 = vunpack.c.h.b16 %v551
        %v989 = vunpack.c.l.b16 %v552
        %v990 = vunpack.c.h.b16 %v552
        %v991 = vunpack.c.l.b16 %v553
        %v992 = vunpack.c.h.b16 %v553
        %v993 = vunpack.c.l.b16 %v554
        %v994 = vunpack.c.h.b16 %v554
        %v995 = vunpack.c.l.b16 %v555
        %v996 = vunpack.c.h.b16 %v555
        %v997 = vunpack.c.l.b16 %v556
        %v998 = vunpack.c.h.b16 %v556
        %v999 = vunpack.c.l.b16 %v557
        %v1000 = vunpack.c.h.b16 %v557
        %v1001 = vunpack.c.l.b16 %v558
        %v1002 = vunpack.c.h.b16 %v558
        %v1003 = vunpack.c.l.b16 %v559
        %v1004 = vunpack.c.h.b16 %v559
        %v1005 = vunpack.c.l.b16 %v560
        %v1006 = vunpack.c.h.b16 %v560
        %v1007 = vunpack.c.l.b16 %v561
        %v1008 = vunpack.c.h.b16 %v561
        %v1009 = vunpack.c.l.b16 %v562
        %v1010 = vunpack.c.h.b16 %v562
        %v1011 = vunpack.c.l.b16 %v563
        %v1012 = vunpack.c.h.b16 %v563
        %v1013 = vunpack.c.l.b16 %v564
        %v1014 = vunpack.c.h.b16 %v564
        %v1015 = vunpack.c.l.b16 %v565
        %v1016 = vunpack.c.h.b16 %v565
        %v1017 = vunpack.c.l.b16 %v566
        %v1018 = vunpack.c.h.b16 %v566
        %v1019 = vunpack.c.l.b16 %v567
        %v1020 = vunpack.c.h.b16 %v567
        %v1021 = vunpack.c.l.b16 %v568
        %v1022 = vunpack.c.h.b16 %v568
        %v1023 = vunpack.c.l.b16 %v569
        %v1024 = vunpack.c.h.b16 %v569
        %v1025 = vunpack.c.l.b16 %v570
        %v1026 = vunpack.c.h.b16 %v570
        %v1027 = vunpack.c.l.b16 %v571
        %v1028 = vunpack.c.h.b16 %v571
        %v1029 = vunpack.c.l.b16 %v572
        %v1030 = vunpack.c.h.b16 %v572
        %v1031 = vunpack.c.l.b16 %v573
        %v1032 = vunpack.c.h.b16 %v573
        %v1033 = vunpack.c.l.b16 %v574
        %v1034 = vunpack.c.h.b16 %v574
        %v1035 = vunpack.c.l.b16 %v575
        %v1036 = vunpack.c.h.b16 %v575
        %v1037 = vunpack.c.l.b16 %v576
        %v1038 = vunpack.c.h.b16 %v576
        %v1039 = vunpack.c.l.b16 %v577
        %v1040 = vunpack.c.h.b16 %v577
        %v1041 = vunpack.c.l.b16 %v578
        %v1042 = vunpack.c.h.b16 %v578
        %v1043 = vunpack.c.l.b16 %v579
        %v1044 = vunpack.c.h.b16 %v579
        %v1045 = vunpack.c.l.b16 %v580
        %v1046 = vunpack.c.h.b16 %v580
        %v1047 = vunpack.c.l.b16 %v581
        %v1048 = vunpack.c.h.b16 %v581
        %v1049 = vunpack.c.l.b16 %v582
        %v1050 = vunpack.c.h.b16 %v582
        %v1051 = vunpack.c.l.b16 %v583
        %v1052 = vunpack.c.h.b16 %v583
        %v1053 = vunpack.c.l.b16 %v584
        %v1054 = vunpack.c.h.b16 %v584
        %v1055 = vunpack.c.l.b16 %v585
        %v1056 = vunpack.c.h.b16 %v585
        %v1057 = vunpack.c.l.b16 %v586
        %v1058 = vunpack.c.h.b16 %v586
        %v1059 = vunpack.c.l.b16 %v587
        %v1060 = vunpack.c.h.b16 %v587
        %v1061 = vunpack.c.l.b16 %v588
        %v1062 = vunpack.c.h.b16 %v588
        %v1063 = vunpack.c.l.b16 %v589
        %v1064 = vunpack.c.h.b16 %v589
        %v1065 = vunpack.c.l.b16 %v590
        %v1066 = vunpack.c.h.b16 %v590
        %v1067 = vunpack.c.l.b16 %v591
        %v1068 = vunpack.c.h.b16 %v591
        %v1069 = vunpack.c.l.b16 %v592
        %v1070 = vunpack.c.h.b16 %v592
        %v1071 = vunpack.c.l.b16 %v593
        %v1072 = vunpack.c.h.b16 %v593
        %v1073 = vunpack.c.l.b16 %v594
        %v1074 = vunpack.c.h.b16 %v594
        %v1075 = vunpack.c.l.b16 %v595
        %v1076 = vunpack.c.h.b16 %v595
        %v1077 = vunpack.c.l.b16 %v596
        %v1078 = vunpack.c.h.b16 %v596
        %v1079 = vunpack.c.l.b16 %v597
        %v1080 = vunpack.c.h.b16 %v597
        %v1081 = vunpack.c.l.b16 %v598
        %v1082 = vunpack.c.h.b16 %v598
        %v1083 = vunpack.c.l.b16 %v599
        %v1084 = vunpack.c.h.b16 %v599
        %v1085 = vunpack.c.l.b16 %v600
        %v1086 = vunpack.c.h.b16 %v600
        %v1087 = vunpack.c.l.b16 %v601
        %v1088 = vunpack.c.h.b16 %v601
        %v1089 = vunpack.c.l.b16 %v602
        %v1090 = vunpack.c.h.b16 %v602
        %v1091 = vunpack.c.l.b16 %v603
        %v1092 = vunpack.c.h.b16 %v603
        %v1093 = vunpack.c.l.b16 %v604
        %v1094 = vunpack.c.h.b16 %v604
        %v1095 = vunpack.c.l.b16 %v605
        %v1096 = vunpack.c.h.b16 %v605
        %v1097 = vunpack.c.l.b16 %v606
        %v1098 = vunpack.c.h.b16 %v606
        %v1099 = vunpack.c.l.b16 %v607
        %v1100 = vunpack.c.h.b16 %v607
        %v1101 = vunpack.c.l.b16 %v608
        %v1102 = vunpack.c.h.b16 %v608
        %v1103 = vunpack.c.l.b16 %v609
        %v1104 = vunpack.c.h.b16 %v609
        %v1105 = vunpack.c.l.b16 %v610
        %v1106 = vunpack.c.h.b16 %v610
        %v1107 = vunpack.c.l.b16 %v611
        %v1108 = vunpack.c.h.b16 %v611
        %v1109 = vunpack.c.l.b16 %v612
        %v1110 = vunpack.c.h.b16 %v612
        %v1111 = vunpack.c.l.b16 %v613
        %v1112 = vunpack.c.h.b16 %v613
        %v1113 = vunpack.c.l.b16 %v614
        %v1114 = vunpack.c.h.b16 %v614
        %v1115 = vunpack.c.l.b16 %v615
        %v1116 = vunpack.c.h.b16 %v615
        %v1117 = vunpack.c.l.b16 %v616
        %v1118 = vunpack.c.h.b16 %v616
        %v1119 = vunpack.c.l.b16 %v617
        %v1120 = vunpack.c.h.b16 %v617
        %v1121 = vunpack.c.l.b16 %v618
        %v1122 = vunpack.c.h.b16 %v618
        %v1123 = vunpack.c.l.b16 %v619
        %v1124 = vunpack.c.h.b16 %v619
        %v1125 = vunpack.c.l.b16 %v620
        %v1126 = vunpack.c.h.b16 %v620
        %v1127 = vunpack.c.l.b16 %v621
        %v1128 = vunpack.c.h.b16 %v621
        %v1129 = vunpack.c.l.b16 %v622
        %v1130 = vunpack.c.h.b16 %v622
        %v1131 = vunpack.c.l.b16 %v623
        %v1132 = vunpack.c.h.b16 %v623
        %v1133 = vunpack.c.l.b16 %v624
        %v1134 = vunpack.c.h.b16 %v624
        %v1135 = vunpack.c.l.b16 %v625
        %v1136 = vunpack.c.h.b16 %v625
        %v1137 = vunpack.c.l.b16 %v626
        %v1138 = vunpack.c.h.b16 %v626
        %v1139 = vunpack.c.l.b16 %v627
        %v1140 = vunpack.c.h.b16 %v627
        %v1141 = vunpack.c.l.b16 %v628
        %v1142 = vunpack.c.h.b16 %v628
        %v1143 = vunpack.c.l.b16 %v629
        %v1144 = vunpack.c.h.b16 %v629
        %v1145 = vunpack.c.l.b16 %v630
        %v1146 = vunpack.c.h.b16 %v630
        %v1147 = vunpack.c.l.b16 %v631
        %v1148 = vunpack.c.h.b16 %v631
        %v1149 = vunpack.c.l.b16 %v632
        %v1150 = vunpack.c.h.b16 %v632
        %v1151 = vunpack.c.l.b16 %v633
        %v1152 = vunpack.c.h.b16 %v633
        %v1153 = vunpack.c.l.b16 %v634
        %v1154 = vunpack.c.h.b16 %v634
        %v1155 = vunpack.c.l.b16 %v635
        %v1156 = vunpack.c.h.b16 %v635
        %v1157 = vunpack.c.l.b16 %v636
        %v1158 = vunpack.c.h.b16 %v636
        %v1159 = vunpack.c.l.b16 %v637
        %v1160 = vunpack.c.h.b16 %v637
        %v1161 = vunpack.c.l.b16 %v638
        %v1162 = vunpack.c.h.b16 %v638
        %v1163 = vunpack.c.l.b16 %v639
        %v1164 = vunpack.c.h.b16 %v639
        %v1165 = vunpack.c.l.b16 %v640
        %v1166 = vunpack.c.h.b16 %v640
        %v1167 = vunpack.c.l.b16 %v641
        %v1168 = vunpack.c.h.b16 %v641
        %v1169 = vunpack.c.l.b16 %v642
        %v1170 = vunpack.c.h.b16 %v642
        %v1171 = vunpack.c.l.b16 %v643
        %v1172 = vunpack.c.h.b16 %v643
        %v1173 = vunpack.c.l.b16 %v644
        %v1174 = vunpack.c.h.b16 %v644
        %v1175 = vunpack.c.l.b16 %v645
        %v1176 = vunpack.c.h.b16 %v645
        %v1177 = vunpack.c.l.b16 %v646
        %v1178 = vunpack.c.h.b16 %v646
        %v1179 = vunpack.c.l.b16 %v647
        %v1180 = vunpack.c.h.b16 %v647
        %v1181 = vunpack.c.l.b16 %v648
        %v1182 = vunpack.c.h.b16 %v648
        %v1183 = vunpack.c.l.b16 %v649
        %v1184 = vunpack.c.h.b16 %v649
        %v1185 = vunpack.c.l.b16 %v650
        %v1186 = vunpack.c.h.b16 %v650
        %v1187 = vunpack.c.l.b16 %v651
        %v1188 = vunpack.c.h.b16 %v651
        %v1189 = vunpack.c.l.b16 %v652
        %v1190 = vunpack.c.h.b16 %v652
        %v1191 = vunpack.c.l.b16 %v653
        %v1192 = vunpack.c.h.b16 %v653
        %v1193 = vunpack.c.l.b16 %v654
        %v1194 = vunpack.c.h.b16 %v654
        %v1195 = vunpack.c.l.b16 %v655
        %v1196 = vunpack.c.h.b16 %v655
        %v1197 = vunpack.c.l.b16 %v656
        %v1198 = vunpack.c.h.b16 %v656
        %v1199 = vunpack.c.l.b16 %v657
        %v1200 = vunpack.c.h.b16 %v657
        %v1201 = vunpack.c.l.b16 %v658
        %v1202 = vunpack.c.h.b16 %v658
        %v1203 = vunpack.c.l.b16 %v659
        %v1204 = vunpack.c.h.b16 %v659
        %v1205 = vunpack.c.l.b16 %v660
        %v1206 = vunpack.c.h.b16 %v660
        %v1207 = vunpack.c.l.b16 %v661
        %v1208 = vunpack.c.h.b16 %v661
        %v1209 = vunpack.c.l.b16 %v662
        %v1210 = vunpack.c.h.b16 %v662
        %v1211 = vunpack.c.l.b16 %v663
        %v1212 = vunpack.c.h.b16 %v663
        %v1213 = vunpack.c.l.b16 %v664
        %v1214 = vunpack.c.h.b16 %v664
        %v1215 = vunpack.c.l.b16 %v665
        %v1216 = vunpack.c.h.b16 %v665
        %v1217 = vunpack.c.l.b16 %v666
        %v1218 = vunpack.c.h.b16 %v666
        %v1219 = vunpack.c.l.b16 %v667
        %v1220 = vunpack.c.h.b16 %v667
        %v1221 = vunpack.c.l.b16 %v668
        %v1222 = vunpack.c.h.b16 %v668
        %v1223 = vunpack.c.l.b16 %v669
        %v1224 = vunpack.c.h.b16 %v669
        %v1225 = vunpack.c.l.b16 %v670
        %v1226 = vunpack.c.h.b16 %v670
        %v1227 = vunpack.c.l.b16 %v671
        %v1228 = vunpack.c.h.b16 %v671
        %v1229 = vunpack.c.l.b16 %v672
        %v1230 = vunpack.c.h.b16 %v672
        %v1231 = vunpack.c.l.b16 %v673
        %v1232 = vunpack.c.h.b16 %v673
        %v1233 = vunpack.c.l.b16 %v674
        %v1234 = vunpack.c.h.b16 %v674
        %v1235 = vunpack.c.l.b16 %v675
        %v1236 = vunpack.c.h.b16 %v675
        %v1237 = vunpack.c.l.b16 %v676
        %v1238 = vunpack.c.h.b16 %v676
        %v1239 = vunpack.c.l.b16 %v677
        %v1240 = vunpack.c.h.b16 %v677
        %v1241 = vunpack.c.l.b16 %v678
        %v1242 = vunpack.c.h.b16 %v678
        %v1243 = vunpack.c.l.b16 %v679
        %v1244 = vunpack.c.h.b16 %v679
        %v1245 = vunpack.c.l.b16 %v680
        %v1246 = vunpack.c.h.b16 %v680
        %v1247 = vunpack.c.l.b16 %v681
        %v1248 = vunpack.c.h.b16 %v681
        %v1249 = vunpack.c.l.b16 %v682
        %v1250 = vunpack.c.h.b16 %v682
        %v1251 = vunpack.c.l.b16 %v683
        %v1252 = vunpack.c.h.b16 %v683
        %v1253 = vunpack.c.l.b16 %v684
        %v1254 = vunpack.c.h.b16 %v684
        %v1255 = vunpack.c.l.b16 %v685
        %v1256 = vunpack.c.h.b16 %v685
        %v1257 = vunpack.c.l.b16 %v686
        %v1258 = vunpack.c.h.b16 %v686
        %v1259 = vunpack.c.l.b16 %v687
        %v1260 = vunpack.c.h.b16 %v687
        %v1261 = vunpack.c.l.b16 %v688
        %v1262 = vunpack.c.h.b16 %v688
        %v1263 = vunpack.c.l.b16 %v689
        %v1264 = vunpack.c.h.b16 %v689
        %v1265 = vunpack.c.l.b16 %v690
        %v1266 = vunpack.c.h.b16 %v690
        %v1267 = vunpack.c.l.b16 %v691
        %v1268 = vunpack.c.h.b16 %v691
        %v1269 = vunpack.c.l.b16 %v692
        %v1270 = vunpack.c.h.b16 %v692
        %v1271 = vunpack.c.l.b16 %v693
        %v1272 = vunpack.c.h.b16 %v693
        %v1273 = vunpack.c.l.b16 %v694
        %v1274 = vunpack.c.h.b16 %v694
        %v1275 = vunpack.c.l.b16 %v695
        %v1276 = vunpack.c.h.b16 %v695
        %v1277 = vunpack.c.l.b16 %v696
        %v1278 = vunpack.c.h.b16 %v696
        %v1279 = vunpack.c.l.b16 %v697
        %v1280 = vunpack.c.h.b16 %v697
        %v1281 = vpack.c.b16 %v909, %v897
        %v1282 = vpack.c.b16 %v910, %v898
        %v1283 = vpack.c.b16 %v911, %v899
        %v1284 = vpack.c.b16 %v912, %v900
        %v1285 = vpack.c.b16 %v913, %v901
        %v1286 = vpack.c.b16 %v914, %v902
        %v1287 = vpack.c.b16 %v915, %v903
        %v1288 = vpack.c.b16 %v916, %v904
        %v1289 = vpack.c.b16 %v917, %v905
        %v1290 = vpack.c.b16 %v918, %v906
        %v1291 = vpack.c.b16 %v919, %v907
        %v1292 = vpack.c.b16 %v920, %v908
        %v1293 = vpack.c.b16 %v933, %v921
        %v1294 = vpack.c.b16 %v934, %v922
        %v1295 = vpack.c.b16 %v935, %v923
        %v1296 = vpack.c.b16 %v936, %v924
        %v1297 = vpack.c.b16 %v937, %v925
        %v1298 = vpack.c.b16 %v938, %v926
        %v1299 = vpack.c.b16 %v939, %v927
        %v1300 = vpack.c.b16 %v940, %v928
        %v1301 = vpack.c.b16 %v941, %v929
        %v1302 = vpack.c.b16 %v942, %v930
        %v1303 = vpack.c.b16 %v943, %v931
        %v1304 = vpack.c.b16 %v944, %v932
        %v1305 = vpack.c.b16 %v957, %v945
        %v1306 = vpack.c.b16 %v958, %v946
        %v1307 = vpack.c.b16 %v959, %v947
        %v1308 = vpack.c.b16 %v960, %v948
        %v1309 = vpack.c.b16 %v961, %v949
        %v1310 = vpack.c.b16 %v962, %v950
        %v1311 = vpack.c.b16 %v963, %v951
        %v1312 = vpack.c.b16 %v964, %v952
        %v1313 = vpack.c.b16 %v965, %v953
        %v1314 = vpack.c.b16 %v966, %v954
        %v1315 = vpack.c.b16 %v967, %v955
        %v1316 = vpack.c.b16 %v968, %v956
        %v1317 = vpack.c.b16 %v981, %v969
        %v1318 = vpack.c.b16 %v982, %v970
        %v1319 = vpack.c.b16 %v983, %v971
        %v1320 = vpack.c.b16 %v984, %v972
        %v1321 = vpack.c.b16 %v985, %v973
        %v1322 = vpack.c.b16 %v986, %v974
        %v1323 = vpack.c.b16 %v987, %v975
        %v1324 = vpack.c.b16 %v988, %v976
        %v1325 = vpack.c.b16 %v989, %v977
        %v1326 = vpack.c.b16 %v990, %v978
        %v1327 = vpack.c.b16 %v991, %v979
        %v1328 = vpack.c.b16 %v992, %v980
        %v1329 = vpack.c.b16 %v1005, %v993
        %v1330 = vpack.c.b16 %v1006, %v994
        %v1331 = vpack.c.b16 %v1007, %v995
        %v1332 = vpack.c.b16 %v1008, %v996
        %v1333 = vpack.c.b16 %v1009, %v997
        %v1334 = vpack.c.b16 %v1010, %v998
        %v1335 = vpack.c.b16 %v1011, %v999
        %v1336 = vpack.c.b16 %v1012, %v1000
        %v1337 = vpack.c.b16 %v1013, %v1001
        %v1338 = vpack.c.b16 %v1014, %v1002
        %v1339 = vpack.c.b16 %v1015, %v1003
        %v1340 = vpack.c.b16 %v1016, %v1004
        %v1341 = vpack.c.b16 %v1029, %v1017
        %v1342 = vpack.c.b16 %v1030, %v1018
        %v1343 = vpack.c.b16 %v1031, %v1019
        %v1344 = vpack.c.b16 %v1032, %v1020
        %v1345 = vpack.c.b16 %v1033, %v1021
        %v1346 = vpack.c.b16 %v1034, %v1022
        %v1347 = vpack.c.b16 %v1035, %v1023
        %v1348 = vpack.c.b16 %v1036, %v1024
        %v1349 = vpack.c.b16 %v1037, %v1025
        %v1350 = vpack.c.b16 %v1038, %v1026
        %v1351 = vpack.c.b16 %v1039, %v1027
        %v1352 = vpack.c.b16 %v1040, %v1028
        %v1353 = vpack.c.b16 %v1053, %v1041
        %v1354 = vpack.c.b16 %v1054, %v1042
        %v1355 = vpack.c.b16 %v1055, %v1043
        %v1356 = vpack.c.b16 %v1056, %v1044
        %v1357 = vpack.c.b16 %v1057, %v1045
        %v1358 = vpack.c.b16 %v1058, %v1046
        %v1359 = vpack.c.b16 %v1059, %v1047
        %v1360 = vpack.c.b16 %v1060, %v1048
        %v1361 = vpack.c.b16 %v1061, %v1049
        %v1362 = vpack.c.b16 %v1062, %v1050
        %v1363 = vpack.c.b16 %v1063, %v1051
        %v1364 = vpack.c.b16 %v1064, %v1052
        %v1365 = vpack.c.b16 %v1077, %v1065
        %v1366 = vpack.c.b16 %v1078, %v1066
        %v1367 = vpack.c.b16 %v1079, %v1067
        %v1368 = vpack.c.b16 %v1080, %v1068
        %v1369 = vpack.c.b16 %v1081, %v1069
        %v1370 = vpack.c.b16 %v1082, %v1070
        %v1371 = vpack.c.b16 %v1083, %v1071
        %v1372 = vpack.c.b16 %v1084, %v1072
        %v1373 = vpack.c.b16 %v1085, %v1073
        %v1374 = vpack.c.b16 %v1086, %v1074
        %v1375 = vpack.c.b16 %v1087, %v1075
        %v1376 = vpack.c.b16 %v1088, %v1076
        %v1377 = vpack.c.b16 %v1101, %v1089
        %v1378 = vpack.c.b16 %v1102, %v1090
        %v1379 = vpack.c.b16 %v1103, %v1091
        %v1380 = vpack.c.b16 %v1104, %v1092
        %v1381 = vpack.c.b16 %v1105, %v1093
        %v1382 = vpack.c.b16 %v1106, %v1094
        %v1383 = vpack.c.b16 %v1107, %v1095
        %v1384 = vpack.c.b16 %v1108, %v1096
        %v1385 = vpack.c.b16 %v1109, %v1097
        %v1386 = vpack.c.b16 %v1110, %v1098
        %v1387 = vpack.c.b16 %v1111, %v1099
        %v1388 = vpack.c.b16 %v1112, %v1100
        %v1389 = vpack.c.b16 %v1125, %v1113
        %v1390 = vpack.c.b16 %v1126, %v1114
        %v1391 = vpack.c.b16 %v1127, %v1115
        %v1392 = vpack.c.b16 %v1128, %v1116
        %v1393 = vpack.c.b16 %v1129, %v1117
        %v1394 = vpack.c.b16 %v1130, %v1118
        %v1395 = vpack.c.b16 %v1131, %v1119
        %v1396 = vpack.c.b16 %v1132, %v1120
        %v1397 = vpack.c.b16 %v1133, %v1121
        %v1398 = vpack.c.b16 %v1134, %v1122
        %v1399 = vpack.c.b16 %v1135, %v1123
        %v1400 = vpack.c.b16 %v1136, %v1124
        %v1401 = vpack.c.b16 %v1149, %v1137
        %v1402 = vpack.c.b16 %v1150, %v1138
        %v1403 = vpack.c.b16 %v1151, %v1139
        %v1404 = vpack.c.b16 %v1152, %v1140
        %v1405 = vpack.c.b16 %v1153, %v1141
        %v1406 = vpack.c.b16 %v1154, %v1142
        %v1407 = vpack.c.b16 %v1155, %v1143
        %v1408 = vpack.c.b16 %v1156, %v1144
        %v1409 = vpack.c.b16 %v1157, %v1145
        %v1410 = vpack.c.b16 %v1158, %v1146
        %v1411 = vpack.c.b16 %v1159, %v1147
        %v1412 = vpack.c.b16 %v1160, %v1148
        %v1413 = vpack.c.b16 %v1173, %v1161
        %v1414 = vpack.c.b16 %v1174, %v1162
        %v1415 = vpack.c.b16 %v1175, %v1163
        %v1416 = vpack.c.b16 %v1176, %v1164
        %v1417 = vpack.c.b16 %v1177, %v1165
        %v1418 = vpack.c.b16 %v1178, %v1166
        %v1419 = vpack.c.b16 %v1179, %v1167
        %v1420 = vpack.c.b16 %v1180, %v1168
        %v1421 = vpack.c.b16 %v1181, %v1169
        %v1422 = vpack.c.b16 %v1182, %v1170
        %v1423 = vpack.c.b16 %v1183, %v1171
        %v1424 = vpack.c.b16 %v1184, %v1172
        %v1425 = vpack.c.b16 %v1197, %v1185
        %v1426 = vpack.c.b16 %v1198, %v1186
        %v1427 = vpack.c.b16 %v1199, %v1187
        %v1428 = vpack.c.b16 %v1200, %v1188
        %v1429 = vpack.c.b16 %v1201, %v1189
        %v1430 = vpack.c.b16 %v1202, %v1190
        %v1431 = vpack.c.b16 %v1203, %v1191
        %v1432 = vpack.c.b16 %v1204, %v1192
        %v1433 = vpack.c.b16 %v1205, %v1193
        %v1434 = vpack.c.b16 %v1206, %v1194
        %v1435 = vpack.c.b16 %v1207, %v1195
        %v1436 = vpack.c.b16 %v1208, %v1196
        %v1437 = vpack.c.b16 %v1221, %v1209
        %v1438 = vpack.c.b16 %v1222, %v1210
        %v1439 = vpack.c.b16 %v1223, %v1211
        %v1440 = vpack.c.b16 %v1224, %v1212
        %v1441 = vpack.c.b16 %v1225, %v1213
        %v1442 = vpack.c.b16 %v1226, %v1214
        %v1443 = vpack.c.b16 %v1227, %v1215
        %v1444 = vpack.c.b16 %v1228, %v1216
        %v1445 = vpack.c.b16 %v1229, %v1217
        %v1446 = vpack.c.b16 %v1230, %v1218
        %v1447 = vpack.c.b16 %v1231, %v1219
        %v1448 = vpack.c.b16 %v1232, %v1220
        %v1449 = vpack.c.b16 %v1245, %v1233
        %v1450 = vpack.c.b16 %v1246, %v1234
        %v1451 = vpack.c.b16 %v1247, %v1235
        %v1452 = vpack.c.b16 %v1248, %v1236
        %v1453 = vpack.c.b16 %v1249, %v1237
        %v1454 = vpack.c.b16 %v1250, %v1238
        %v1455 = vpack.c.b16 %v1251, %v1239
        %v1456 = vpack.c.b16 %v1252, %v1240
        %v1457 = vpack.c.b16 %v1253, %v1241
        %v1458 = vpack.c.b16 %v1254, %v1242
        %v1459 = vpack.c.b16 %v1255, %v1243
        %v1460 = vpack.c.b16 %v1256, %v1244
        %v1461 = vpack.c.b16 %v1269, %v1257
        %v1462 = vpack.c.b16 %v1270, %v1258
        %v1463 = vpack.c.b16 %v1271, %v1259
        %v1464 = vpack.c.b16 %v1272, %v1260
        %v1465 = vpack.c.b16 %v1273, %v1261
        %v1466 = vpack.c.b16 %v1274, %v1262
        %v1467 = vpack.c.b16 %v1275, %v1263
        %v1468 = vpack.c.b16 %v1276, %v1264
        %v1469 = vpack.c.b16 %v1277, %v1265
        %v1470 = vpack.c.b16 %v1278, %v1266
        %v1471 = vpack.c.b16 %v1279, %v1267
        %v1472 = vpack.c.b16 %v1280, %v1268
        %1665 = vmatpush.bf16.msra.mxu0 %v1365
        %1666 = vmatpush.bf16.msra.mxu0 %v1353
        %1667 = vmatpush.bf16.msra.mxu0 %v1341
        %1668 = vmatpush.bf16.msra.mxu0 %v1329
        %1669 = vmatpush.bf16.msra.mxu0 %v1317
        %1670 = vmatpush.bf16.msra.mxu0 %v1305
        %1671 = vmatpush.bf16.msra.mxu0 %v1293
        %1672 = vmatpush.bf16.msra.mxu0 %v1281
        %1673 = vmatmul.bf16.gmra.mxu0 %v701
        %v1674 = vpop.f32.mrf.mxu0
        %v1675 = vadd.f32 0.0, %v1674
        %v1676 = vpop.f32.mrf.mxu0
        %1677 = vdwg.mxu0
        %1678 = vmatpush.bf16.msra.mxu0 %v1461
        %1679 = vmatpush.bf16.msra.mxu0 %v1449
        %1680 = vmatpush.bf16.msra.mxu0 %v1437
        %1681 = vmatpush.bf16.msra.mxu0 %v1425
        %1682 = vmatpush.bf16.msra.mxu0 %v1413
        %1683 = vmatpush.bf16.msra.mxu0 %v1401
        %1684 = vmatpush.bf16.msra.mxu0 %v1389
        %1685 = vmatpush.bf16.msra.mxu0 %v1377
        %1686 = vmatmul.bf16.gmra.mxu0 %v702
        %v1687 = vpop.f32.mrf.mxu0
        %v1688 = vadd.f32 %v1675, %v1687
        %v1689 = vpop.f32.mrf.mxu0
        %1690 = vdwg.mxu0
        %1691 = vmatpush.bf16.msra.mxu0 %v1366
        %1692 = vmatpush.bf16.msra.mxu0 %v1354
        %1693 = vmatpush.bf16.msra.mxu0 %v1342
        %1694 = vmatpush.bf16.msra.mxu0 %v1330
        %1695 = vmatpush.bf16.msra.mxu0 %v1318
        %1696 = vmatpush.bf16.msra.mxu0 %v1306
        %1697 = vmatpush.bf16.msra.mxu0 %v1294
        %1698 = vmatpush.bf16.msra.mxu0 %v1282
        %1699 = vmatmul.bf16.gmra.mxu0 %v701
        %v1700 = vpop.f32.mrf.mxu0
        %v1701 = vadd.f32 0.0, %v1700
        %v1702 = vpop.f32.mrf.mxu0
        %1703 = vdwg.mxu0
        %1704 = vmatpush.bf16.msra.mxu0 %v1462
        %1705 = vmatpush.bf16.msra.mxu0 %v1450
        %1706 = vmatpush.bf16.msra.mxu0 %v1438
        %1707 = vmatpush.bf16.msra.mxu0 %v1426
        %1708 = vmatpush.bf16.msra.mxu0 %v1414
        %1709 = vmatpush.bf16.msra.mxu0 %v1402
        %1710 = vmatpush.bf16.msra.mxu0 %v1390
        %1711 = vmatpush.bf16.msra.mxu0 %v1378
        %1712 = vmatmul.bf16.gmra.mxu0 %v702
        %v1713 = vpop.f32.mrf.mxu0
        %v1714 = vadd.f32 %v1701, %v1713
        %v1715 = vpop.f32.mrf.mxu0
        %1716 = vdwg.mxu0
        %1717 = vmatpush.bf16.msra.mxu0 %v1367
        %1718 = vmatpush.bf16.msra.mxu0 %v1355
        %1719 = vmatpush.bf16.msra.mxu0 %v1343
        %1720 = vmatpush.bf16.msra.mxu0 %v1331
        %1721 = vmatpush.bf16.msra.mxu0 %v1319
        %1722 = vmatpush.bf16.msra.mxu0 %v1307
        %1723 = vmatpush.bf16.msra.mxu0 %v1295
        %1724 = vmatpush.bf16.msra.mxu0 %v1283
        %1725 = vmatmul.bf16.gmra.mxu0 %v701
        %v1726 = vpop.f32.mrf.mxu0
        %v1727 = vadd.f32 0.0, %v1726
        %v1728 = vpop.f32.mrf.mxu0
        %1729 = vdwg.mxu0
        %1730 = vmatpush.bf16.msra.mxu0 %v1463
        %1731 = vmatpush.bf16.msra.mxu0 %v1451
        %1732 = vmatpush.bf16.msra.mxu0 %v1439
        %1733 = vmatpush.bf16.msra.mxu0 %v1427
        %1734 = vmatpush.bf16.msra.mxu0 %v1415
        %1735 = vmatpush.bf16.msra.mxu0 %v1403
        %1736 = vmatpush.bf16.msra.mxu0 %v1391
        %1737 = vmatpush.bf16.msra.mxu0 %v1379
        %1738 = vmatmul.bf16.gmra.mxu0 %v702
        %v1739 = vpop.f32.mrf.mxu0
        %v1740 = vadd.f32 %v1727, %v1739
        %v1741 = vpop.f32.mrf.mxu0
        %1742 = vdwg.mxu0
        %1743 = vmatpush.bf16.msra.mxu0 %v1368
        %1744 = vmatpush.bf16.msra.mxu0 %v1356
        %1745 = vmatpush.bf16.msra.mxu0 %v1344
        %1746 = vmatpush.bf16.msra.mxu0 %v1332
        %1747 = vmatpush.bf16.msra.mxu0 %v1320
        %1748 = vmatpush.bf16.msra.mxu0 %v1308
        %1749 = vmatpush.bf16.msra.mxu0 %v1296
        %1750 = vmatpush.bf16.msra.mxu0 %v1284
        %1751 = vmatmul.bf16.gmra.mxu0 %v701
        %v1752 = vpop.f32.mrf.mxu0
        %v1753 = vadd.f32 0.0, %v1752
        %v1754 = vpop.f32.mrf.mxu0
        %1755 = vdwg.mxu0
        %1756 = vmatpush.bf16.msra.mxu0 %v1464
        %1757 = vmatpush.bf16.msra.mxu0 %v1452
        %1758 = vmatpush.bf16.msra.mxu0 %v1440
        %1759 = vmatpush.bf16.msra.mxu0 %v1428
        %1760 = vmatpush.bf16.msra.mxu0 %v1416
        %1761 = vmatpush.bf16.msra.mxu0 %v1404
        %1762 = vmatpush.bf16.msra.mxu0 %v1392
        %1763 = vmatpush.bf16.msra.mxu0 %v1380
        %1764 = vmatmul.bf16.gmra.mxu0 %v702
        %v1765 = vpop.f32.mrf.mxu0
        %v1766 = vadd.f32 %v1753, %v1765
        %v1767 = vpop.f32.mrf.mxu0
        %1768 = vdwg.mxu0
        %1769 = vmatpush.bf16.msra.mxu0 %v1369
        %1770 = vmatpush.bf16.msra.mxu0 %v1357
        %1771 = vmatpush.bf16.msra.mxu0 %v1345
        %1772 = vmatpush.bf16.msra.mxu0 %v1333
        %1773 = vmatpush.bf16.msra.mxu0 %v1321
        %1774 = vmatpush.bf16.msra.mxu0 %v1309
        %1775 = vmatpush.bf16.msra.mxu0 %v1297
        %1776 = vmatpush.bf16.msra.mxu0 %v1285
        %1777 = vmatmul.bf16.gmra.mxu0 %v701
        %v1778 = vpop.f32.mrf.mxu0
        %v1779 = vadd.f32 0.0, %v1778
        %v1780 = vpop.f32.mrf.mxu0
        %1781 = vdwg.mxu0
        %1782 = vmatpush.bf16.msra.mxu0 %v1465
        %1783 = vmatpush.bf16.msra.mxu0 %v1453
        %1784 = vmatpush.bf16.msra.mxu0 %v1441
        %1785 = vmatpush.bf16.msra.mxu0 %v1429
        %1786 = vmatpush.bf16.msra.mxu0 %v1417
        %1787 = vmatpush.bf16.msra.mxu0 %v1405
        %1788 = vmatpush.bf16.msra.mxu0 %v1393
        %1789 = vmatpush.bf16.msra.mxu0 %v1381
        %1790 = vmatmul.bf16.gmra.mxu0 %v702
        %v1791 = vpop.f32.mrf.mxu0
        %v1792 = vadd.f32 %v1779, %v1791
        %v1793 = vpop.f32.mrf.mxu0
        %1794 = vdwg.mxu0
        %1795 = vmatpush.bf16.msra.mxu0 %v1370
        %1796 = vmatpush.bf16.msra.mxu0 %v1358
        %1797 = vmatpush.bf16.msra.mxu0 %v1346
        %1798 = vmatpush.bf16.msra.mxu0 %v1334
        %1799 = vmatpush.bf16.msra.mxu0 %v1322
        %1800 = vmatpush.bf16.msra.mxu0 %v1310
        %1801 = vmatpush.bf16.msra.mxu0 %v1298
        %1802 = vmatpush.bf16.msra.mxu0 %v1286
        %1803 = vmatmul.bf16.gmra.mxu0 %v701
        %v1804 = vpop.f32.mrf.mxu0
        %v1805 = vadd.f32 0.0, %v1804
        %v1806 = vpop.f32.mrf.mxu0
        %1807 = vdwg.mxu0
        %1808 = vmatpush.bf16.msra.mxu0 %v1466
        %1809 = vmatpush.bf16.msra.mxu0 %v1454
        %1810 = vmatpush.bf16.msra.mxu0 %v1442
        %1811 = vmatpush.bf16.msra.mxu0 %v1430
        %1812 = vmatpush.bf16.msra.mxu0 %v1418
        %1813 = vmatpush.bf16.msra.mxu0 %v1406
        %1814 = vmatpush.bf16.msra.mxu0 %v1394
        %1815 = vmatpush.bf16.msra.mxu0 %v1382
        %1816 = vmatmul.bf16.gmra.mxu0 %v702
        %v1817 = vpop.f32.mrf.mxu0
        %v1818 = vadd.f32 %v1805, %v1817
        %v1819 = vpop.f32.mrf.mxu0
        %1820 = vdwg.mxu0
        %1821 = vmatpush.bf16.msra.mxu0 %v1371
        %1822 = vmatpush.bf16.msra.mxu0 %v1359
        %1823 = vmatpush.bf16.msra.mxu0 %v1347
        %1824 = vmatpush.bf16.msra.mxu0 %v1335
        %1825 = vmatpush.bf16.msra.mxu0 %v1323
        %1826 = vmatpush.bf16.msra.mxu0 %v1311
        %1827 = vmatpush.bf16.msra.mxu0 %v1299
        %1828 = vmatpush.bf16.msra.mxu0 %v1287
        %1829 = vmatmul.bf16.gmra.mxu0 %v701
        %v1830 = vpop.f32.mrf.mxu0
        %v1831 = vadd.f32 0.0, %v1830
        %v1832 = vpop.f32.mrf.mxu0
        %1833 = vdwg.mxu0
        %1834 = vmatpush.bf16.msra.mxu0 %v1467
        %1835 = vmatpush.bf16.msra.mxu0 %v1455
        %1836 = vmatpush.bf16.msra.mxu0 %v1443
        %1837 = vmatpush.bf16.msra.mxu0 %v1431
        %1838 = vmatpush.bf16.msra.mxu0 %v1419
        %1839 = vmatpush.bf16.msra.mxu0 %v1407
        %1840 = vmatpush.bf16.msra.mxu0 %v1395
        %1841 = vmatpush.bf16.msra.mxu0 %v1383
        %1842 = vmatmul.bf16.gmra.mxu0 %v702
        %v1843 = vpop.f32.mrf.mxu0
        %v1844 = vadd.f32 %v1831, %v1843
        %v1845 = vpop.f32.mrf.mxu0
        %1846 = vdwg.mxu0
        %1847 = vmatpush.bf16.msra.mxu0 %v1372
        %1848 = vmatpush.bf16.msra.mxu0 %v1360
        %1849 = vmatpush.bf16.msra.mxu0 %v1348
        %1850 = vmatpush.bf16.msra.mxu0 %v1336
        %1851 = vmatpush.bf16.msra.mxu0 %v1324
        %1852 = vmatpush.bf16.msra.mxu0 %v1312
        %1853 = vmatpush.bf16.msra.mxu0 %v1300
        %1854 = vmatpush.bf16.msra.mxu0 %v1288
        %1855 = vmatmul.bf16.gmra.mxu0 %v701
        %v1856 = vpop.f32.mrf.mxu0
        %v1857 = vadd.f32 0.0, %v1856
        %v1858 = vpop.f32.mrf.mxu0
        %1859 = vdwg.mxu0
        %1860 = vmatpush.bf16.msra.mxu0 %v1468
        %1861 = vmatpush.bf16.msra.mxu0 %v1456
        %1862 = vmatpush.bf16.msra.mxu0 %v1444
        %1863 = vmatpush.bf16.msra.mxu0 %v1432
        %1864 = vmatpush.bf16.msra.mxu0 %v1420
        %1865 = vmatpush.bf16.msra.mxu0 %v1408
        %1866 = vmatpush.bf16.msra.mxu0 %v1396
        %1867 = vmatpush.bf16.msra.mxu0 %v1384
        %1868 = vmatmul.bf16.gmra.mxu0 %v702
        %v1869 = vpop.f32.mrf.mxu0
        %v1870 = vadd.f32 %v1857, %v1869
        %v1871 = vpop.f32.mrf.mxu0
        %1872 = vdwg.mxu0
        %1873 = vmatpush.bf16.msra.mxu0 %v1373
        %1874 = vmatpush.bf16.msra.mxu0 %v1361
        %1875 = vmatpush.bf16.msra.mxu0 %v1349
        %1876 = vmatpush.bf16.msra.mxu0 %v1337
        %1877 = vmatpush.bf16.msra.mxu0 %v1325
        %1878 = vmatpush.bf16.msra.mxu0 %v1313
        %1879 = vmatpush.bf16.msra.mxu0 %v1301
        %1880 = vmatpush.bf16.msra.mxu0 %v1289
        %1881 = vmatmul.bf16.gmra.mxu0 %v701
        %v1882 = vpop.f32.mrf.mxu0
        %v1883 = vadd.f32 0.0, %v1882
        %v1884 = vpop.f32.mrf.mxu0
        %1885 = vdwg.mxu0
        %1886 = vmatpush.bf16.msra.mxu0 %v1469
        %1887 = vmatpush.bf16.msra.mxu0 %v1457
        %1888 = vmatpush.bf16.msra.mxu0 %v1445
        %1889 = vmatpush.bf16.msra.mxu0 %v1433
        %1890 = vmatpush.bf16.msra.mxu0 %v1421
        %1891 = vmatpush.bf16.msra.mxu0 %v1409
        %1892 = vmatpush.bf16.msra.mxu0 %v1397
        %1893 = vmatpush.bf16.msra.mxu0 %v1385
        %1894 = vmatmul.bf16.gmra.mxu0 %v702
        %v1895 = vpop.f32.mrf.mxu0
        %v1896 = vadd.f32 %v1883, %v1895
        %v1897 = vpop.f32.mrf.mxu0
        %1898 = vdwg.mxu0
        %1899 = vmatpush.bf16.msra.mxu0 %v1374
        %1900 = vmatpush.bf16.msra.mxu0 %v1362
        %1901 = vmatpush.bf16.msra.mxu0 %v1350
        %1902 = vmatpush.bf16.msra.mxu0 %v1338
        %1903 = vmatpush.bf16.msra.mxu0 %v1326
        %1904 = vmatpush.bf16.msra.mxu0 %v1314
        %1905 = vmatpush.bf16.msra.mxu0 %v1302
        %1906 = vmatpush.bf16.msra.mxu0 %v1290
        %1907 = vmatmul.bf16.gmra.mxu0 %v701
        %v1908 = vpop.f32.mrf.mxu0
        %v1909 = vadd.f32 0.0, %v1908
        %v1910 = vpop.f32.mrf.mxu0
        %1911 = vdwg.mxu0
        %1912 = vmatpush.bf16.msra.mxu0 %v1470
        %1913 = vmatpush.bf16.msra.mxu0 %v1458
        %1914 = vmatpush.bf16.msra.mxu0 %v1446
        %1915 = vmatpush.bf16.msra.mxu0 %v1434
        %1916 = vmatpush.bf16.msra.mxu0 %v1422
        %1917 = vmatpush.bf16.msra.mxu0 %v1410
        %1918 = vmatpush.bf16.msra.mxu0 %v1398
        %1919 = vmatpush.bf16.msra.mxu0 %v1386
        %1920 = vmatmul.bf16.gmra.mxu0 %v702
        %v1921 = vpop.f32.mrf.mxu0
        %v1922 = vadd.f32 %v1909, %v1921
        %v1923 = vpop.f32.mrf.mxu0
        %1924 = vdwg.mxu0
        %1925 = vmatpush.bf16.msra.mxu0 %v1375
        %1926 = vmatpush.bf16.msra.mxu0 %v1363
        %1927 = vmatpush.bf16.msra.mxu0 %v1351
        %1928 = vmatpush.bf16.msra.mxu0 %v1339
        %1929 = vmatpush.bf16.msra.mxu0 %v1327
        %1930 = vmatpush.bf16.msra.mxu0 %v1315
        %1931 = vmatpush.bf16.msra.mxu0 %v1303
        %1932 = vmatpush.bf16.msra.mxu0 %v1291
        %1933 = vmatmul.bf16.gmra.mxu0 %v701
        %v1934 = vpop.f32.mrf.mxu0
        %v1935 = vadd.f32 0.0, %v1934
        %v1936 = vpop.f32.mrf.mxu0
        %1937 = vdwg.mxu0
        %1938 = vmatpush.bf16.msra.mxu0 %v1471
        %1939 = vmatpush.bf16.msra.mxu0 %v1459
        %1940 = vmatpush.bf16.msra.mxu0 %v1447
        %1941 = vmatpush.bf16.msra.mxu0 %v1435
        %1942 = vmatpush.bf16.msra.mxu0 %v1423
        %1943 = vmatpush.bf16.msra.mxu0 %v1411
        %1944 = vmatpush.bf16.msra.mxu0 %v1399
        %1945 = vmatpush.bf16.msra.mxu0 %v1387
        %1946 = vmatmul.bf16.gmra.mxu0 %v702
        %v1947 = vpop.f32.mrf.mxu0
        %v1948 = vadd.f32 %v1935, %v1947
        %v1949 = vpop.f32.mrf.mxu0
        %1950 = vdwg.mxu0
        %1951 = vmatpush.bf16.msra.mxu0 %v1376
        %1952 = vmatpush.bf16.msra.mxu0 %v1364
        %1953 = vmatpush.bf16.msra.mxu0 %v1352
        %1954 = vmatpush.bf16.msra.mxu0 %v1340
        %1955 = vmatpush.bf16.msra.mxu0 %v1328
        %1956 = vmatpush.bf16.msra.mxu0 %v1316
        %1957 = vmatpush.bf16.msra.mxu0 %v1304
        %1958 = vmatpush.bf16.msra.mxu0 %v1292
        %1959 = vmatmul.bf16.gmra.mxu0 %v701
        %v1960 = vpop.f32.mrf.mxu0
        %v1961 = vadd.f32 0.0, %v1960
        %v1962 = vpop.f32.mrf.mxu0
        %1963 = vdwg.mxu0
        %1964 = vmatpush.bf16.msra.mxu0 %v1472
        %1965 = vmatpush.bf16.msra.mxu0 %v1460
        %1966 = vmatpush.bf16.msra.mxu0 %v1448
        %1967 = vmatpush.bf16.msra.mxu0 %v1436
        %1968 = vmatpush.bf16.msra.mxu0 %v1424
        %1969 = vmatpush.bf16.msra.mxu0 %v1412
        %1970 = vmatpush.bf16.msra.mxu0 %v1400
        %1971 = vmatpush.bf16.msra.mxu0 %v1388
        %1972 = vmatmul.bf16.gmra.mxu0 %v702
        %v1973 = vpop.f32.mrf.mxu0
        %v1974 = vadd.f32 %v1961, %v1973
        %v1975 = vpop.f32.mrf.mxu0
        %1976 = vdwg.mxu0
        %v1977 = vld [vmem:[%s404] sm:$0xff]
        %v1978 = vld [vmem:[%s404 + $0x8] sm:$0xf]
        %v1981 = vperm.slane %v1977, 0
        %v1982 = vperm.slane %v1977, 1
        %v1983 = vperm.slane %v1977, 2
        %v1984 = vperm.slane %v1977, 3
        %v1985 = vperm.slane %v1977, 4
        %v1986 = vperm.slane %v1977, 5
        %v1987 = vperm.slane %v1977, 6
        %v1988 = vperm.slane %v1977, 7
        %v1989 = vperm.slane %v1978, 0
        %v1990 = vperm.slane %v1978, 1
        %v1991 = vperm.slane %v1978, 2
        %v1992 = vperm.slane %v1978, 3
        %v2005 = vmul.f32 %v1981, %v1688
        %v2006 = vmul.f32 %v1982, %v1714
        %v2007 = vmul.f32 %v1983, %v1740
        %v2008 = vmul.f32 %v1984, %v1766
        %v2009 = vmul.f32 %v1985, %v1792
        %v2010 = vmul.f32 %v1986, %v1818
        %v2011 = vmul.f32 %v1987, %v1844
        %v2012 = vmul.f32 %v1988, %v1870
        %v2013 = vmul.f32 %v1989, %v1896
        %v2014 = vmul.f32 %v1990, %v1922
        %v2015 = vmul.f32 %v1991, %v1948
        %v2016 = vmul.f32 %v1992, %v1974
        %v2017 = vld [vmem:[%s414] sm:$0xff]
        %v2018 = vld [vmem:[%s414 + $0x8] sm:$0xf]
        %v2021 = vperm.slane %v2017, 0
        %v2022 = vperm.slane %v2017, 1
        %v2023 = vperm.slane %v2017, 2
        %v2024 = vperm.slane %v2017, 3
        %v2025 = vperm.slane %v2017, 4
        %v2026 = vperm.slane %v2017, 5
        %v2027 = vperm.slane %v2017, 6
        %v2028 = vperm.slane %v2017, 7
        %v2029 = vperm.slane %v2018, 0
        %v2030 = vperm.slane %v2018, 1
        %v2031 = vperm.slane %v2018, 2
        %v2032 = vperm.slane %v2018, 3
        %v2045 = vadd.f32 %v2005, %v2021
        %v2046 = vadd.f32 %v2006, %v2022
        %v2047 = vadd.f32 %v2007, %v2023
        %v2048 = vadd.f32 %v2008, %v2024
        %v2049 = vadd.f32 %v2009, %v2025
        %v2050 = vadd.f32 %v2010, %v2026
        %v2051 = vadd.f32 %v2011, %v2027
        %v2052 = vadd.f32 %v2012, %v2028
        %v2053 = vadd.f32 %v2013, %v2029
        %v2054 = vadd.f32 %v2014, %v2030
        %v2055 = vadd.f32 %v2015, %v2031
        %v2056 = vadd.f32 %v2016, %v2032
        %v2057 = vmax.f32 %v2045, 0.0
        %v2058 = vmax.f32 %v2046, 0.0
        %v2059 = vmax.f32 %v2047, 0.0
        %v2060 = vmax.f32 %v2048, 0.0
        %v2061 = vmax.f32 %v2049, 0.0
        %v2062 = vmax.f32 %v2050, 0.0
        %v2063 = vmax.f32 %v2051, 0.0
        %v2064 = vmax.f32 %v2052, 0.0
        %v2065 = vmax.f32 %v2053, 0.0
        %v2066 = vmax.f32 %v2054, 0.0
        %v2067 = vmax.f32 %v2055, 0.0
        %v2068 = vmax.f32 %v2056, 0.0
        %v2069 = vpack.c.bf16 %v2057, %v2057
        %v2070 = vpack.c.bf16 %v2058, %v2058
        %v2071 = vpack.c.bf16 %v2059, %v2059
        %v2072 = vpack.c.bf16 %v2060, %v2060
        %v2073 = vpack.c.bf16 %v2061, %v2061
        %v2074 = vpack.c.bf16 %v2062, %v2062
        %v2075 = vpack.c.bf16 %v2063, %v2063
        %v2076 = vpack.c.bf16 %v2064, %v2064
        %v2077 = vpack.c.bf16 %v2065, %v2065
        %v2078 = vpack.c.bf16 %v2066, %v2066
        %v2079 = vpack.c.bf16 %v2067, %v2067
        %v2080 = vpack.c.bf16 %v2068, %v2068
        %v2081 = vld [vmem:[#allocation14] sm:$0xff]
        %v2082 = vld [vmem:[#allocation14 + $0x8] sm:$0xff]
        %v2083 = vld [vmem:[#allocation14 + $0x10] sm:$0xff]
        %v2084 = vld [vmem:[#allocation14 + $0x18] sm:$0xff]
        %v2085 = vld [vmem:[#allocation14 + $0x20] sm:$0xff]
        %v2086 = vld [vmem:[#allocation14 + $0x28] sm:$0xff]
        %v2087 = vld [vmem:[#allocation14 + $0x30] sm:$0xff]
        %v2088 = vld [vmem:[#allocation14 + $0x38] sm:$0xff]
        %v2089 = vld [vmem:[#allocation14 + $0x40] sm:$0xff]
        %v2090 = vld [vmem:[#allocation14 + $0x48] sm:$0xff]
        %v2091 = vld [vmem:[#allocation14 + $0x50] sm:$0xff]
        %v2092 = vld [vmem:[#allocation14 + $0x58] sm:$0xff]
        %v2093 = vld [vmem:[#allocation14 + $0x60] sm:$0xff]
        %v2094 = vld [vmem:[#allocation14 + $0x68] sm:$0xff]
        %v2095 = vld [vmem:[#allocation14 + $0x70] sm:$0xff]
        %v2096 = vld [vmem:[#allocation14 + $0x78] sm:$0xff]
        %v2097 = vld [vmem:[#allocation14 + $0x80] sm:$0xff]
        %v2098 = vld [vmem:[#allocation14 + $0x88] sm:$0xff]
        %v2099 = vld [vmem:[#allocation14 + $0x90] sm:$0xff]
        %v2100 = vld [vmem:[#allocation14 + $0x98] sm:$0xff]
        %v2101 = vld [vmem:[#allocation14 + $0xa0] sm:$0xff]
        %v2102 = vld [vmem:[#allocation14 + $0xa8] sm:$0xff]
        %v2103 = vld [vmem:[#allocation14 + $0xb0] sm:$0xff]
        %v2104 = vld [vmem:[#allocation14 + $0xb8] sm:$0xff]
        %v2105 = vld [vmem:[#allocation14 + $0xc0] sm:$0xff]
        %v2106 = vld [vmem:[#allocation14 + $0xc8] sm:$0xff]
        %v2107 = vld [vmem:[#allocation14 + $0xd0] sm:$0xff]
        %v2108 = vld [vmem:[#allocation14 + $0xd8] sm:$0xff]
        %v2109 = vld [vmem:[#allocation14 + $0xe0] sm:$0xff]
        %v2110 = vld [vmem:[#allocation14 + $0xe8] sm:$0xff]
        %v2111 = vld [vmem:[#allocation14 + $0xf0] sm:$0xff]
        %v2112 = vld [vmem:[#allocation14 + $0xf8] sm:$0xff]
        %v2113 = vld [vmem:[#allocation14 + $0x100] sm:$0xff]
        %v2114 = vld [vmem:[#allocation14 + $0x108] sm:$0xff]
        %v2115 = vld [vmem:[#allocation14 + $0x110] sm:$0xff]
        %v2116 = vld [vmem:[#allocation14 + $0x118] sm:$0xff]
        %v2117 = vld [vmem:[#allocation14 + $0x120] sm:$0xff]
        %v2118 = vld [vmem:[#allocation14 + $0x128] sm:$0xff]
        %v2119 = vld [vmem:[#allocation14 + $0x130] sm:$0xff]
        %v2120 = vld [vmem:[#allocation14 + $0x138] sm:$0xff]
        %v2121 = vld [vmem:[#allocation14 + $0x140] sm:$0xff]
        %v2122 = vld [vmem:[#allocation14 + $0x148] sm:$0xff]
        %v2123 = vld [vmem:[#allocation14 + $0x150] sm:$0xff]
        %v2124 = vld [vmem:[#allocation14 + $0x158] sm:$0xff]
        %v2125 = vld [vmem:[#allocation14 + $0x160] sm:$0xff]
        %v2126 = vld [vmem:[#allocation14 + $0x168] sm:$0xff]
        %v2127 = vld [vmem:[#allocation14 + $0x170] sm:$0xff]
        %v2128 = vld [vmem:[#allocation14 + $0x178] sm:$0xff]
        %v2129 = vld [vmem:[#allocation14 + $0x180] sm:$0xff]
        %v2130 = vld [vmem:[#allocation14 + $0x188] sm:$0xff]
        %v2131 = vld [vmem:[#allocation14 + $0x190] sm:$0xff]
        %v2132 = vld [vmem:[#allocation14 + $0x198] sm:$0xff]
        %v2133 = vld [vmem:[#allocation14 + $0x1a0] sm:$0xff]
        %v2134 = vld [vmem:[#allocation14 + $0x1a8] sm:$0xff]
        %v2135 = vld [vmem:[#allocation14 + $0x1b0] sm:$0xff]
        %v2136 = vld [vmem:[#allocation14 + $0x1b8] sm:$0xff]
        %v2137 = vld [vmem:[#allocation14 + $0x1c0] sm:$0xff]
        %v2138 = vld [vmem:[#allocation14 + $0x1c8] sm:$0xff]
        %v2139 = vld [vmem:[#allocation14 + $0x1d0] sm:$0xff]
        %v2140 = vld [vmem:[#allocation14 + $0x1d8] sm:$0xff]
        %v2141 = vld [vmem:[#allocation14 + $0x1e0] sm:$0xff]
        %v2142 = vld [vmem:[#allocation14 + $0x1e8] sm:$0xff]
        %v2143 = vld [vmem:[#allocation14 + $0x1f0] sm:$0xff]
        %v2144 = vld [vmem:[#allocation14 + $0x1f8] sm:$0xff]
        %v2145 = vld [vmem:[#allocation14 + $0x200] sm:$0xff]
        %v2146 = vld [vmem:[#allocation14 + $0x208] sm:$0xff]
        %v2147 = vld [vmem:[#allocation14 + $0x210] sm:$0xff]
        %v2148 = vld [vmem:[#allocation14 + $0x218] sm:$0xff]
        %v2149 = vld [vmem:[#allocation14 + $0x220] sm:$0xff]
        %v2150 = vld [vmem:[#allocation14 + $0x228] sm:$0xff]
        %v2151 = vld [vmem:[#allocation14 + $0x230] sm:$0xff]
        %v2152 = vld [vmem:[#allocation14 + $0x238] sm:$0xff]
        %v2153 = vld [vmem:[#allocation14 + $0x240] sm:$0xff]
        %v2154 = vld [vmem:[#allocation14 + $0x248] sm:$0xff]
        %v2155 = vld [vmem:[#allocation14 + $0x250] sm:$0xff]
        %v2156 = vld [vmem:[#allocation14 + $0x258] sm:$0xff]
        %v2157 = vld [vmem:[#allocation14 + $0x260] sm:$0xff]
        %v2158 = vld [vmem:[#allocation14 + $0x268] sm:$0xff]
        %v2159 = vld [vmem:[#allocation14 + $0x270] sm:$0xff]
        %v2160 = vld [vmem:[#allocation14 + $0x278] sm:$0xff]
        %v2161 = vld [vmem:[#allocation14 + $0x280] sm:$0xff]
        %v2162 = vld [vmem:[#allocation14 + $0x288] sm:$0xff]
        %v2163 = vld [vmem:[#allocation14 + $0x290] sm:$0xff]
        %v2164 = vld [vmem:[#allocation14 + $0x298] sm:$0xff]
        %v2165 = vld [vmem:[#allocation14 + $0x2a0] sm:$0xff]
        %v2166 = vld [vmem:[#allocation14 + $0x2a8] sm:$0xff]
        %v2167 = vld [vmem:[#allocation14 + $0x2b0] sm:$0xff]
        %v2168 = vld [vmem:[#allocation14 + $0x2b8] sm:$0xff]
        %v2169 = vld [vmem:[#allocation14 + $0x2c0] sm:$0xff]
        %v2170 = vld [vmem:[#allocation14 + $0x2c8] sm:$0xff]
        %v2171 = vld [vmem:[#allocation14 + $0x2d0] sm:$0xff]
        %v2172 = vld [vmem:[#allocation14 + $0x2d8] sm:$0xff]
        %v2173 = vld [vmem:[#allocation14 + $0x2e0] sm:$0xff]
        %v2174 = vld [vmem:[#allocation14 + $0x2e8] sm:$0xff]
        %v2175 = vld [vmem:[#allocation14 + $0x2f0] sm:$0xff]
        %v2176 = vld [vmem:[#allocation14 + $0x2f8] sm:$0xff]
        %v2177 = vld [vmem:[#allocation14 + $0x300] sm:$0xff]
        %v2178 = vld [vmem:[#allocation14 + $0x308] sm:$0xff]
        %v2179 = vld [vmem:[#allocation14 + $0x310] sm:$0xff]
        %v2180 = vld [vmem:[#allocation14 + $0x318] sm:$0xff]
        %v2181 = vld [vmem:[#allocation14 + $0x320] sm:$0xff]
        %v2182 = vld [vmem:[#allocation14 + $0x328] sm:$0xff]
        %v2183 = vld [vmem:[#allocation14 + $0x330] sm:$0xff]
        %v2184 = vld [vmem:[#allocation14 + $0x338] sm:$0xff]
        %v2185 = vld [vmem:[#allocation14 + $0x340] sm:$0xff]
        %v2186 = vld [vmem:[#allocation14 + $0x348] sm:$0xff]
        %v2187 = vld [vmem:[#allocation14 + $0x350] sm:$0xff]
        %v2188 = vld [vmem:[#allocation14 + $0x358] sm:$0xff]
        %v2189 = vld [vmem:[#allocation14 + $0x360] sm:$0xff]
        %v2190 = vld [vmem:[#allocation14 + $0x368] sm:$0xff]
        %v2191 = vld [vmem:[#allocation14 + $0x370] sm:$0xff]
        %v2192 = vld [vmem:[#allocation14 + $0x378] sm:$0xff]
        %v2193 = vld [vmem:[#allocation14 + $0x380] sm:$0xff]
        %v2194 = vld [vmem:[#allocation14 + $0x388] sm:$0xff]
        %v2195 = vld [vmem:[#allocation14 + $0x390] sm:$0xff]
        %v2196 = vld [vmem:[#allocation14 + $0x398] sm:$0xff]
        %v2197 = vld [vmem:[#allocation14 + $0x3a0] sm:$0xff]
        %v2198 = vld [vmem:[#allocation14 + $0x3a8] sm:$0xff]
        %v2199 = vld [vmem:[#allocation14 + $0x3b0] sm:$0xff]
        %v2200 = vld [vmem:[#allocation14 + $0x3b8] sm:$0xff]
        %v2201 = vld [vmem:[#allocation14 + $0x3c0] sm:$0xff]
        %v2202 = vld [vmem:[#allocation14 + $0x3c8] sm:$0xff]
        %v2203 = vld [vmem:[#allocation14 + $0x3d0] sm:$0xff]
        %v2204 = vld [vmem:[#allocation14 + $0x3d8] sm:$0xff]
        %v2205 = vld [vmem:[#allocation14 + $0x3e0] sm:$0xff]
        %v2206 = vld [vmem:[#allocation14 + $0x3e8] sm:$0xff]
        %v2207 = vld [vmem:[#allocation14 + $0x3f0] sm:$0xff]
        %v2208 = vld [vmem:[#allocation14 + $0x3f8] sm:$0xff]
        %v2209 = vld [vmem:[#allocation14 + $0x400] sm:$0xff]
        %v2210 = vld [vmem:[#allocation14 + $0x408] sm:$0xff]
        %v2211 = vld [vmem:[#allocation14 + $0x410] sm:$0xff]
        %v2212 = vld [vmem:[#allocation14 + $0x418] sm:$0xff]
        %v2213 = vld [vmem:[#allocation14 + $0x420] sm:$0xff]
        %v2214 = vld [vmem:[#allocation14 + $0x428] sm:$0xff]
        %v2215 = vld [vmem:[#allocation14 + $0x430] sm:$0xff]
        %v2216 = vld [vmem:[#allocation14 + $0x438] sm:$0xff]
        %v2217 = vld [vmem:[#allocation14 + $0x440] sm:$0xff]
        %v2218 = vld [vmem:[#allocation14 + $0x448] sm:$0xff]
        %v2219 = vld [vmem:[#allocation14 + $0x450] sm:$0xff]
        %v2220 = vld [vmem:[#allocation14 + $0x458] sm:$0xff]
        %v2221 = vld [vmem:[#allocation14 + $0x460] sm:$0xff]
        %v2222 = vld [vmem:[#allocation14 + $0x468] sm:$0xff]
        %v2223 = vld [vmem:[#allocation14 + $0x470] sm:$0xff]
        %v2224 = vld [vmem:[#allocation14 + $0x478] sm:$0xff]
        %v2225 = vld [vmem:[#allocation14 + $0x480] sm:$0xff]
        %v2226 = vld [vmem:[#allocation14 + $0x488] sm:$0xff]
        %v2227 = vld [vmem:[#allocation14 + $0x490] sm:$0xff]
        %v2228 = vld [vmem:[#allocation14 + $0x498] sm:$0xff]
        %v2229 = vld [vmem:[#allocation14 + $0x4a0] sm:$0xff]
        %v2230 = vld [vmem:[#allocation14 + $0x4a8] sm:$0xff]
        %v2231 = vld [vmem:[#allocation14 + $0x4b0] sm:$0xff]
        %v2232 = vld [vmem:[#allocation14 + $0x4b8] sm:$0xff]
        %v2233 = vld [vmem:[#allocation14 + $0x4c0] sm:$0xff]
        %v2234 = vld [vmem:[#allocation14 + $0x4c8] sm:$0xff]
        %v2235 = vld [vmem:[#allocation14 + $0x4d0] sm:$0xff]
        %v2236 = vld [vmem:[#allocation14 + $0x4d8] sm:$0xff]
        %v2237 = vld [vmem:[#allocation14 + $0x4e0] sm:$0xff]
        %v2238 = vld [vmem:[#allocation14 + $0x4e8] sm:$0xff]
        %v2239 = vld [vmem:[#allocation14 + $0x4f0] sm:$0xff]
        %v2240 = vld [vmem:[#allocation14 + $0x4f8] sm:$0xff]
        %v2241 = vld [vmem:[#allocation14 + $0x500] sm:$0xff]
        %v2242 = vld [vmem:[#allocation14 + $0x508] sm:$0xff]
        %v2243 = vld [vmem:[#allocation14 + $0x510] sm:$0xff]
        %v2244 = vld [vmem:[#allocation14 + $0x518] sm:$0xff]
        %v2245 = vld [vmem:[#allocation14 + $0x520] sm:$0xff]
        %v2246 = vld [vmem:[#allocation14 + $0x528] sm:$0xff]
        %v2247 = vld [vmem:[#allocation14 + $0x530] sm:$0xff]
        %v2248 = vld [vmem:[#allocation14 + $0x538] sm:$0xff]
        %v2249 = vld [vmem:[#allocation14 + $0x540] sm:$0xff]
        %v2250 = vld [vmem:[#allocation14 + $0x548] sm:$0xff]
        %v2251 = vld [vmem:[#allocation14 + $0x550] sm:$0xff]
        %v2252 = vld [vmem:[#allocation14 + $0x558] sm:$0xff]
        %v2253 = vld [vmem:[#allocation14 + $0x560] sm:$0xff]
        %v2254 = vld [vmem:[#allocation14 + $0x568] sm:$0xff]
        %v2255 = vld [vmem:[#allocation14 + $0x570] sm:$0xff]
        %v2256 = vld [vmem:[#allocation14 + $0x578] sm:$0xff]
        %v2257 = vld [vmem:[#allocation14 + $0x580] sm:$0xff]
        %v2258 = vld [vmem:[#allocation14 + $0x588] sm:$0xff]
        %v2259 = vld [vmem:[#allocation14 + $0x590] sm:$0xff]
        %v2260 = vld [vmem:[#allocation14 + $0x598] sm:$0xff]
        %v2261 = vld [vmem:[#allocation14 + $0x5a0] sm:$0xff]
        %v2262 = vld [vmem:[#allocation14 + $0x5a8] sm:$0xff]
        %v2263 = vld [vmem:[#allocation14 + $0x5b0] sm:$0xff]
        %v2264 = vld [vmem:[#allocation14 + $0x5b8] sm:$0xff]
        %v2265 = vld [vmem:[#allocation14 + $0x5c0] sm:$0xff]
        %v2266 = vld [vmem:[#allocation14 + $0x5c8] sm:$0xff]
        %v2267 = vld [vmem:[#allocation14 + $0x5d0] sm:$0xff]
        %v2268 = vld [vmem:[#allocation14 + $0x5d8] sm:$0xff]
        %v2269 = vld [vmem:[#allocation14 + $0x5e0] sm:$0xff]
        %v2270 = vld [vmem:[#allocation14 + $0x5e8] sm:$0xff]
        %v2271 = vld [vmem:[#allocation14 + $0x5f0] sm:$0xff]
        %v2272 = vld [vmem:[#allocation14 + $0x5f8] sm:$0xff]
        %v2273 = vld [vmem:[#allocation14 + $0x600] sm:$0xff]
        %v2274 = vld [vmem:[#allocation14 + $0x608] sm:$0xff]
        %v2275 = vld [vmem:[#allocation14 + $0x610] sm:$0xff]
        %v2276 = vld [vmem:[#allocation14 + $0x618] sm:$0xff]
        %v2277 = vld [vmem:[#allocation14 + $0x620] sm:$0xff]
        %v2278 = vld [vmem:[#allocation14 + $0x628] sm:$0xff]
        %v2279 = vld [vmem:[#allocation14 + $0x630] sm:$0xff]
        %v2280 = vld [vmem:[#allocation14 + $0x638] sm:$0xff]
        %v2281 = vld [vmem:[#allocation14 + $0x640] sm:$0xff]
        %v2282 = vld [vmem:[#allocation14 + $0x648] sm:$0xff]
        %v2283 = vld [vmem:[#allocation14 + $0x650] sm:$0xff]
        %v2284 = vld [vmem:[#allocation14 + $0x658] sm:$0xff]
        %v2285 = vld [vmem:[#allocation14 + $0x660] sm:$0xff]
        %v2286 = vld [vmem:[#allocation14 + $0x668] sm:$0xff]
        %v2287 = vld [vmem:[#allocation14 + $0x670] sm:$0xff]
        %v2288 = vld [vmem:[#allocation14 + $0x678] sm:$0xff]
        %v2289 = vld [vmem:[#allocation14 + $0x680] sm:$0xff]
        %v2290 = vld [vmem:[#allocation14 + $0x688] sm:$0xff]
        %v2291 = vld [vmem:[#allocation14 + $0x690] sm:$0xff]
        %v2292 = vld [vmem:[#allocation14 + $0x698] sm:$0xff]
        %v2293 = vld [vmem:[#allocation14 + $0x6a0] sm:$0xff]
        %v2294 = vld [vmem:[#allocation14 + $0x6a8] sm:$0xff]
        %v2295 = vld [vmem:[#allocation14 + $0x6b0] sm:$0xff]
        %v2296 = vld [vmem:[#allocation14 + $0x6b8] sm:$0xff]
        %v2297 = vld [vmem:[#allocation14 + $0x6c0] sm:$0xff]
        %v2298 = vld [vmem:[#allocation14 + $0x6c8] sm:$0xff]
        %v2299 = vld [vmem:[#allocation14 + $0x6d0] sm:$0xff]
        %v2300 = vld [vmem:[#allocation14 + $0x6d8] sm:$0xff]
        %v2301 = vld [vmem:[#allocation14 + $0x6e0] sm:$0xff]
        %v2302 = vld [vmem:[#allocation14 + $0x6e8] sm:$0xff]
        %v2303 = vld [vmem:[#allocation14 + $0x6f0] sm:$0xff]
        %v2304 = vld [vmem:[#allocation14 + $0x6f8] sm:$0xff]
        %v2305 = vld [vmem:[#allocation14 + $0x700] sm:$0xff]
        %v2306 = vld [vmem:[#allocation14 + $0x708] sm:$0xff]
        %v2307 = vld [vmem:[#allocation14 + $0x710] sm:$0xff]
        %v2308 = vld [vmem:[#allocation14 + $0x718] sm:$0xff]
        %v2309 = vld [vmem:[#allocation14 + $0x720] sm:$0xff]
        %v2310 = vld [vmem:[#allocation14 + $0x728] sm:$0xff]
        %v2311 = vld [vmem:[#allocation14 + $0x730] sm:$0xff]
        %v2312 = vld [vmem:[#allocation14 + $0x738] sm:$0xff]
        %v2313 = vld [vmem:[#allocation14 + $0x740] sm:$0xff]
        %v2314 = vld [vmem:[#allocation14 + $0x748] sm:$0xff]
        %v2315 = vld [vmem:[#allocation14 + $0x750] sm:$0xff]
        %v2316 = vld [vmem:[#allocation14 + $0x758] sm:$0xff]
        %v2317 = vld [vmem:[#allocation14 + $0x760] sm:$0xff]
        %v2318 = vld [vmem:[#allocation14 + $0x768] sm:$0xff]
        %v2319 = vld [vmem:[#allocation14 + $0x770] sm:$0xff]
        %v2320 = vld [vmem:[#allocation14 + $0x778] sm:$0xff]
        %v2321 = vld [vmem:[#allocation14 + $0x780] sm:$0xff]
        %v2322 = vld [vmem:[#allocation14 + $0x788] sm:$0xff]
        %v2323 = vld [vmem:[#allocation14 + $0x790] sm:$0xff]
        %v2324 = vld [vmem:[#allocation14 + $0x798] sm:$0xff]
        %v2325 = vld [vmem:[#allocation14 + $0x7a0] sm:$0xff]
        %v2326 = vld [vmem:[#allocation14 + $0x7a8] sm:$0xff]
        %v2327 = vld [vmem:[#allocation14 + $0x7b0] sm:$0xff]
        %v2328 = vld [vmem:[#allocation14 + $0x7b8] sm:$0xff]
        %v2329 = vld [vmem:[#allocation14 + $0x7c0] sm:$0xff]
        %v2330 = vld [vmem:[#allocation14 + $0x7c8] sm:$0xff]
        %v2331 = vld [vmem:[#allocation14 + $0x7d0] sm:$0xff]
        %v2332 = vld [vmem:[#allocation14 + $0x7d8] sm:$0xff]
        %v2333 = vld [vmem:[#allocation14 + $0x7e0] sm:$0xff]
        %v2334 = vld [vmem:[#allocation14 + $0x7e8] sm:$0xff]
        %v2335 = vld [vmem:[#allocation14 + $0x7f0] sm:$0xff]
        %v2336 = vld [vmem:[#allocation14 + $0x7f8] sm:$0xff]
        %v2337 = vld [vmem:[#allocation14 + $0x800] sm:$0xff]
        %v2338 = vld [vmem:[#allocation14 + $0x808] sm:$0xff]
        %v2339 = vld [vmem:[#allocation14 + $0x810] sm:$0xff]
        %v2340 = vld [vmem:[#allocation14 + $0x818] sm:$0xff]
        %v2341 = vld [vmem:[#allocation14 + $0x820] sm:$0xff]
        %v2342 = vld [vmem:[#allocation14 + $0x828] sm:$0xff]
        %v2343 = vld [vmem:[#allocation14 + $0x830] sm:$0xff]
        %v2344 = vld [vmem:[#allocation14 + $0x838] sm:$0xff]
        %v2345 = vld [vmem:[#allocation14 + $0x840] sm:$0xff]
        %v2346 = vld [vmem:[#allocation14 + $0x848] sm:$0xff]
        %v2347 = vld [vmem:[#allocation14 + $0x850] sm:$0xff]
        %v2348 = vld [vmem:[#allocation14 + $0x858] sm:$0xff]
        %v2349 = vld [vmem:[#allocation14 + $0x860] sm:$0xff]
        %v2350 = vld [vmem:[#allocation14 + $0x868] sm:$0xff]
        %v2351 = vld [vmem:[#allocation14 + $0x870] sm:$0xff]
        %v2352 = vld [vmem:[#allocation14 + $0x878] sm:$0xff]
        %v2353 = vld [vmem:[#allocation14 + $0x880] sm:$0xff]
        %v2354 = vld [vmem:[#allocation14 + $0x888] sm:$0xff]
        %v2355 = vld [vmem:[#allocation14 + $0x890] sm:$0xff]
        %v2356 = vld [vmem:[#allocation14 + $0x898] sm:$0xff]
        %v2357 = vld [vmem:[#allocation14 + $0x8a0] sm:$0xff]
        %v2358 = vld [vmem:[#allocation14 + $0x8a8] sm:$0xff]
        %v2359 = vld [vmem:[#allocation14 + $0x8b0] sm:$0xff]
        %v2360 = vld [vmem:[#allocation14 + $0x8b8] sm:$0xff]
        %v2361 = vld [vmem:[#allocation14 + $0x8c0] sm:$0xff]
        %v2362 = vld [vmem:[#allocation14 + $0x8c8] sm:$0xff]
        %v2363 = vld [vmem:[#allocation14 + $0x8d0] sm:$0xff]
        %v2364 = vld [vmem:[#allocation14 + $0x8d8] sm:$0xff]
        %v2365 = vld [vmem:[#allocation14 + $0x8e0] sm:$0xff]
        %v2366 = vld [vmem:[#allocation14 + $0x8e8] sm:$0xff]
        %v2367 = vld [vmem:[#allocation14 + $0x8f0] sm:$0xff]
        %v2368 = vld [vmem:[#allocation14 + $0x8f8] sm:$0xff]
        %v2369 = vld [vmem:[#allocation14 + $0x900] sm:$0xff]
        %v2370 = vld [vmem:[#allocation14 + $0x908] sm:$0xff]
        %v2371 = vld [vmem:[#allocation14 + $0x910] sm:$0xff]
        %v2372 = vld [vmem:[#allocation14 + $0x918] sm:$0xff]
        %v2373 = vld [vmem:[#allocation14 + $0x920] sm:$0xff]
        %v2374 = vld [vmem:[#allocation14 + $0x928] sm:$0xff]
        %v2375 = vld [vmem:[#allocation14 + $0x930] sm:$0xff]
        %v2376 = vld [vmem:[#allocation14 + $0x938] sm:$0xff]
        %v2377 = vld [vmem:[#allocation14 + $0x940] sm:$0xff]
        %v2378 = vld [vmem:[#allocation14 + $0x948] sm:$0xff]
        %v2379 = vld [vmem:[#allocation14 + $0x950] sm:$0xff]
        %v2380 = vld [vmem:[#allocation14 + $0x958] sm:$0xff]
        %v2381 = vld [vmem:[#allocation14 + $0x960] sm:$0xff]
        %v2382 = vld [vmem:[#allocation14 + $0x968] sm:$0xff]
        %v2383 = vld [vmem:[#allocation14 + $0x970] sm:$0xff]
        %v2384 = vld [vmem:[#allocation14 + $0x978] sm:$0xff]
        %v2385 = vld [vmem:[#allocation14 + $0x980] sm:$0xff]
        %v2386 = vld [vmem:[#allocation14 + $0x988] sm:$0xff]
        %v2387 = vld [vmem:[#allocation14 + $0x990] sm:$0xff]
        %v2388 = vld [vmem:[#allocation14 + $0x998] sm:$0xff]
        %v2389 = vld [vmem:[#allocation14 + $0x9a0] sm:$0xff]
        %v2390 = vld [vmem:[#allocation14 + $0x9a8] sm:$0xff]
        %v2391 = vld [vmem:[#allocation14 + $0x9b0] sm:$0xff]
        %v2392 = vld [vmem:[#allocation14 + $0x9b8] sm:$0xff]
        %v2393 = vld [vmem:[#allocation14 + $0x9c0] sm:$0xff]
        %v2394 = vld [vmem:[#allocation14 + $0x9c8] sm:$0xff]
        %v2395 = vld [vmem:[#allocation14 + $0x9d0] sm:$0xff]
        %v2396 = vld [vmem:[#allocation14 + $0x9d8] sm:$0xff]
        %v2397 = vld [vmem:[#allocation14 + $0x9e0] sm:$0xff]
        %v2398 = vld [vmem:[#allocation14 + $0x9e8] sm:$0xff]
        %v2399 = vld [vmem:[#allocation14 + $0x9f0] sm:$0xff]
        %v2400 = vld [vmem:[#allocation14 + $0x9f8] sm:$0xff]
        %v2401 = vld [vmem:[#allocation14 + $0xa00] sm:$0xff]
        %v2402 = vld [vmem:[#allocation14 + $0xa08] sm:$0xff]
        %v2403 = vld [vmem:[#allocation14 + $0xa10] sm:$0xff]
        %v2404 = vld [vmem:[#allocation14 + $0xa18] sm:$0xff]
        %v2405 = vld [vmem:[#allocation14 + $0xa20] sm:$0xff]
        %v2406 = vld [vmem:[#allocation14 + $0xa28] sm:$0xff]
        %v2407 = vld [vmem:[#allocation14 + $0xa30] sm:$0xff]
        %v2408 = vld [vmem:[#allocation14 + $0xa38] sm:$0xff]
        %v2409 = vld [vmem:[#allocation14 + $0xa40] sm:$0xff]
        %v2410 = vld [vmem:[#allocation14 + $0xa48] sm:$0xff]
        %v2411 = vld [vmem:[#allocation14 + $0xa50] sm:$0xff]
        %v2412 = vld [vmem:[#allocation14 + $0xa58] sm:$0xff]
        %v2413 = vld [vmem:[#allocation14 + $0xa60] sm:$0xff]
        %v2414 = vld [vmem:[#allocation14 + $0xa68] sm:$0xff]
        %v2415 = vld [vmem:[#allocation14 + $0xa70] sm:$0xff]
        %v2416 = vld [vmem:[#allocation14 + $0xa78] sm:$0xff]
        %v2417 = vld [vmem:[#allocation14 + $0xa80] sm:$0xff]
        %v2418 = vld [vmem:[#allocation14 + $0xa88] sm:$0xff]
        %v2419 = vld [vmem:[#allocation14 + $0xa90] sm:$0xff]
        %v2420 = vld [vmem:[#allocation14 + $0xa98] sm:$0xff]
        %v2421 = vld [vmem:[#allocation14 + $0xaa0] sm:$0xff]
        %v2422 = vld [vmem:[#allocation14 + $0xaa8] sm:$0xff]
        %v2423 = vld [vmem:[#allocation14 + $0xab0] sm:$0xff]
        %v2424 = vld [vmem:[#allocation14 + $0xab8] sm:$0xff]
        %v2425 = vld [vmem:[#allocation14 + $0xac0] sm:$0xff]
        %v2426 = vld [vmem:[#allocation14 + $0xac8] sm:$0xff]
        %v2427 = vld [vmem:[#allocation14 + $0xad0] sm:$0xff]
        %v2428 = vld [vmem:[#allocation14 + $0xad8] sm:$0xff]
        %v2429 = vld [vmem:[#allocation14 + $0xae0] sm:$0xff]
        %v2430 = vld [vmem:[#allocation14 + $0xae8] sm:$0xff]
        %v2431 = vld [vmem:[#allocation14 + $0xaf0] sm:$0xff]
        %v2432 = vld [vmem:[#allocation14 + $0xaf8] sm:$0xff]
        %v2433 = vld [vmem:[#allocation14 + $0xb00] sm:$0xff]
        %v2434 = vld [vmem:[#allocation14 + $0xb08] sm:$0xff]
        %v2435 = vld [vmem:[#allocation14 + $0xb10] sm:$0xff]
        %v2436 = vld [vmem:[#allocation14 + $0xb18] sm:$0xff]
        %v2437 = vld [vmem:[#allocation14 + $0xb20] sm:$0xff]
        %v2438 = vld [vmem:[#allocation14 + $0xb28] sm:$0xff]
        %v2439 = vld [vmem:[#allocation14 + $0xb30] sm:$0xff]
        %v2440 = vld [vmem:[#allocation14 + $0xb38] sm:$0xff]
        %v2441 = vld [vmem:[#allocation14 + $0xb40] sm:$0xff]
        %v2442 = vld [vmem:[#allocation14 + $0xb48] sm:$0xff]
        %v2443 = vld [vmem:[#allocation14 + $0xb50] sm:$0xff]
        %v2444 = vld [vmem:[#allocation14 + $0xb58] sm:$0xff]
        %v2445 = vld [vmem:[#allocation14 + $0xb60] sm:$0xff]
        %v2446 = vld [vmem:[#allocation14 + $0xb68] sm:$0xff]
        %v2447 = vld [vmem:[#allocation14 + $0xb70] sm:$0xff]
        %v2448 = vld [vmem:[#allocation14 + $0xb78] sm:$0xff]
        %v2449 = vld [vmem:[#allocation14 + $0xb80] sm:$0xff]
        %v2450 = vld [vmem:[#allocation14 + $0xb88] sm:$0xff]
        %v2451 = vld [vmem:[#allocation14 + $0xb90] sm:$0xff]
        %v2452 = vld [vmem:[#allocation14 + $0xb98] sm:$0xff]
        %v2453 = vld [vmem:[#allocation14 + $0xba0] sm:$0xff]
        %v2454 = vld [vmem:[#allocation14 + $0xba8] sm:$0xff]
        %v2455 = vld [vmem:[#allocation14 + $0xbb0] sm:$0xff]
        %v2456 = vld [vmem:[#allocation14 + $0xbb8] sm:$0xff]
        %v2457 = vld [vmem:[#allocation14 + $0xbc0] sm:$0xff]
        %v2458 = vld [vmem:[#allocation14 + $0xbc8] sm:$0xff]
        %v2459 = vld [vmem:[#allocation14 + $0xbd0] sm:$0xff]
        %v2460 = vld [vmem:[#allocation14 + $0xbd8] sm:$0xff]
        %v2461 = vld [vmem:[#allocation14 + $0xbe0] sm:$0xff]
        %v2462 = vld [vmem:[#allocation14 + $0xbe8] sm:$0xff]
        %v2463 = vld [vmem:[#allocation14 + $0xbf0] sm:$0xff]
        %v2464 = vld [vmem:[#allocation14 + $0xbf8] sm:$0xff]
        %v2849 = vunpack.c.l.b16 %v2081
        %v2850 = vunpack.c.h.b16 %v2081
        %v2851 = vunpack.c.l.b16 %v2082
        %v2852 = vunpack.c.h.b16 %v2082
        %v2853 = vunpack.c.l.b16 %v2083
        %v2854 = vunpack.c.h.b16 %v2083
        %v2855 = vunpack.c.l.b16 %v2084
        %v2856 = vunpack.c.h.b16 %v2084
        %v2857 = vunpack.c.l.b16 %v2085
        %v2858 = vunpack.c.h.b16 %v2085
        %v2859 = vunpack.c.l.b16 %v2086
        %v2860 = vunpack.c.h.b16 %v2086
        %v2861 = vunpack.c.l.b16 %v2087
        %v2862 = vunpack.c.h.b16 %v2087
        %v2863 = vunpack.c.l.b16 %v2088
        %v2864 = vunpack.c.h.b16 %v2088
        %v2865 = vunpack.c.l.b16 %v2089
        %v2866 = vunpack.c.h.b16 %v2089
        %v2867 = vunpack.c.l.b16 %v2090
        %v2868 = vunpack.c.h.b16 %v2090
        %v2869 = vunpack.c.l.b16 %v2091
        %v2870 = vunpack.c.h.b16 %v2091
        %v2871 = vunpack.c.l.b16 %v2092
        %v2872 = vunpack.c.h.b16 %v2092
        %v2873 = vunpack.c.l.b16 %v2093
        %v2874 = vunpack.c.h.b16 %v2093
        %v2875 = vunpack.c.l.b16 %v2094
        %v2876 = vunpack.c.h.b16 %v2094
        %v2877 = vunpack.c.l.b16 %v2095
        %v2878 = vunpack.c.h.b16 %v2095
        %v2879 = vunpack.c.l.b16 %v2096
        %v2880 = vunpack.c.h.b16 %v2096
        %v2881 = vunpack.c.l.b16 %v2097
        %v2882 = vunpack.c.h.b16 %v2097
        %v2883 = vunpack.c.l.b16 %v2098
        %v2884 = vunpack.c.h.b16 %v2098
        %v2885 = vunpack.c.l.b16 %v2099
        %v2886 = vunpack.c.h.b16 %v2099
        %v2887 = vunpack.c.l.b16 %v2100
        %v2888 = vunpack.c.h.b16 %v2100
        %v2889 = vunpack.c.l.b16 %v2101
        %v2890 = vunpack.c.h.b16 %v2101
        %v2891 = vunpack.c.l.b16 %v2102
        %v2892 = vunpack.c.h.b16 %v2102
        %v2893 = vunpack.c.l.b16 %v2103
        %v2894 = vunpack.c.h.b16 %v2103
        %v2895 = vunpack.c.l.b16 %v2104
        %v2896 = vunpack.c.h.b16 %v2104
        %v2897 = vunpack.c.l.b16 %v2105
        %v2898 = vunpack.c.h.b16 %v2105
        %v2899 = vunpack.c.l.b16 %v2106
        %v2900 = vunpack.c.h.b16 %v2106
        %v2901 = vunpack.c.l.b16 %v2107
        %v2902 = vunpack.c.h.b16 %v2107
        %v2903 = vunpack.c.l.b16 %v2108
        %v2904 = vunpack.c.h.b16 %v2108
        %v2905 = vunpack.c.l.b16 %v2109
        %v2906 = vunpack.c.h.b16 %v2109
        %v2907 = vunpack.c.l.b16 %v2110
        %v2908 = vunpack.c.h.b16 %v2110
        %v2909 = vunpack.c.l.b16 %v2111
        %v2910 = vunpack.c.h.b16 %v2111
        %v2911 = vunpack.c.l.b16 %v2112
        %v2912 = vunpack.c.h.b16 %v2112
        %v2913 = vunpack.c.l.b16 %v2113
        %v2914 = vunpack.c.h.b16 %v2113
        %v2915 = vunpack.c.l.b16 %v2114
        %v2916 = vunpack.c.h.b16 %v2114
        %v2917 = vunpack.c.l.b16 %v2115
        %v2918 = vunpack.c.h.b16 %v2115
        %v2919 = vunpack.c.l.b16 %v2116
        %v2920 = vunpack.c.h.b16 %v2116
        %v2921 = vunpack.c.l.b16 %v2117
        %v2922 = vunpack.c.h.b16 %v2117
        %v2923 = vunpack.c.l.b16 %v2118
        %v2924 = vunpack.c.h.b16 %v2118
        %v2925 = vunpack.c.l.b16 %v2119
        %v2926 = vunpack.c.h.b16 %v2119
        %v2927 = vunpack.c.l.b16 %v2120
        %v2928 = vunpack.c.h.b16 %v2120
        %v2929 = vunpack.c.l.b16 %v2121
        %v2930 = vunpack.c.h.b16 %v2121
        %v2931 = vunpack.c.l.b16 %v2122
        %v2932 = vunpack.c.h.b16 %v2122
        %v2933 = vunpack.c.l.b16 %v2123
        %v2934 = vunpack.c.h.b16 %v2123
        %v2935 = vunpack.c.l.b16 %v2124
        %v2936 = vunpack.c.h.b16 %v2124
        %v2937 = vunpack.c.l.b16 %v2125
        %v2938 = vunpack.c.h.b16 %v2125
        %v2939 = vunpack.c.l.b16 %v2126
        %v2940 = vunpack.c.h.b16 %v2126
        %v2941 = vunpack.c.l.b16 %v2127
        %v2942 = vunpack.c.h.b16 %v2127
        %v2943 = vunpack.c.l.b16 %v2128
        %v2944 = vunpack.c.h.b16 %v2128
        %v2945 = vunpack.c.l.b16 %v2129
        %v2946 = vunpack.c.h.b16 %v2129
        %v2947 = vunpack.c.l.b16 %v2130
        %v2948 = vunpack.c.h.b16 %v2130
        %v2949 = vunpack.c.l.b16 %v2131
        %v2950 = vunpack.c.h.b16 %v2131
        %v2951 = vunpack.c.l.b16 %v2132
        %v2952 = vunpack.c.h.b16 %v2132
        %v2953 = vunpack.c.l.b16 %v2133
        %v2954 = vunpack.c.h.b16 %v2133
        %v2955 = vunpack.c.l.b16 %v2134
        %v2956 = vunpack.c.h.b16 %v2134
        %v2957 = vunpack.c.l.b16 %v2135
        %v2958 = vunpack.c.h.b16 %v2135
        %v2959 = vunpack.c.l.b16 %v2136
        %v2960 = vunpack.c.h.b16 %v2136
        %v2961 = vunpack.c.l.b16 %v2137
        %v2962 = vunpack.c.h.b16 %v2137
        %v2963 = vunpack.c.l.b16 %v2138
        %v2964 = vunpack.c.h.b16 %v2138
        %v2965 = vunpack.c.l.b16 %v2139
        %v2966 = vunpack.c.h.b16 %v2139
        %v2967 = vunpack.c.l.b16 %v2140
        %v2968 = vunpack.c.h.b16 %v2140
        %v2969 = vunpack.c.l.b16 %v2141
        %v2970 = vunpack.c.h.b16 %v2141
        %v2971 = vunpack.c.l.b16 %v2142
        %v2972 = vunpack.c.h.b16 %v2142
        %v2973 = vunpack.c.l.b16 %v2143
        %v2974 = vunpack.c.h.b16 %v2143
        %v2975 = vunpack.c.l.b16 %v2144
        %v2976 = vunpack.c.h.b16 %v2144
        %v2977 = vunpack.c.l.b16 %v2145
        %v2978 = vunpack.c.h.b16 %v2145
        %v2979 = vunpack.c.l.b16 %v2146
        %v2980 = vunpack.c.h.b16 %v2146
        %v2981 = vunpack.c.l.b16 %v2147
        %v2982 = vunpack.c.h.b16 %v2147
        %v2983 = vunpack.c.l.b16 %v2148
        %v2984 = vunpack.c.h.b16 %v2148
        %v2985 = vunpack.c.l.b16 %v2149
        %v2986 = vunpack.c.h.b16 %v2149
        %v2987 = vunpack.c.l.b16 %v2150
        %v2988 = vunpack.c.h.b16 %v2150
        %v2989 = vunpack.c.l.b16 %v2151
        %v2990 = vunpack.c.h.b16 %v2151
        %v2991 = vunpack.c.l.b16 %v2152
        %v2992 = vunpack.c.h.b16 %v2152
        %v2993 = vunpack.c.l.b16 %v2153
        %v2994 = vunpack.c.h.b16 %v2153
        %v2995 = vunpack.c.l.b16 %v2154
        %v2996 = vunpack.c.h.b16 %v2154
        %v2997 = vunpack.c.l.b16 %v2155
        %v2998 = vunpack.c.h.b16 %v2155
        %v2999 = vunpack.c.l.b16 %v2156
        %v3000 = vunpack.c.h.b16 %v2156
        %v3001 = vunpack.c.l.b16 %v2157
        %v3002 = vunpack.c.h.b16 %v2157
        %v3003 = vunpack.c.l.b16 %v2158
        %v3004 = vunpack.c.h.b16 %v2158
        %v3005 = vunpack.c.l.b16 %v2159
        %v3006 = vunpack.c.h.b16 %v2159
        %v3007 = vunpack.c.l.b16 %v2160
        %v3008 = vunpack.c.h.b16 %v2160
        %v3009 = vunpack.c.l.b16 %v2161
        %v3010 = vunpack.c.h.b16 %v2161
        %v3011 = vunpack.c.l.b16 %v2162
        %v3012 = vunpack.c.h.b16 %v2162
        %v3013 = vunpack.c.l.b16 %v2163
        %v3014 = vunpack.c.h.b16 %v2163
        %v3015 = vunpack.c.l.b16 %v2164
        %v3016 = vunpack.c.h.b16 %v2164
        %v3017 = vunpack.c.l.b16 %v2165
        %v3018 = vunpack.c.h.b16 %v2165
        %v3019 = vunpack.c.l.b16 %v2166
        %v3020 = vunpack.c.h.b16 %v2166
        %v3021 = vunpack.c.l.b16 %v2167
        %v3022 = vunpack.c.h.b16 %v2167
        %v3023 = vunpack.c.l.b16 %v2168
        %v3024 = vunpack.c.h.b16 %v2168
        %v3025 = vunpack.c.l.b16 %v2169
        %v3026 = vunpack.c.h.b16 %v2169
        %v3027 = vunpack.c.l.b16 %v2170
        %v3028 = vunpack.c.h.b16 %v2170
        %v3029 = vunpack.c.l.b16 %v2171
        %v3030 = vunpack.c.h.b16 %v2171
        %v3031 = vunpack.c.l.b16 %v2172
        %v3032 = vunpack.c.h.b16 %v2172
        %v3033 = vunpack.c.l.b16 %v2173
        %v3034 = vunpack.c.h.b16 %v2173
        %v3035 = vunpack.c.l.b16 %v2174
        %v3036 = vunpack.c.h.b16 %v2174
        %v3037 = vunpack.c.l.b16 %v2175
        %v3038 = vunpack.c.h.b16 %v2175
        %v3039 = vunpack.c.l.b16 %v2176
        %v3040 = vunpack.c.h.b16 %v2176
        %v3041 = vunpack.c.l.b16 %v2177
        %v3042 = vunpack.c.h.b16 %v2177
        %v3043 = vunpack.c.l.b16 %v2178
        %v3044 = vunpack.c.h.b16 %v2178
        %v3045 = vunpack.c.l.b16 %v2179
        %v3046 = vunpack.c.h.b16 %v2179
        %v3047 = vunpack.c.l.b16 %v2180
        %v3048 = vunpack.c.h.b16 %v2180
        %v3049 = vunpack.c.l.b16 %v2181
        %v3050 = vunpack.c.h.b16 %v2181
        %v3051 = vunpack.c.l.b16 %v2182
        %v3052 = vunpack.c.h.b16 %v2182
        %v3053 = vunpack.c.l.b16 %v2183
        %v3054 = vunpack.c.h.b16 %v2183
        %v3055 = vunpack.c.l.b16 %v2184
        %v3056 = vunpack.c.h.b16 %v2184
        %v3057 = vunpack.c.l.b16 %v2185
        %v3058 = vunpack.c.h.b16 %v2185
        %v3059 = vunpack.c.l.b16 %v2186
        %v3060 = vunpack.c.h.b16 %v2186
        %v3061 = vunpack.c.l.b16 %v2187
        %v3062 = vunpack.c.h.b16 %v2187
        %v3063 = vunpack.c.l.b16 %v2188
        %v3064 = vunpack.c.h.b16 %v2188
        %v3065 = vunpack.c.l.b16 %v2189
        %v3066 = vunpack.c.h.b16 %v2189
        %v3067 = vunpack.c.l.b16 %v2190
        %v3068 = vunpack.c.h.b16 %v2190
        %v3069 = vunpack.c.l.b16 %v2191
        %v3070 = vunpack.c.h.b16 %v2191
        %v3071 = vunpack.c.l.b16 %v2192
        %v3072 = vunpack.c.h.b16 %v2192
        %v3073 = vunpack.c.l.b16 %v2193
        %v3074 = vunpack.c.h.b16 %v2193
        %v3075 = vunpack.c.l.b16 %v2194
        %v3076 = vunpack.c.h.b16 %v2194
        %v3077 = vunpack.c.l.b16 %v2195
        %v3078 = vunpack.c.h.b16 %v2195
        %v3079 = vunpack.c.l.b16 %v2196
        %v3080 = vunpack.c.h.b16 %v2196
        %v3081 = vunpack.c.l.b16 %v2197
        %v3082 = vunpack.c.h.b16 %v2197
        %v3083 = vunpack.c.l.b16 %v2198
        %v3084 = vunpack.c.h.b16 %v2198
        %v3085 = vunpack.c.l.b16 %v2199
        %v3086 = vunpack.c.h.b16 %v2199
        %v3087 = vunpack.c.l.b16 %v2200
        %v3088 = vunpack.c.h.b16 %v2200
        %v3089 = vunpack.c.l.b16 %v2201
        %v3090 = vunpack.c.h.b16 %v2201
        %v3091 = vunpack.c.l.b16 %v2202
        %v3092 = vunpack.c.h.b16 %v2202
        %v3093 = vunpack.c.l.b16 %v2203
        %v3094 = vunpack.c.h.b16 %v2203
        %v3095 = vunpack.c.l.b16 %v2204
        %v3096 = vunpack.c.h.b16 %v2204
        %v3097 = vunpack.c.l.b16 %v2205
        %v3098 = vunpack.c.h.b16 %v2205
        %v3099 = vunpack.c.l.b16 %v2206
        %v3100 = vunpack.c.h.b16 %v2206
        %v3101 = vunpack.c.l.b16 %v2207
        %v3102 = vunpack.c.h.b16 %v2207
        %v3103 = vunpack.c.l.b16 %v2208
        %v3104 = vunpack.c.h.b16 %v2208
        %v3105 = vunpack.c.l.b16 %v2209
        %v3106 = vunpack.c.h.b16 %v2209
        %v3107 = vunpack.c.l.b16 %v2210
        %v3108 = vunpack.c.h.b16 %v2210
        %v3109 = vunpack.c.l.b16 %v2211
        %v3110 = vunpack.c.h.b16 %v2211
        %v3111 = vunpack.c.l.b16 %v2212
        %v3112 = vunpack.c.h.b16 %v2212
        %v3113 = vunpack.c.l.b16 %v2213
        %v3114 = vunpack.c.h.b16 %v2213
        %v3115 = vunpack.c.l.b16 %v2214
        %v3116 = vunpack.c.h.b16 %v2214
        %v3117 = vunpack.c.l.b16 %v2215
        %v3118 = vunpack.c.h.b16 %v2215
        %v3119 = vunpack.c.l.b16 %v2216
        %v3120 = vunpack.c.h.b16 %v2216
        %v3121 = vunpack.c.l.b16 %v2217
        %v3122 = vunpack.c.h.b16 %v2217
        %v3123 = vunpack.c.l.b16 %v2218
        %v3124 = vunpack.c.h.b16 %v2218
        %v3125 = vunpack.c.l.b16 %v2219
        %v3126 = vunpack.c.h.b16 %v2219
        %v3127 = vunpack.c.l.b16 %v2220
        %v3128 = vunpack.c.h.b16 %v2220
        %v3129 = vunpack.c.l.b16 %v2221
        %v3130 = vunpack.c.h.b16 %v2221
        %v3131 = vunpack.c.l.b16 %v2222
        %v3132 = vunpack.c.h.b16 %v2222
        %v3133 = vunpack.c.l.b16 %v2223
        %v3134 = vunpack.c.h.b16 %v2223
        %v3135 = vunpack.c.l.b16 %v2224
        %v3136 = vunpack.c.h.b16 %v2224
        %v3137 = vunpack.c.l.b16 %v2225
        %v3138 = vunpack.c.h.b16 %v2225
        %v3139 = vunpack.c.l.b16 %v2226
        %v3140 = vunpack.c.h.b16 %v2226
        %v3141 = vunpack.c.l.b16 %v2227
        %v3142 = vunpack.c.h.b16 %v2227
        %v3143 = vunpack.c.l.b16 %v2228
        %v3144 = vunpack.c.h.b16 %v2228
        %v3145 = vunpack.c.l.b16 %v2229
        %v3146 = vunpack.c.h.b16 %v2229
        %v3147 = vunpack.c.l.b16 %v2230
        %v3148 = vunpack.c.h.b16 %v2230
        %v3149 = vunpack.c.l.b16 %v2231
        %v3150 = vunpack.c.h.b16 %v2231
        %v3151 = vunpack.c.l.b16 %v2232
        %v3152 = vunpack.c.h.b16 %v2232
        %v3153 = vunpack.c.l.b16 %v2233
        %v3154 = vunpack.c.h.b16 %v2233
        %v3155 = vunpack.c.l.b16 %v2234
        %v3156 = vunpack.c.h.b16 %v2234
        %v3157 = vunpack.c.l.b16 %v2235
        %v3158 = vunpack.c.h.b16 %v2235
        %v3159 = vunpack.c.l.b16 %v2236
        %v3160 = vunpack.c.h.b16 %v2236
        %v3161 = vunpack.c.l.b16 %v2237
        %v3162 = vunpack.c.h.b16 %v2237
        %v3163 = vunpack.c.l.b16 %v2238
        %v3164 = vunpack.c.h.b16 %v2238
        %v3165 = vunpack.c.l.b16 %v2239
        %v3166 = vunpack.c.h.b16 %v2239
        %v3167 = vunpack.c.l.b16 %v2240
        %v3168 = vunpack.c.h.b16 %v2240
        %v3169 = vunpack.c.l.b16 %v2241
        %v3170 = vunpack.c.h.b16 %v2241
        %v3171 = vunpack.c.l.b16 %v2242
        %v3172 = vunpack.c.h.b16 %v2242
        %v3173 = vunpack.c.l.b16 %v2243
        %v3174 = vunpack.c.h.b16 %v2243
        %v3175 = vunpack.c.l.b16 %v2244
        %v3176 = vunpack.c.h.b16 %v2244
        %v3177 = vunpack.c.l.b16 %v2245
        %v3178 = vunpack.c.h.b16 %v2245
        %v3179 = vunpack.c.l.b16 %v2246
        %v3180 = vunpack.c.h.b16 %v2246
        %v3181 = vunpack.c.l.b16 %v2247
        %v3182 = vunpack.c.h.b16 %v2247
        %v3183 = vunpack.c.l.b16 %v2248
        %v3184 = vunpack.c.h.b16 %v2248
        %v3185 = vunpack.c.l.b16 %v2249
        %v3186 = vunpack.c.h.b16 %v2249
        %v3187 = vunpack.c.l.b16 %v2250
        %v3188 = vunpack.c.h.b16 %v2250
        %v3189 = vunpack.c.l.b16 %v2251
        %v3190 = vunpack.c.h.b16 %v2251
        %v3191 = vunpack.c.l.b16 %v2252
        %v3192 = vunpack.c.h.b16 %v2252
        %v3193 = vunpack.c.l.b16 %v2253
        %v3194 = vunpack.c.h.b16 %v2253
        %v3195 = vunpack.c.l.b16 %v2254
        %v3196 = vunpack.c.h.b16 %v2254
        %v3197 = vunpack.c.l.b16 %v2255
        %v3198 = vunpack.c.h.b16 %v2255
        %v3199 = vunpack.c.l.b16 %v2256
        %v3200 = vunpack.c.h.b16 %v2256
        %v3201 = vunpack.c.l.b16 %v2257
        %v3202 = vunpack.c.h.b16 %v2257
        %v3203 = vunpack.c.l.b16 %v2258
        %v3204 = vunpack.c.h.b16 %v2258
        %v3205 = vunpack.c.l.b16 %v2259
        %v3206 = vunpack.c.h.b16 %v2259
        %v3207 = vunpack.c.l.b16 %v2260
        %v3208 = vunpack.c.h.b16 %v2260
        %v3209 = vunpack.c.l.b16 %v2261
        %v3210 = vunpack.c.h.b16 %v2261
        %v3211 = vunpack.c.l.b16 %v2262
        %v3212 = vunpack.c.h.b16 %v2262
        %v3213 = vunpack.c.l.b16 %v2263
        %v3214 = vunpack.c.h.b16 %v2263
        %v3215 = vunpack.c.l.b16 %v2264
        %v3216 = vunpack.c.h.b16 %v2264
        %v3217 = vunpack.c.l.b16 %v2265
        %v3218 = vunpack.c.h.b16 %v2265
        %v3219 = vunpack.c.l.b16 %v2266
        %v3220 = vunpack.c.h.b16 %v2266
        %v3221 = vunpack.c.l.b16 %v2267
        %v3222 = vunpack.c.h.b16 %v2267
        %v3223 = vunpack.c.l.b16 %v2268
        %v3224 = vunpack.c.h.b16 %v2268
        %v3225 = vunpack.c.l.b16 %v2269
        %v3226 = vunpack.c.h.b16 %v2269
        %v3227 = vunpack.c.l.b16 %v2270
        %v3228 = vunpack.c.h.b16 %v2270
        %v3229 = vunpack.c.l.b16 %v2271
        %v3230 = vunpack.c.h.b16 %v2271
        %v3231 = vunpack.c.l.b16 %v2272
        %v3232 = vunpack.c.h.b16 %v2272
        %v3233 = vunpack.c.l.b16 %v2273
        %v3234 = vunpack.c.h.b16 %v2273
        %v3235 = vunpack.c.l.b16 %v2274
        %v3236 = vunpack.c.h.b16 %v2274
        %v3237 = vunpack.c.l.b16 %v2275
        %v3238 = vunpack.c.h.b16 %v2275
        %v3239 = vunpack.c.l.b16 %v2276
        %v3240 = vunpack.c.h.b16 %v2276
        %v3241 = vunpack.c.l.b16 %v2277
        %v3242 = vunpack.c.h.b16 %v2277
        %v3243 = vunpack.c.l.b16 %v2278
        %v3244 = vunpack.c.h.b16 %v2278
        %v3245 = vunpack.c.l.b16 %v2279
        %v3246 = vunpack.c.h.b16 %v2279
        %v3247 = vunpack.c.l.b16 %v2280
        %v3248 = vunpack.c.h.b16 %v2280
        %v3249 = vunpack.c.l.b16 %v2281
        %v3250 = vunpack.c.h.b16 %v2281
        %v3251 = vunpack.c.l.b16 %v2282
        %v3252 = vunpack.c.h.b16 %v2282
        %v3253 = vunpack.c.l.b16 %v2283
        %v3254 = vunpack.c.h.b16 %v2283
        %v3255 = vunpack.c.l.b16 %v2284
        %v3256 = vunpack.c.h.b16 %v2284
        %v3257 = vunpack.c.l.b16 %v2285
        %v3258 = vunpack.c.h.b16 %v2285
        %v3259 = vunpack.c.l.b16 %v2286
        %v3260 = vunpack.c.h.b16 %v2286
        %v3261 = vunpack.c.l.b16 %v2287
        %v3262 = vunpack.c.h.b16 %v2287
        %v3263 = vunpack.c.l.b16 %v2288
        %v3264 = vunpack.c.h.b16 %v2288
        %v3265 = vunpack.c.l.b16 %v2289
        %v3266 = vunpack.c.h.b16 %v2289
        %v3267 = vunpack.c.l.b16 %v2290
        %v3268 = vunpack.c.h.b16 %v2290
        %v3269 = vunpack.c.l.b16 %v2291
        %v3270 = vunpack.c.h.b16 %v2291
        %v3271 = vunpack.c.l.b16 %v2292
        %v3272 = vunpack.c.h.b16 %v2292
        %v3273 = vunpack.c.l.b16 %v2293
        %v3274 = vunpack.c.h.b16 %v2293
        %v3275 = vunpack.c.l.b16 %v2294
        %v3276 = vunpack.c.h.b16 %v2294
        %v3277 = vunpack.c.l.b16 %v2295
        %v3278 = vunpack.c.h.b16 %v2295
        %v3279 = vunpack.c.l.b16 %v2296
        %v3280 = vunpack.c.h.b16 %v2296
        %v3281 = vunpack.c.l.b16 %v2297
        %v3282 = vunpack.c.h.b16 %v2297
        %v3283 = vunpack.c.l.b16 %v2298
        %v3284 = vunpack.c.h.b16 %v2298
        %v3285 = vunpack.c.l.b16 %v2299
        %v3286 = vunpack.c.h.b16 %v2299
        %v3287 = vunpack.c.l.b16 %v2300
        %v3288 = vunpack.c.h.b16 %v2300
        %v3289 = vunpack.c.l.b16 %v2301
        %v3290 = vunpack.c.h.b16 %v2301
        %v3291 = vunpack.c.l.b16 %v2302
        %v3292 = vunpack.c.h.b16 %v2302
        %v3293 = vunpack.c.l.b16 %v2303
        %v3294 = vunpack.c.h.b16 %v2303
        %v3295 = vunpack.c.l.b16 %v2304
        %v3296 = vunpack.c.h.b16 %v2304
        %v3297 = vunpack.c.l.b16 %v2305
        %v3298 = vunpack.c.h.b16 %v2305
        %v3299 = vunpack.c.l.b16 %v2306
        %v3300 = vunpack.c.h.b16 %v2306
        %v3301 = vunpack.c.l.b16 %v2307
        %v3302 = vunpack.c.h.b16 %v2307
        %v3303 = vunpack.c.l.b16 %v2308
        %v3304 = vunpack.c.h.b16 %v2308
        %v3305 = vunpack.c.l.b16 %v2309
        %v3306 = vunpack.c.h.b16 %v2309
        %v3307 = vunpack.c.l.b16 %v2310
        %v3308 = vunpack.c.h.b16 %v2310
        %v3309 = vunpack.c.l.b16 %v2311
        %v3310 = vunpack.c.h.b16 %v2311
        %v3311 = vunpack.c.l.b16 %v2312
        %v3312 = vunpack.c.h.b16 %v2312
        %v3313 = vunpack.c.l.b16 %v2313
        %v3314 = vunpack.c.h.b16 %v2313
        %v3315 = vunpack.c.l.b16 %v2314
        %v3316 = vunpack.c.h.b16 %v2314
        %v3317 = vunpack.c.l.b16 %v2315
        %v3318 = vunpack.c.h.b16 %v2315
        %v3319 = vunpack.c.l.b16 %v2316
        %v3320 = vunpack.c.h.b16 %v2316
        %v3321 = vunpack.c.l.b16 %v2317
        %v3322 = vunpack.c.h.b16 %v2317
        %v3323 = vunpack.c.l.b16 %v2318
        %v3324 = vunpack.c.h.b16 %v2318
        %v3325 = vunpack.c.l.b16 %v2319
        %v3326 = vunpack.c.h.b16 %v2319
        %v3327 = vunpack.c.l.b16 %v2320
        %v3328 = vunpack.c.h.b16 %v2320
        %v3329 = vunpack.c.l.b16 %v2321
        %v3330 = vunpack.c.h.b16 %v2321
        %v3331 = vunpack.c.l.b16 %v2322
        %v3332 = vunpack.c.h.b16 %v2322
        %v3333 = vunpack.c.l.b16 %v2323
        %v3334 = vunpack.c.h.b16 %v2323
        %v3335 = vunpack.c.l.b16 %v2324
        %v3336 = vunpack.c.h.b16 %v2324
        %v3337 = vunpack.c.l.b16 %v2325
        %v3338 = vunpack.c.h.b16 %v2325
        %v3339 = vunpack.c.l.b16 %v2326
        %v3340 = vunpack.c.h.b16 %v2326
        %v3341 = vunpack.c.l.b16 %v2327
        %v3342 = vunpack.c.h.b16 %v2327
        %v3343 = vunpack.c.l.b16 %v2328
        %v3344 = vunpack.c.h.b16 %v2328
        %v3345 = vunpack.c.l.b16 %v2329
        %v3346 = vunpack.c.h.b16 %v2329
        %v3347 = vunpack.c.l.b16 %v2330
        %v3348 = vunpack.c.h.b16 %v2330
        %v3349 = vunpack.c.l.b16 %v2331
        %v3350 = vunpack.c.h.b16 %v2331
        %v3351 = vunpack.c.l.b16 %v2332
        %v3352 = vunpack.c.h.b16 %v2332
        %v3353 = vunpack.c.l.b16 %v2333
        %v3354 = vunpack.c.h.b16 %v2333
        %v3355 = vunpack.c.l.b16 %v2334
        %v3356 = vunpack.c.h.b16 %v2334
        %v3357 = vunpack.c.l.b16 %v2335
        %v3358 = vunpack.c.h.b16 %v2335
        %v3359 = vunpack.c.l.b16 %v2336
        %v3360 = vunpack.c.h.b16 %v2336
        %v3361 = vunpack.c.l.b16 %v2337
        %v3362 = vunpack.c.h.b16 %v2337
        %v3363 = vunpack.c.l.b16 %v2338
        %v3364 = vunpack.c.h.b16 %v2338
        %v3365 = vunpack.c.l.b16 %v2339
        %v3366 = vunpack.c.h.b16 %v2339
        %v3367 = vunpack.c.l.b16 %v2340
        %v3368 = vunpack.c.h.b16 %v2340
        %v3369 = vunpack.c.l.b16 %v2341
        %v3370 = vunpack.c.h.b16 %v2341
        %v3371 = vunpack.c.l.b16 %v2342
        %v3372 = vunpack.c.h.b16 %v2342
        %v3373 = vunpack.c.l.b16 %v2343
        %v3374 = vunpack.c.h.b16 %v2343
        %v3375 = vunpack.c.l.b16 %v2344
        %v3376 = vunpack.c.h.b16 %v2344
        %v3377 = vunpack.c.l.b16 %v2345
        %v3378 = vunpack.c.h.b16 %v2345
        %v3379 = vunpack.c.l.b16 %v2346
        %v3380 = vunpack.c.h.b16 %v2346
        %v3381 = vunpack.c.l.b16 %v2347
        %v3382 = vunpack.c.h.b16 %v2347
        %v3383 = vunpack.c.l.b16 %v2348
        %v3384 = vunpack.c.h.b16 %v2348
        %v3385 = vunpack.c.l.b16 %v2349
        %v3386 = vunpack.c.h.b16 %v2349
        %v3387 = vunpack.c.l.b16 %v2350
        %v3388 = vunpack.c.h.b16 %v2350
        %v3389 = vunpack.c.l.b16 %v2351
        %v3390 = vunpack.c.h.b16 %v2351
        %v3391 = vunpack.c.l.b16 %v2352
        %v3392 = vunpack.c.h.b16 %v2352
        %v3393 = vunpack.c.l.b16 %v2353
        %v3394 = vunpack.c.h.b16 %v2353
        %v3395 = vunpack.c.l.b16 %v2354
        %v3396 = vunpack.c.h.b16 %v2354
        %v3397 = vunpack.c.l.b16 %v2355
        %v3398 = vunpack.c.h.b16 %v2355
        %v3399 = vunpack.c.l.b16 %v2356
        %v3400 = vunpack.c.h.b16 %v2356
        %v3401 = vunpack.c.l.b16 %v2357
        %v3402 = vunpack.c.h.b16 %v2357
        %v3403 = vunpack.c.l.b16 %v2358
        %v3404 = vunpack.c.h.b16 %v2358
        %v3405 = vunpack.c.l.b16 %v2359
        %v3406 = vunpack.c.h.b16 %v2359
        %v3407 = vunpack.c.l.b16 %v2360
        %v3408 = vunpack.c.h.b16 %v2360
        %v3409 = vunpack.c.l.b16 %v2361
        %v3410 = vunpack.c.h.b16 %v2361
        %v3411 = vunpack.c.l.b16 %v2362
        %v3412 = vunpack.c.h.b16 %v2362
        %v3413 = vunpack.c.l.b16 %v2363
        %v3414 = vunpack.c.h.b16 %v2363
        %v3415 = vunpack.c.l.b16 %v2364
        %v3416 = vunpack.c.h.b16 %v2364
        %v3417 = vunpack.c.l.b16 %v2365
        %v3418 = vunpack.c.h.b16 %v2365
        %v3419 = vunpack.c.l.b16 %v2366
        %v3420 = vunpack.c.h.b16 %v2366
        %v3421 = vunpack.c.l.b16 %v2367
        %v3422 = vunpack.c.h.b16 %v2367
        %v3423 = vunpack.c.l.b16 %v2368
        %v3424 = vunpack.c.h.b16 %v2368
        %v3425 = vunpack.c.l.b16 %v2369
        %v3426 = vunpack.c.h.b16 %v2369
        %v3427 = vunpack.c.l.b16 %v2370
        %v3428 = vunpack.c.h.b16 %v2370
        %v3429 = vunpack.c.l.b16 %v2371
        %v3430 = vunpack.c.h.b16 %v2371
        %v3431 = vunpack.c.l.b16 %v2372
        %v3432 = vunpack.c.h.b16 %v2372
        %v3433 = vunpack.c.l.b16 %v2373
        %v3434 = vunpack.c.h.b16 %v2373
        %v3435 = vunpack.c.l.b16 %v2374
        %v3436 = vunpack.c.h.b16 %v2374
        %v3437 = vunpack.c.l.b16 %v2375
        %v3438 = vunpack.c.h.b16 %v2375
        %v3439 = vunpack.c.l.b16 %v2376
        %v3440 = vunpack.c.h.b16 %v2376
        %v3441 = vunpack.c.l.b16 %v2377
        %v3442 = vunpack.c.h.b16 %v2377
        %v3443 = vunpack.c.l.b16 %v2378
        %v3444 = vunpack.c.h.b16 %v2378
        %v3445 = vunpack.c.l.b16 %v2379
        %v3446 = vunpack.c.h.b16 %v2379
        %v3447 = vunpack.c.l.b16 %v2380
        %v3448 = vunpack.c.h.b16 %v2380
        %v3449 = vunpack.c.l.b16 %v2381
        %v3450 = vunpack.c.h.b16 %v2381
        %v3451 = vunpack.c.l.b16 %v2382
        %v3452 = vunpack.c.h.b16 %v2382
        %v3453 = vunpack.c.l.b16 %v2383
        %v3454 = vunpack.c.h.b16 %v2383
        %v3455 = vunpack.c.l.b16 %v2384
        %v3456 = vunpack.c.h.b16 %v2384
        %v3457 = vunpack.c.l.b16 %v2385
        %v3458 = vunpack.c.h.b16 %v2385
        %v3459 = vunpack.c.l.b16 %v2386
        %v3460 = vunpack.c.h.b16 %v2386
        %v3461 = vunpack.c.l.b16 %v2387
        %v3462 = vunpack.c.h.b16 %v2387
        %v3463 = vunpack.c.l.b16 %v2388
        %v3464 = vunpack.c.h.b16 %v2388
        %v3465 = vunpack.c.l.b16 %v2389
        %v3466 = vunpack.c.h.b16 %v2389
        %v3467 = vunpack.c.l.b16 %v2390
        %v3468 = vunpack.c.h.b16 %v2390
        %v3469 = vunpack.c.l.b16 %v2391
        %v3470 = vunpack.c.h.b16 %v2391
        %v3471 = vunpack.c.l.b16 %v2392
        %v3472 = vunpack.c.h.b16 %v2392
        %v3473 = vunpack.c.l.b16 %v2393
        %v3474 = vunpack.c.h.b16 %v2393
        %v3475 = vunpack.c.l.b16 %v2394
        %v3476 = vunpack.c.h.b16 %v2394
        %v3477 = vunpack.c.l.b16 %v2395
        %v3478 = vunpack.c.h.b16 %v2395
        %v3479 = vunpack.c.l.b16 %v2396
        %v3480 = vunpack.c.h.b16 %v2396
        %v3481 = vunpack.c.l.b16 %v2397
        %v3482 = vunpack.c.h.b16 %v2397
        %v3483 = vunpack.c.l.b16 %v2398
        %v3484 = vunpack.c.h.b16 %v2398
        %v3485 = vunpack.c.l.b16 %v2399
        %v3486 = vunpack.c.h.b16 %v2399
        %v3487 = vunpack.c.l.b16 %v2400
        %v3488 = vunpack.c.h.b16 %v2400
        %v3489 = vunpack.c.l.b16 %v2401
        %v3490 = vunpack.c.h.b16 %v2401
        %v3491 = vunpack.c.l.b16 %v2402
        %v3492 = vunpack.c.h.b16 %v2402
        %v3493 = vunpack.c.l.b16 %v2403
        %v3494 = vunpack.c.h.b16 %v2403
        %v3495 = vunpack.c.l.b16 %v2404
        %v3496 = vunpack.c.h.b16 %v2404
        %v3497 = vunpack.c.l.b16 %v2405
        %v3498 = vunpack.c.h.b16 %v2405
        %v3499 = vunpack.c.l.b16 %v2406
        %v3500 = vunpack.c.h.b16 %v2406
        %v3501 = vunpack.c.l.b16 %v2407
        %v3502 = vunpack.c.h.b16 %v2407
        %v3503 = vunpack.c.l.b16 %v2408
        %v3504 = vunpack.c.h.b16 %v2408
        %v3505 = vunpack.c.l.b16 %v2409
        %v3506 = vunpack.c.h.b16 %v2409
        %v3507 = vunpack.c.l.b16 %v2410
        %v3508 = vunpack.c.h.b16 %v2410
        %v3509 = vunpack.c.l.b16 %v2411
        %v3510 = vunpack.c.h.b16 %v2411
        %v3511 = vunpack.c.l.b16 %v2412
        %v3512 = vunpack.c.h.b16 %v2412
        %v3513 = vunpack.c.l.b16 %v2413
        %v3514 = vunpack.c.h.b16 %v2413
        %v3515 = vunpack.c.l.b16 %v2414
        %v3516 = vunpack.c.h.b16 %v2414
        %v3517 = vunpack.c.l.b16 %v2415
        %v3518 = vunpack.c.h.b16 %v2415
        %v3519 = vunpack.c.l.b16 %v2416
        %v3520 = vunpack.c.h.b16 %v2416
        %v3521 = vunpack.c.l.b16 %v2417
        %v3522 = vunpack.c.h.b16 %v2417
        %v3523 = vunpack.c.l.b16 %v2418
        %v3524 = vunpack.c.h.b16 %v2418
        %v3525 = vunpack.c.l.b16 %v2419
        %v3526 = vunpack.c.h.b16 %v2419
        %v3527 = vunpack.c.l.b16 %v2420
        %v3528 = vunpack.c.h.b16 %v2420
        %v3529 = vunpack.c.l.b16 %v2421
        %v3530 = vunpack.c.h.b16 %v2421
        %v3531 = vunpack.c.l.b16 %v2422
        %v3532 = vunpack.c.h.b16 %v2422
        %v3533 = vunpack.c.l.b16 %v2423
        %v3534 = vunpack.c.h.b16 %v2423
        %v3535 = vunpack.c.l.b16 %v2424
        %v3536 = vunpack.c.h.b16 %v2424
        %v3537 = vunpack.c.l.b16 %v2425
        %v3538 = vunpack.c.h.b16 %v2425
        %v3539 = vunpack.c.l.b16 %v2426
        %v3540 = vunpack.c.h.b16 %v2426
        %v3541 = vunpack.c.l.b16 %v2427
        %v3542 = vunpack.c.h.b16 %v2427
        %v3543 = vunpack.c.l.b16 %v2428
        %v3544 = vunpack.c.h.b16 %v2428
        %v3545 = vunpack.c.l.b16 %v2429
        %v3546 = vunpack.c.h.b16 %v2429
        %v3547 = vunpack.c.l.b16 %v2430
        %v3548 = vunpack.c.h.b16 %v2430
        %v3549 = vunpack.c.l.b16 %v2431
        %v3550 = vunpack.c.h.b16 %v2431
        %v3551 = vunpack.c.l.b16 %v2432
        %v3552 = vunpack.c.h.b16 %v2432
        %v3553 = vunpack.c.l.b16 %v2433
        %v3554 = vunpack.c.h.b16 %v2433
        %v3555 = vunpack.c.l.b16 %v2434
        %v3556 = vunpack.c.h.b16 %v2434
        %v3557 = vunpack.c.l.b16 %v2435
        %v3558 = vunpack.c.h.b16 %v2435
        %v3559 = vunpack.c.l.b16 %v2436
        %v3560 = vunpack.c.h.b16 %v2436
        %v3561 = vunpack.c.l.b16 %v2437
        %v3562 = vunpack.c.h.b16 %v2437
        %v3563 = vunpack.c.l.b16 %v2438
        %v3564 = vunpack.c.h.b16 %v2438
        %v3565 = vunpack.c.l.b16 %v2439
        %v3566 = vunpack.c.h.b16 %v2439
        %v3567 = vunpack.c.l.b16 %v2440
        %v3568 = vunpack.c.h.b16 %v2440
        %v3569 = vunpack.c.l.b16 %v2441
        %v3570 = vunpack.c.h.b16 %v2441
        %v3571 = vunpack.c.l.b16 %v2442
        %v3572 = vunpack.c.h.b16 %v2442
        %v3573 = vunpack.c.l.b16 %v2443
        %v3574 = vunpack.c.h.b16 %v2443
        %v3575 = vunpack.c.l.b16 %v2444
        %v3576 = vunpack.c.h.b16 %v2444
        %v3577 = vunpack.c.l.b16 %v2445
        %v3578 = vunpack.c.h.b16 %v2445
        %v3579 = vunpack.c.l.b16 %v2446
        %v3580 = vunpack.c.h.b16 %v2446
        %v3581 = vunpack.c.l.b16 %v2447
        %v3582 = vunpack.c.h.b16 %v2447
        %v3583 = vunpack.c.l.b16 %v2448
        %v3584 = vunpack.c.h.b16 %v2448
        %v3585 = vunpack.c.l.b16 %v2449
        %v3586 = vunpack.c.h.b16 %v2449
        %v3587 = vunpack.c.l.b16 %v2450
        %v3588 = vunpack.c.h.b16 %v2450
        %v3589 = vunpack.c.l.b16 %v2451
        %v3590 = vunpack.c.h.b16 %v2451
        %v3591 = vunpack.c.l.b16 %v2452
        %v3592 = vunpack.c.h.b16 %v2452
        %v3593 = vunpack.c.l.b16 %v2453
        %v3594 = vunpack.c.h.b16 %v2453
        %v3595 = vunpack.c.l.b16 %v2454
        %v3596 = vunpack.c.h.b16 %v2454
        %v3597 = vunpack.c.l.b16 %v2455
        %v3598 = vunpack.c.h.b16 %v2455
        %v3599 = vunpack.c.l.b16 %v2456
        %v3600 = vunpack.c.h.b16 %v2456
        %v3601 = vunpack.c.l.b16 %v2457
        %v3602 = vunpack.c.h.b16 %v2457
        %v3603 = vunpack.c.l.b16 %v2458
        %v3604 = vunpack.c.h.b16 %v2458
        %v3605 = vunpack.c.l.b16 %v2459
        %v3606 = vunpack.c.h.b16 %v2459
        %v3607 = vunpack.c.l.b16 %v2460
        %v3608 = vunpack.c.h.b16 %v2460
        %v3609 = vunpack.c.l.b16 %v2461
        %v3610 = vunpack.c.h.b16 %v2461
        %v3611 = vunpack.c.l.b16 %v2462
        %v3612 = vunpack.c.h.b16 %v2462
        %v3613 = vunpack.c.l.b16 %v2463
        %v3614 = vunpack.c.h.b16 %v2463
        %v3615 = vunpack.c.l.b16 %v2464
        %v3616 = vunpack.c.h.b16 %v2464
        %v3617 = vpack.c.b16 %v2853, %v2849
        %v3618 = vpack.c.b16 %v2854, %v2850
        %v3619 = vpack.c.b16 %v2855, %v2851
        %v3620 = vpack.c.b16 %v2856, %v2852
        %v3621 = vpack.c.b16 %v2861, %v2857
        %v3622 = vpack.c.b16 %v2862, %v2858
        %v3623 = vpack.c.b16 %v2863, %v2859
        %v3624 = vpack.c.b16 %v2864, %v2860
        %v3625 = vpack.c.b16 %v2869, %v2865
        %v3626 = vpack.c.b16 %v2870, %v2866
        %v3627 = vpack.c.b16 %v2871, %v2867
        %v3628 = vpack.c.b16 %v2872, %v2868
        %v3629 = vpack.c.b16 %v2877, %v2873
        %v3630 = vpack.c.b16 %v2878, %v2874
        %v3631 = vpack.c.b16 %v2879, %v2875
        %v3632 = vpack.c.b16 %v2880, %v2876
        %v3633 = vpack.c.b16 %v2885, %v2881
        %v3634 = vpack.c.b16 %v2886, %v2882
        %v3635 = vpack.c.b16 %v2887, %v2883
        %v3636 = vpack.c.b16 %v2888, %v2884
        %v3637 = vpack.c.b16 %v2893, %v2889
        %v3638 = vpack.c.b16 %v2894, %v2890
        %v3639 = vpack.c.b16 %v2895, %v2891
        %v3640 = vpack.c.b16 %v2896, %v2892
        %v3641 = vpack.c.b16 %v2901, %v2897
        %v3642 = vpack.c.b16 %v2902, %v2898
        %v3643 = vpack.c.b16 %v2903, %v2899
        %v3644 = vpack.c.b16 %v2904, %v2900
        %v3645 = vpack.c.b16 %v2909, %v2905
        %v3646 = vpack.c.b16 %v2910, %v2906
        %v3647 = vpack.c.b16 %v2911, %v2907
        %v3648 = vpack.c.b16 %v2912, %v2908
        %v3649 = vpack.c.b16 %v2917, %v2913
        %v3650 = vpack.c.b16 %v2918, %v2914
        %v3651 = vpack.c.b16 %v2919, %v2915
        %v3652 = vpack.c.b16 %v2920, %v2916
        %v3653 = vpack.c.b16 %v2925, %v2921
        %v3654 = vpack.c.b16 %v2926, %v2922
        %v3655 = vpack.c.b16 %v2927, %v2923
        %v3656 = vpack.c.b16 %v2928, %v2924
        %v3657 = vpack.c.b16 %v2933, %v2929
        %v3658 = vpack.c.b16 %v2934, %v2930
        %v3659 = vpack.c.b16 %v2935, %v2931
        %v3660 = vpack.c.b16 %v2936, %v2932
        %v3661 = vpack.c.b16 %v2941, %v2937
        %v3662 = vpack.c.b16 %v2942, %v2938
        %v3663 = vpack.c.b16 %v2943, %v2939
        %v3664 = vpack.c.b16 %v2944, %v2940
        %v3665 = vpack.c.b16 %v2949, %v2945
        %v3666 = vpack.c.b16 %v2950, %v2946
        %v3667 = vpack.c.b16 %v2951, %v2947
        %v3668 = vpack.c.b16 %v2952, %v2948
        %v3669 = vpack.c.b16 %v2957, %v2953
        %v3670 = vpack.c.b16 %v2958, %v2954
        %v3671 = vpack.c.b16 %v2959, %v2955
        %v3672 = vpack.c.b16 %v2960, %v2956
        %v3673 = vpack.c.b16 %v2965, %v2961
        %v3674 = vpack.c.b16 %v2966, %v2962
        %v3675 = vpack.c.b16 %v2967, %v2963
        %v3676 = vpack.c.b16 %v2968, %v2964
        %v3677 = vpack.c.b16 %v2973, %v2969
        %v3678 = vpack.c.b16 %v2974, %v2970
        %v3679 = vpack.c.b16 %v2975, %v2971
        %v3680 = vpack.c.b16 %v2976, %v2972
        %v3681 = vpack.c.b16 %v2981, %v2977
        %v3682 = vpack.c.b16 %v2982, %v2978
        %v3683 = vpack.c.b16 %v2983, %v2979
        %v3684 = vpack.c.b16 %v2984, %v2980
        %v3685 = vpack.c.b16 %v2989, %v2985
        %v3686 = vpack.c.b16 %v2990, %v2986
        %v3687 = vpack.c.b16 %v2991, %v2987
        %v3688 = vpack.c.b16 %v2992, %v2988
        %v3689 = vpack.c.b16 %v2997, %v2993
        %v3690 = vpack.c.b16 %v2998, %v2994
        %v3691 = vpack.c.b16 %v2999, %v2995
        %v3692 = vpack.c.b16 %v3000, %v2996
        %v3693 = vpack.c.b16 %v3005, %v3001
        %v3694 = vpack.c.b16 %v3006, %v3002
        %v3695 = vpack.c.b16 %v3007, %v3003
        %v3696 = vpack.c.b16 %v3008, %v3004
        %v3697 = vpack.c.b16 %v3013, %v3009
        %v3698 = vpack.c.b16 %v3014, %v3010
        %v3699 = vpack.c.b16 %v3015, %v3011
        %v3700 = vpack.c.b16 %v3016, %v3012
        %v3701 = vpack.c.b16 %v3021, %v3017
        %v3702 = vpack.c.b16 %v3022, %v3018
        %v3703 = vpack.c.b16 %v3023, %v3019
        %v3704 = vpack.c.b16 %v3024, %v3020
        %v3705 = vpack.c.b16 %v3029, %v3025
        %v3706 = vpack.c.b16 %v3030, %v3026
        %v3707 = vpack.c.b16 %v3031, %v3027
        %v3708 = vpack.c.b16 %v3032, %v3028
        %v3709 = vpack.c.b16 %v3037, %v3033
        %v3710 = vpack.c.b16 %v3038, %v3034
        %v3711 = vpack.c.b16 %v3039, %v3035
        %v3712 = vpack.c.b16 %v3040, %v3036
        %v3713 = vpack.c.b16 %v3045, %v3041
        %v3714 = vpack.c.b16 %v3046, %v3042
        %v3715 = vpack.c.b16 %v3047, %v3043
        %v3716 = vpack.c.b16 %v3048, %v3044
        %v3717 = vpack.c.b16 %v3053, %v3049
        %v3718 = vpack.c.b16 %v3054, %v3050
        %v3719 = vpack.c.b16 %v3055, %v3051
        %v3720 = vpack.c.b16 %v3056, %v3052
        %v3721 = vpack.c.b16 %v3061, %v3057
        %v3722 = vpack.c.b16 %v3062, %v3058
        %v3723 = vpack.c.b16 %v3063, %v3059
        %v3724 = vpack.c.b16 %v3064, %v3060
        %v3725 = vpack.c.b16 %v3069, %v3065
        %v3726 = vpack.c.b16 %v3070, %v3066
        %v3727 = vpack.c.b16 %v3071, %v3067
        %v3728 = vpack.c.b16 %v3072, %v3068
        %v3729 = vpack.c.b16 %v3077, %v3073
        %v3730 = vpack.c.b16 %v3078, %v3074
        %v3731 = vpack.c.b16 %v3079, %v3075
        %v3732 = vpack.c.b16 %v3080, %v3076
        %v3733 = vpack.c.b16 %v3085, %v3081
        %v3734 = vpack.c.b16 %v3086, %v3082
        %v3735 = vpack.c.b16 %v3087, %v3083
        %v3736 = vpack.c.b16 %v3088, %v3084
        %v3737 = vpack.c.b16 %v3093, %v3089
        %v3738 = vpack.c.b16 %v3094, %v3090
        %v3739 = vpack.c.b16 %v3095, %v3091
        %v3740 = vpack.c.b16 %v3096, %v3092
        %v3741 = vpack.c.b16 %v3101, %v3097
        %v3742 = vpack.c.b16 %v3102, %v3098
        %v3743 = vpack.c.b16 %v3103, %v3099
        %v3744 = vpack.c.b16 %v3104, %v3100
        %v3745 = vpack.c.b16 %v3109, %v3105
        %v3746 = vpack.c.b16 %v3110, %v3106
        %v3747 = vpack.c.b16 %v3111, %v3107
        %v3748 = vpack.c.b16 %v3112, %v3108
        %v3749 = vpack.c.b16 %v3117, %v3113
        %v3750 = vpack.c.b16 %v3118, %v3114
        %v3751 = vpack.c.b16 %v3119, %v3115
        %v3752 = vpack.c.b16 %v3120, %v3116
        %v3753 = vpack.c.b16 %v3125, %v3121
        %v3754 = vpack.c.b16 %v3126, %v3122
        %v3755 = vpack.c.b16 %v3127, %v3123
        %v3756 = vpack.c.b16 %v3128, %v3124
        %v3757 = vpack.c.b16 %v3133, %v3129
        %v3758 = vpack.c.b16 %v3134, %v3130
        %v3759 = vpack.c.b16 %v3135, %v3131
        %v3760 = vpack.c.b16 %v3136, %v3132
        %v3761 = vpack.c.b16 %v3141, %v3137
        %v3762 = vpack.c.b16 %v3142, %v3138
        %v3763 = vpack.c.b16 %v3143, %v3139
        %v3764 = vpack.c.b16 %v3144, %v3140
        %v3765 = vpack.c.b16 %v3149, %v3145
        %v3766 = vpack.c.b16 %v3150, %v3146
        %v3767 = vpack.c.b16 %v3151, %v3147
        %v3768 = vpack.c.b16 %v3152, %v3148
        %v3769 = vpack.c.b16 %v3157, %v3153
        %v3770 = vpack.c.b16 %v3158, %v3154
        %v3771 = vpack.c.b16 %v3159, %v3155
        %v3772 = vpack.c.b16 %v3160, %v3156
        %v3773 = vpack.c.b16 %v3165, %v3161
        %v3774 = vpack.c.b16 %v3166, %v3162
        %v3775 = vpack.c.b16 %v3167, %v3163
        %v3776 = vpack.c.b16 %v3168, %v3164
        %v3777 = vpack.c.b16 %v3173, %v3169
        %v3778 = vpack.c.b16 %v3174, %v3170
        %v3779 = vpack.c.b16 %v3175, %v3171
        %v3780 = vpack.c.b16 %v3176, %v3172
        %v3781 = vpack.c.b16 %v3181, %v3177
        %v3782 = vpack.c.b16 %v3182, %v3178
        %v3783 = vpack.c.b16 %v3183, %v3179
        %v3784 = vpack.c.b16 %v3184, %v3180
        %v3785 = vpack.c.b16 %v3189, %v3185
        %v3786 = vpack.c.b16 %v3190, %v3186
        %v3787 = vpack.c.b16 %v3191, %v3187
        %v3788 = vpack.c.b16 %v3192, %v3188
        %v3789 = vpack.c.b16 %v3197, %v3193
        %v3790 = vpack.c.b16 %v3198, %v3194
        %v3791 = vpack.c.b16 %v3199, %v3195
        %v3792 = vpack.c.b16 %v3200, %v3196
        %v3793 = vpack.c.b16 %v3205, %v3201
        %v3794 = vpack.c.b16 %v3206, %v3202
        %v3795 = vpack.c.b16 %v3207, %v3203
        %v3796 = vpack.c.b16 %v3208, %v3204
        %v3797 = vpack.c.b16 %v3213, %v3209
        %v3798 = vpack.c.b16 %v3214, %v3210
        %v3799 = vpack.c.b16 %v3215, %v3211
        %v3800 = vpack.c.b16 %v3216, %v3212
        %v3801 = vpack.c.b16 %v3221, %v3217
        %v3802 = vpack.c.b16 %v3222, %v3218
        %v3803 = vpack.c.b16 %v3223, %v3219
        %v3804 = vpack.c.b16 %v3224, %v3220
        %v3805 = vpack.c.b16 %v3229, %v3225
        %v3806 = vpack.c.b16 %v3230, %v3226
        %v3807 = vpack.c.b16 %v3231, %v3227
        %v3808 = vpack.c.b16 %v3232, %v3228
        %v3809 = vpack.c.b16 %v3237, %v3233
        %v3810 = vpack.c.b16 %v3238, %v3234
        %v3811 = vpack.c.b16 %v3239, %v3235
        %v3812 = vpack.c.b16 %v3240, %v3236
        %v3813 = vpack.c.b16 %v3245, %v3241
        %v3814 = vpack.c.b16 %v3246, %v3242
        %v3815 = vpack.c.b16 %v3247, %v3243
        %v3816 = vpack.c.b16 %v3248, %v3244
        %v3817 = vpack.c.b16 %v3253, %v3249
        %v3818 = vpack.c.b16 %v3254, %v3250
        %v3819 = vpack.c.b16 %v3255, %v3251
        %v3820 = vpack.c.b16 %v3256, %v3252
        %v3821 = vpack.c.b16 %v3261, %v3257
        %v3822 = vpack.c.b16 %v3262, %v3258
        %v3823 = vpack.c.b16 %v3263, %v3259
        %v3824 = vpack.c.b16 %v3264, %v3260
        %v3825 = vpack.c.b16 %v3269, %v3265
        %v3826 = vpack.c.b16 %v3270, %v3266
        %v3827 = vpack.c.b16 %v3271, %v3267
        %v3828 = vpack.c.b16 %v3272, %v3268
        %v3829 = vpack.c.b16 %v3277, %v3273
        %v3830 = vpack.c.b16 %v3278, %v3274
        %v3831 = vpack.c.b16 %v3279, %v3275
        %v3832 = vpack.c.b16 %v3280, %v3276
        %v3833 = vpack.c.b16 %v3285, %v3281
        %v3834 = vpack.c.b16 %v3286, %v3282
        %v3835 = vpack.c.b16 %v3287, %v3283
        %v3836 = vpack.c.b16 %v3288, %v3284
        %v3837 = vpack.c.b16 %v3293, %v3289
        %v3838 = vpack.c.b16 %v3294, %v3290
        %v3839 = vpack.c.b16 %v3295, %v3291
        %v3840 = vpack.c.b16 %v3296, %v3292
        %v3841 = vpack.c.b16 %v3301, %v3297
        %v3842 = vpack.c.b16 %v3302, %v3298
        %v3843 = vpack.c.b16 %v3303, %v3299
        %v3844 = vpack.c.b16 %v3304, %v3300
        %v3845 = vpack.c.b16 %v3309, %v3305
        %v3846 = vpack.c.b16 %v3310, %v3306
        %v3847 = vpack.c.b16 %v3311, %v3307
        %v3848 = vpack.c.b16 %v3312, %v3308
        %v3849 = vpack.c.b16 %v3317, %v3313
        %v3850 = vpack.c.b16 %v3318, %v3314
        %v3851 = vpack.c.b16 %v3319, %v3315
        %v3852 = vpack.c.b16 %v3320, %v3316
        %v3853 = vpack.c.b16 %v3325, %v3321
        %v3854 = vpack.c.b16 %v3326, %v3322
        %v3855 = vpack.c.b16 %v3327, %v3323
        %v3856 = vpack.c.b16 %v3328, %v3324
        %v3857 = vpack.c.b16 %v3333, %v3329
        %v3858 = vpack.c.b16 %v3334, %v3330
        %v3859 = vpack.c.b16 %v3335, %v3331
        %v3860 = vpack.c.b16 %v3336, %v3332
        %v3861 = vpack.c.b16 %v3341, %v3337
        %v3862 = vpack.c.b16 %v3342, %v3338
        %v3863 = vpack.c.b16 %v3343, %v3339
        %v3864 = vpack.c.b16 %v3344, %v3340
        %v3865 = vpack.c.b16 %v3349, %v3345
        %v3866 = vpack.c.b16 %v3350, %v3346
        %v3867 = vpack.c.b16 %v3351, %v3347
        %v3868 = vpack.c.b16 %v3352, %v3348
        %v3869 = vpack.c.b16 %v3357, %v3353
        %v3870 = vpack.c.b16 %v3358, %v3354
        %v3871 = vpack.c.b16 %v3359, %v3355
        %v3872 = vpack.c.b16 %v3360, %v3356
        %v3873 = vpack.c.b16 %v3365, %v3361
        %v3874 = vpack.c.b16 %v3366, %v3362
        %v3875 = vpack.c.b16 %v3367, %v3363
        %v3876 = vpack.c.b16 %v3368, %v3364
        %v3877 = vpack.c.b16 %v3373, %v3369
        %v3878 = vpack.c.b16 %v3374, %v3370
        %v3879 = vpack.c.b16 %v3375, %v3371
        %v3880 = vpack.c.b16 %v3376, %v3372
        %v3881 = vpack.c.b16 %v3381, %v3377
        %v3882 = vpack.c.b16 %v3382, %v3378
        %v3883 = vpack.c.b16 %v3383, %v3379
        %v3884 = vpack.c.b16 %v3384, %v3380
        %v3885 = vpack.c.b16 %v3389, %v3385
        %v3886 = vpack.c.b16 %v3390, %v3386
        %v3887 = vpack.c.b16 %v3391, %v3387
        %v3888 = vpack.c.b16 %v3392, %v3388
        %v3889 = vpack.c.b16 %v3397, %v3393
        %v3890 = vpack.c.b16 %v3398, %v3394
        %v3891 = vpack.c.b16 %v3399, %v3395
        %v3892 = vpack.c.b16 %v3400, %v3396
        %v3893 = vpack.c.b16 %v3405, %v3401
        %v3894 = vpack.c.b16 %v3406, %v3402
        %v3895 = vpack.c.b16 %v3407, %v3403
        %v3896 = vpack.c.b16 %v3408, %v3404
        %v3897 = vpack.c.b16 %v3413, %v3409
        %v3898 = vpack.c.b16 %v3414, %v3410
        %v3899 = vpack.c.b16 %v3415, %v3411
        %v3900 = vpack.c.b16 %v3416, %v3412
        %v3901 = vpack.c.b16 %v3421, %v3417
        %v3902 = vpack.c.b16 %v3422, %v3418
        %v3903 = vpack.c.b16 %v3423, %v3419
        %v3904 = vpack.c.b16 %v3424, %v3420
        %v3905 = vpack.c.b16 %v3429, %v3425
        %v3906 = vpack.c.b16 %v3430, %v3426
        %v3907 = vpack.c.b16 %v3431, %v3427
        %v3908 = vpack.c.b16 %v3432, %v3428
        %v3909 = vpack.c.b16 %v3437, %v3433
        %v3910 = vpack.c.b16 %v3438, %v3434
        %v3911 = vpack.c.b16 %v3439, %v3435
        %v3912 = vpack.c.b16 %v3440, %v3436
        %v3913 = vpack.c.b16 %v3445, %v3441
        %v3914 = vpack.c.b16 %v3446, %v3442
        %v3915 = vpack.c.b16 %v3447, %v3443
        %v3916 = vpack.c.b16 %v3448, %v3444
        %v3917 = vpack.c.b16 %v3453, %v3449
        %v3918 = vpack.c.b16 %v3454, %v3450
        %v3919 = vpack.c.b16 %v3455, %v3451
        %v3920 = vpack.c.b16 %v3456, %v3452
        %v3921 = vpack.c.b16 %v3461, %v3457
        %v3922 = vpack.c.b16 %v3462, %v3458
        %v3923 = vpack.c.b16 %v3463, %v3459
        %v3924 = vpack.c.b16 %v3464, %v3460
        %v3925 = vpack.c.b16 %v3469, %v3465
        %v3926 = vpack.c.b16 %v3470, %v3466
        %v3927 = vpack.c.b16 %v3471, %v3467
        %v3928 = vpack.c.b16 %v3472, %v3468
        %v3929 = vpack.c.b16 %v3477, %v3473
        %v3930 = vpack.c.b16 %v3478, %v3474
        %v3931 = vpack.c.b16 %v3479, %v3475
        %v3932 = vpack.c.b16 %v3480, %v3476
        %v3933 = vpack.c.b16 %v3485, %v3481
        %v3934 = vpack.c.b16 %v3486, %v3482
        %v3935 = vpack.c.b16 %v3487, %v3483
        %v3936 = vpack.c.b16 %v3488, %v3484
        %v3937 = vpack.c.b16 %v3493, %v3489
        %v3938 = vpack.c.b16 %v3494, %v3490
        %v3939 = vpack.c.b16 %v3495, %v3491
        %v3940 = vpack.c.b16 %v3496, %v3492
        %v3941 = vpack.c.b16 %v3501, %v3497
        %v3942 = vpack.c.b16 %v3502, %v3498
        %v3943 = vpack.c.b16 %v3503, %v3499
        %v3944 = vpack.c.b16 %v3504, %v3500
        %v3945 = vpack.c.b16 %v3509, %v3505
        %v3946 = vpack.c.b16 %v3510, %v3506
        %v3947 = vpack.c.b16 %v3511, %v3507
        %v3948 = vpack.c.b16 %v3512, %v3508
        %v3949 = vpack.c.b16 %v3517, %v3513
        %v3950 = vpack.c.b16 %v3518, %v3514
        %v3951 = vpack.c.b16 %v3519, %v3515
        %v3952 = vpack.c.b16 %v3520, %v3516
        %v3953 = vpack.c.b16 %v3525, %v3521
        %v3954 = vpack.c.b16 %v3526, %v3522
        %v3955 = vpack.c.b16 %v3527, %v3523
        %v3956 = vpack.c.b16 %v3528, %v3524
        %v3957 = vpack.c.b16 %v3533, %v3529
        %v3958 = vpack.c.b16 %v3534, %v3530
        %v3959 = vpack.c.b16 %v3535, %v3531
        %v3960 = vpack.c.b16 %v3536, %v3532
        %v3961 = vpack.c.b16 %v3541, %v3537
        %v3962 = vpack.c.b16 %v3542, %v3538
        %v3963 = vpack.c.b16 %v3543, %v3539
        %v3964 = vpack.c.b16 %v3544, %v3540
        %v3965 = vpack.c.b16 %v3549, %v3545
        %v3966 = vpack.c.b16 %v3550, %v3546
        %v3967 = vpack.c.b16 %v3551, %v3547
        %v3968 = vpack.c.b16 %v3552, %v3548
        %v3969 = vpack.c.b16 %v3557, %v3553
        %v3970 = vpack.c.b16 %v3558, %v3554
        %v3971 = vpack.c.b16 %v3559, %v3555
        %v3972 = vpack.c.b16 %v3560, %v3556
        %v3973 = vpack.c.b16 %v3565, %v3561
        %v3974 = vpack.c.b16 %v3566, %v3562
        %v3975 = vpack.c.b16 %v3567, %v3563
        %v3976 = vpack.c.b16 %v3568, %v3564
        %v3977 = vpack.c.b16 %v3573, %v3569
        %v3978 = vpack.c.b16 %v3574, %v3570
        %v3979 = vpack.c.b16 %v3575, %v3571
        %v3980 = vpack.c.b16 %v3576, %v3572
        %v3981 = vpack.c.b16 %v3581, %v3577
        %v3982 = vpack.c.b16 %v3582, %v3578
        %v3983 = vpack.c.b16 %v3583, %v3579
        %v3984 = vpack.c.b16 %v3584, %v3580
        %v3985 = vpack.c.b16 %v3589, %v3585
        %v3986 = vpack.c.b16 %v3590, %v3586
        %v3987 = vpack.c.b16 %v3591, %v3587
        %v3988 = vpack.c.b16 %v3592, %v3588
        %v3989 = vpack.c.b16 %v3597, %v3593
        %v3990 = vpack.c.b16 %v3598, %v3594
        %v3991 = vpack.c.b16 %v3599, %v3595
        %v3992 = vpack.c.b16 %v3600, %v3596
        %v3993 = vpack.c.b16 %v3605, %v3601
        %v3994 = vpack.c.b16 %v3606, %v3602
        %v3995 = vpack.c.b16 %v3607, %v3603
        %v3996 = vpack.c.b16 %v3608, %v3604
        %v3997 = vpack.c.b16 %v3613, %v3609
        %v3998 = vpack.c.b16 %v3614, %v3610
        %v3999 = vpack.c.b16 %v3615, %v3611
        %v4000 = vpack.c.b16 %v3616, %v3612
        %4385 = vmatpush.bf16.msra.mxu0 %v3645
        %4386 = vmatpush.bf16.msra.mxu0 %v3641
        %4387 = vmatpush.bf16.msra.mxu0 %v3637
        %4388 = vmatpush.bf16.msra.mxu0 %v3633
        %4389 = vmatpush.bf16.msra.mxu0 %v3629
        %4390 = vmatpush.bf16.msra.mxu0 %v3625
        %4391 = vmatpush.bf16.msra.mxu0 %v3621
        %4392 = vmatpush.bf16.msra.mxu0 %v3617
        %4393 = vmatmul.bf16.gmra.mxu0 %v2069
        %v4394 = vpop.f32.mrf.mxu0
        %v4395 = vadd.f32 0.0, %v4394
        %v4396 = vpop.f32.mrf.mxu0
        %4397 = vdwg.mxu0
        %4398 = vmatpush.bf16.msra.mxu0 %v3677
        %4399 = vmatpush.bf16.msra.mxu0 %v3673
        %4400 = vmatpush.bf16.msra.mxu0 %v3669
        %4401 = vmatpush.bf16.msra.mxu0 %v3665
        %4402 = vmatpush.bf16.msra.mxu0 %v3661
        %4403 = vmatpush.bf16.msra.mxu0 %v3657
        %4404 = vmatpush.bf16.msra.mxu0 %v3653
        %4405 = vmatpush.bf16.msra.mxu0 %v3649
        %4406 = vmatmul.bf16.gmra.mxu0 %v2070
        %v4407 = vpop.f32.mrf.mxu0
        %v4408 = vadd.f32 %v4395, %v4407
        %v4409 = vpop.f32.mrf.mxu0
        %4410 = vdwg.mxu0
        %4411 = vmatpush.bf16.msra.mxu0 %v3709
        %4412 = vmatpush.bf16.msra.mxu0 %v3705
        %4413 = vmatpush.bf16.msra.mxu0 %v3701
        %4414 = vmatpush.bf16.msra.mxu0 %v3697
        %4415 = vmatpush.bf16.msra.mxu0 %v3693
        %4416 = vmatpush.bf16.msra.mxu0 %v3689
        %4417 = vmatpush.bf16.msra.mxu0 %v3685
        %4418 = vmatpush.bf16.msra.mxu0 %v3681
        %4419 = vmatmul.bf16.gmra.mxu0 %v2071
        %v4420 = vpop.f32.mrf.mxu0
        %v4421 = vadd.f32 %v4408, %v4420
        %v4422 = vpop.f32.mrf.mxu0
        %4423 = vdwg.mxu0
        %4424 = vmatpush.bf16.msra.mxu0 %v3741
        %4425 = vmatpush.bf16.msra.mxu0 %v3737
        %4426 = vmatpush.bf16.msra.mxu0 %v3733
        %4427 = vmatpush.bf16.msra.mxu0 %v3729
        %4428 = vmatpush.bf16.msra.mxu0 %v3725
        %4429 = vmatpush.bf16.msra.mxu0 %v3721
        %4430 = vmatpush.bf16.msra.mxu0 %v3717
        %4431 = vmatpush.bf16.msra.mxu0 %v3713
        %4432 = vmatmul.bf16.gmra.mxu0 %v2072
        %v4433 = vpop.f32.mrf.mxu0
        %v4434 = vadd.f32 %v4421, %v4433
        %v4435 = vpop.f32.mrf.mxu0
        %4436 = vdwg.mxu0
        %4437 = vmatpush.bf16.msra.mxu0 %v3773
        %4438 = vmatpush.bf16.msra.mxu0 %v3769
        %4439 = vmatpush.bf16.msra.mxu0 %v3765
        %4440 = vmatpush.bf16.msra.mxu0 %v3761
        %4441 = vmatpush.bf16.msra.mxu0 %v3757
        %4442 = vmatpush.bf16.msra.mxu0 %v3753
        %4443 = vmatpush.bf16.msra.mxu0 %v3749
        %4444 = vmatpush.bf16.msra.mxu0 %v3745
        %4445 = vmatmul.bf16.gmra.mxu0 %v2073
        %v4446 = vpop.f32.mrf.mxu0
        %v4447 = vadd.f32 %v4434, %v4446
        %v4448 = vpop.f32.mrf.mxu0
        %4449 = vdwg.mxu0
        %4450 = vmatpush.bf16.msra.mxu0 %v3805
        %4451 = vmatpush.bf16.msra.mxu0 %v3801
        %4452 = vmatpush.bf16.msra.mxu0 %v3797
        %4453 = vmatpush.bf16.msra.mxu0 %v3793
        %4454 = vmatpush.bf16.msra.mxu0 %v3789
        %4455 = vmatpush.bf16.msra.mxu0 %v3785
        %4456 = vmatpush.bf16.msra.mxu0 %v3781
        %4457 = vmatpush.bf16.msra.mxu0 %v3777
        %4458 = vmatmul.bf16.gmra.mxu0 %v2074
        %v4459 = vpop.f32.mrf.mxu0
        %v4460 = vadd.f32 %v4447, %v4459
        %v4461 = vpop.f32.mrf.mxu0
        %4462 = vdwg.mxu0
        %4463 = vmatpush.bf16.msra.mxu0 %v3837
        %4464 = vmatpush.bf16.msra.mxu0 %v3833
        %4465 = vmatpush.bf16.msra.mxu0 %v3829
        %4466 = vmatpush.bf16.msra.mxu0 %v3825
        %4467 = vmatpush.bf16.msra.mxu0 %v3821
        %4468 = vmatpush.bf16.msra.mxu0 %v3817
        %4469 = vmatpush.bf16.msra.mxu0 %v3813
        %4470 = vmatpush.bf16.msra.mxu0 %v3809
        %4471 = vmatmul.bf16.gmra.mxu0 %v2075
        %v4472 = vpop.f32.mrf.mxu0
        %v4473 = vadd.f32 %v4460, %v4472
        %v4474 = vpop.f32.mrf.mxu0
        %4475 = vdwg.mxu0
        %4476 = vmatpush.bf16.msra.mxu0 %v3869
        %4477 = vmatpush.bf16.msra.mxu0 %v3865
        %4478 = vmatpush.bf16.msra.mxu0 %v3861
        %4479 = vmatpush.bf16.msra.mxu0 %v3857
        %4480 = vmatpush.bf16.msra.mxu0 %v3853
        %4481 = vmatpush.bf16.msra.mxu0 %v3849
        %4482 = vmatpush.bf16.msra.mxu0 %v3845
        %4483 = vmatpush.bf16.msra.mxu0 %v3841
        %4484 = vmatmul.bf16.gmra.mxu0 %v2076
        %v4485 = vpop.f32.mrf.mxu0
        %v4486 = vadd.f32 %v4473, %v4485
        %v4487 = vpop.f32.mrf.mxu0
        %4488 = vdwg.mxu0
        %4489 = vmatpush.bf16.msra.mxu0 %v3901
        %4490 = vmatpush.bf16.msra.mxu0 %v3897
        %4491 = vmatpush.bf16.msra.mxu0 %v3893
        %4492 = vmatpush.bf16.msra.mxu0 %v3889
        %4493 = vmatpush.bf16.msra.mxu0 %v3885
        %4494 = vmatpush.bf16.msra.mxu0 %v3881
        %4495 = vmatpush.bf16.msra.mxu0 %v3877
        %4496 = vmatpush.bf16.msra.mxu0 %v3873
        %4497 = vmatmul.bf16.gmra.mxu0 %v2077
        %v4498 = vpop.f32.mrf.mxu0
        %v4499 = vadd.f32 %v4486, %v4498
        %v4500 = vpop.f32.mrf.mxu0
        %4501 = vdwg.mxu0
        %4502 = vmatpush.bf16.msra.mxu0 %v3933
        %4503 = vmatpush.bf16.msra.mxu0 %v3929
        %4504 = vmatpush.bf16.msra.mxu0 %v3925
        %4505 = vmatpush.bf16.msra.mxu0 %v3921
        %4506 = vmatpush.bf16.msra.mxu0 %v3917
        %4507 = vmatpush.bf16.msra.mxu0 %v3913
        %4508 = vmatpush.bf16.msra.mxu0 %v3909
        %4509 = vmatpush.bf16.msra.mxu0 %v3905
        %4510 = vmatmul.bf16.gmra.mxu0 %v2078
        %v4511 = vpop.f32.mrf.mxu0
        %v4512 = vadd.f32 %v4499, %v4511
        %v4513 = vpop.f32.mrf.mxu0
        %4514 = vdwg.mxu0
        %4515 = vmatpush.bf16.msra.mxu0 %v3965
        %4516 = vmatpush.bf16.msra.mxu0 %v3961
        %4517 = vmatpush.bf16.msra.mxu0 %v3957
        %4518 = vmatpush.bf16.msra.mxu0 %v3953
        %4519 = vmatpush.bf16.msra.mxu0 %v3949
        %4520 = vmatpush.bf16.msra.mxu0 %v3945
        %4521 = vmatpush.bf16.msra.mxu0 %v3941
        %4522 = vmatpush.bf16.msra.mxu0 %v3937
        %4523 = vmatmul.bf16.gmra.mxu0 %v2079
        %v4524 = vpop.f32.mrf.mxu0
        %v4525 = vadd.f32 %v4512, %v4524
        %v4526 = vpop.f32.mrf.mxu0
        %4527 = vdwg.mxu0
        %4528 = vmatpush.bf16.msra.mxu0 %v3997
        %4529 = vmatpush.bf16.msra.mxu0 %v3993
        %4530 = vmatpush.bf16.msra.mxu0 %v3989
        %4531 = vmatpush.bf16.msra.mxu0 %v3985
        %4532 = vmatpush.bf16.msra.mxu0 %v3981
        %4533 = vmatpush.bf16.msra.mxu0 %v3977
        %4534 = vmatpush.bf16.msra.mxu0 %v3973
        %4535 = vmatpush.bf16.msra.mxu0 %v3969
        %4536 = vmatmul.bf16.gmra.mxu0 %v2080
        %v4537 = vpop.f32.mrf.mxu0
        %v4538 = vadd.f32 %v4525, %v4537
        %v4539 = vpop.f32.mrf.mxu0
        %4540 = vdwg.mxu0
        %4541 = vmatpush.bf16.msra.mxu0 %v3646
        %4542 = vmatpush.bf16.msra.mxu0 %v3642
        %4543 = vmatpush.bf16.msra.mxu0 %v3638
        %4544 = vmatpush.bf16.msra.mxu0 %v3634
        %4545 = vmatpush.bf16.msra.mxu0 %v3630
        %4546 = vmatpush.bf16.msra.mxu0 %v3626
        %4547 = vmatpush.bf16.msra.mxu0 %v3622
        %4548 = vmatpush.bf16.msra.mxu0 %v3618
        %4549 = vmatmul.bf16.gmra.mxu0 %v2069
        %v4550 = vpop.f32.mrf.mxu0
        %v4551 = vadd.f32 0.0, %v4550
        %v4552 = vpop.f32.mrf.mxu0
        %4553 = vdwg.mxu0
        %4554 = vmatpush.bf16.msra.mxu0 %v3678
        %4555 = vmatpush.bf16.msra.mxu0 %v3674
        %4556 = vmatpush.bf16.msra.mxu0 %v3670
        %4557 = vmatpush.bf16.msra.mxu0 %v3666
        %4558 = vmatpush.bf16.msra.mxu0 %v3662
        %4559 = vmatpush.bf16.msra.mxu0 %v3658
        %4560 = vmatpush.bf16.msra.mxu0 %v3654
        %4561 = vmatpush.bf16.msra.mxu0 %v3650
        %4562 = vmatmul.bf16.gmra.mxu0 %v2070
        %v4563 = vpop.f32.mrf.mxu0
        %v4564 = vadd.f32 %v4551, %v4563
        %v4565 = vpop.f32.mrf.mxu0
        %4566 = vdwg.mxu0
        %4567 = vmatpush.bf16.msra.mxu0 %v3710
        %4568 = vmatpush.bf16.msra.mxu0 %v3706
        %4569 = vmatpush.bf16.msra.mxu0 %v3702
        %4570 = vmatpush.bf16.msra.mxu0 %v3698
        %4571 = vmatpush.bf16.msra.mxu0 %v3694
        %4572 = vmatpush.bf16.msra.mxu0 %v3690
        %4573 = vmatpush.bf16.msra.mxu0 %v3686
        %4574 = vmatpush.bf16.msra.mxu0 %v3682
        %4575 = vmatmul.bf16.gmra.mxu0 %v2071
        %v4576 = vpop.f32.mrf.mxu0
        %v4577 = vadd.f32 %v4564, %v4576
        %v4578 = vpop.f32.mrf.mxu0
        %4579 = vdwg.mxu0
        %4580 = vmatpush.bf16.msra.mxu0 %v3742
        %4581 = vmatpush.bf16.msra.mxu0 %v3738
        %4582 = vmatpush.bf16.msra.mxu0 %v3734
        %4583 = vmatpush.bf16.msra.mxu0 %v3730
        %4584 = vmatpush.bf16.msra.mxu0 %v3726
        %4585 = vmatpush.bf16.msra.mxu0 %v3722
        %4586 = vmatpush.bf16.msra.mxu0 %v3718
        %4587 = vmatpush.bf16.msra.mxu0 %v3714
        %4588 = vmatmul.bf16.gmra.mxu0 %v2072
        %v4589 = vpop.f32.mrf.mxu0
        %v4590 = vadd.f32 %v4577, %v4589
        %v4591 = vpop.f32.mrf.mxu0
        %4592 = vdwg.mxu0
        %4593 = vmatpush.bf16.msra.mxu0 %v3774
        %4594 = vmatpush.bf16.msra.mxu0 %v3770
        %4595 = vmatpush.bf16.msra.mxu0 %v3766
        %4596 = vmatpush.bf16.msra.mxu0 %v3762
        %4597 = vmatpush.bf16.msra.mxu0 %v3758
        %4598 = vmatpush.bf16.msra.mxu0 %v3754
        %4599 = vmatpush.bf16.msra.mxu0 %v3750
        %4600 = vmatpush.bf16.msra.mxu0 %v3746
        %4601 = vmatmul.bf16.gmra.mxu0 %v2073
        %v4602 = vpop.f32.mrf.mxu0
        %v4603 = vadd.f32 %v4590, %v4602
        %v4604 = vpop.f32.mrf.mxu0
        %4605 = vdwg.mxu0
        %4606 = vmatpush.bf16.msra.mxu0 %v3806
        %4607 = vmatpush.bf16.msra.mxu0 %v3802
        %4608 = vmatpush.bf16.msra.mxu0 %v3798
        %4609 = vmatpush.bf16.msra.mxu0 %v3794
        %4610 = vmatpush.bf16.msra.mxu0 %v3790
        %4611 = vmatpush.bf16.msra.mxu0 %v3786
        %4612 = vmatpush.bf16.msra.mxu0 %v3782
        %4613 = vmatpush.bf16.msra.mxu0 %v3778
        %4614 = vmatmul.bf16.gmra.mxu0 %v2074
        %v4615 = vpop.f32.mrf.mxu0
        %v4616 = vadd.f32 %v4603, %v4615
        %v4617 = vpop.f32.mrf.mxu0
        %4618 = vdwg.mxu0
        %4619 = vmatpush.bf16.msra.mxu0 %v3838
        %4620 = vmatpush.bf16.msra.mxu0 %v3834
        %4621 = vmatpush.bf16.msra.mxu0 %v3830
        %4622 = vmatpush.bf16.msra.mxu0 %v3826
        %4623 = vmatpush.bf16.msra.mxu0 %v3822
        %4624 = vmatpush.bf16.msra.mxu0 %v3818
        %4625 = vmatpush.bf16.msra.mxu0 %v3814
        %4626 = vmatpush.bf16.msra.mxu0 %v3810
        %4627 = vmatmul.bf16.gmra.mxu0 %v2075
        %v4628 = vpop.f32.mrf.mxu0
        %v4629 = vadd.f32 %v4616, %v4628
        %v4630 = vpop.f32.mrf.mxu0
        %4631 = vdwg.mxu0
        %4632 = vmatpush.bf16.msra.mxu0 %v3870
        %4633 = vmatpush.bf16.msra.mxu0 %v3866
        %4634 = vmatpush.bf16.msra.mxu0 %v3862
        %4635 = vmatpush.bf16.msra.mxu0 %v3858
        %4636 = vmatpush.bf16.msra.mxu0 %v3854
        %4637 = vmatpush.bf16.msra.mxu0 %v3850
        %4638 = vmatpush.bf16.msra.mxu0 %v3846
        %4639 = vmatpush.bf16.msra.mxu0 %v3842
        %4640 = vmatmul.bf16.gmra.mxu0 %v2076
        %v4641 = vpop.f32.mrf.mxu0
        %v4642 = vadd.f32 %v4629, %v4641
        %v4643 = vpop.f32.mrf.mxu0
        %4644 = vdwg.mxu0
        %4645 = vmatpush.bf16.msra.mxu0 %v3902
        %4646 = vmatpush.bf16.msra.mxu0 %v3898
        %4647 = vmatpush.bf16.msra.mxu0 %v3894
        %4648 = vmatpush.bf16.msra.mxu0 %v3890
        %4649 = vmatpush.bf16.msra.mxu0 %v3886
        %4650 = vmatpush.bf16.msra.mxu0 %v3882
        %4651 = vmatpush.bf16.msra.mxu0 %v3878
        %4652 = vmatpush.bf16.msra.mxu0 %v3874
        %4653 = vmatmul.bf16.gmra.mxu0 %v2077
        %v4654 = vpop.f32.mrf.mxu0
        %v4655 = vadd.f32 %v4642, %v4654
        %v4656 = vpop.f32.mrf.mxu0
        %4657 = vdwg.mxu0
        %4658 = vmatpush.bf16.msra.mxu0 %v3934
        %4659 = vmatpush.bf16.msra.mxu0 %v3930
        %4660 = vmatpush.bf16.msra.mxu0 %v3926
        %4661 = vmatpush.bf16.msra.mxu0 %v3922
        %4662 = vmatpush.bf16.msra.mxu0 %v3918
        %4663 = vmatpush.bf16.msra.mxu0 %v3914
        %4664 = vmatpush.bf16.msra.mxu0 %v3910
        %4665 = vmatpush.bf16.msra.mxu0 %v3906
        %4666 = vmatmul.bf16.gmra.mxu0 %v2078
        %v4667 = vpop.f32.mrf.mxu0
        %v4668 = vadd.f32 %v4655, %v4667
        %v4669 = vpop.f32.mrf.mxu0
        %4670 = vdwg.mxu0
        %4671 = vmatpush.bf16.msra.mxu0 %v3966
        %4672 = vmatpush.bf16.msra.mxu0 %v3962
        %4673 = vmatpush.bf16.msra.mxu0 %v3958
        %4674 = vmatpush.bf16.msra.mxu0 %v3954
        %4675 = vmatpush.bf16.msra.mxu0 %v3950
        %4676 = vmatpush.bf16.msra.mxu0 %v3946
        %4677 = vmatpush.bf16.msra.mxu0 %v3942
        %4678 = vmatpush.bf16.msra.mxu0 %v3938
        %4679 = vmatmul.bf16.gmra.mxu0 %v2079
        %v4680 = vpop.f32.mrf.mxu0
        %v4681 = vadd.f32 %v4668, %v4680
        %v4682 = vpop.f32.mrf.mxu0
        %4683 = vdwg.mxu0
        %4684 = vmatpush.bf16.msra.mxu0 %v3998
        %4685 = vmatpush.bf16.msra.mxu0 %v3994
        %4686 = vmatpush.bf16.msra.mxu0 %v3990
        %4687 = vmatpush.bf16.msra.mxu0 %v3986
        %4688 = vmatpush.bf16.msra.mxu0 %v3982
        %4689 = vmatpush.bf16.msra.mxu0 %v3978
        %4690 = vmatpush.bf16.msra.mxu0 %v3974
        %4691 = vmatpush.bf16.msra.mxu0 %v3970
        %4692 = vmatmul.bf16.gmra.mxu0 %v2080
        %v4693 = vpop.f32.mrf.mxu0
        %v4694 = vadd.f32 %v4681, %v4693
        %v4695 = vpop.f32.mrf.mxu0
        %4696 = vdwg.mxu0
        %4697 = vmatpush.bf16.msra.mxu0 %v3647
        %4698 = vmatpush.bf16.msra.mxu0 %v3643
        %4699 = vmatpush.bf16.msra.mxu0 %v3639
        %4700 = vmatpush.bf16.msra.mxu0 %v3635
        %4701 = vmatpush.bf16.msra.mxu0 %v3631
        %4702 = vmatpush.bf16.msra.mxu0 %v3627
        %4703 = vmatpush.bf16.msra.mxu0 %v3623
        %4704 = vmatpush.bf16.msra.mxu0 %v3619
        %4705 = vmatmul.bf16.gmra.mxu0 %v2069
        %v4706 = vpop.f32.mrf.mxu0
        %v4707 = vadd.f32 0.0, %v4706
        %v4708 = vpop.f32.mrf.mxu0
        %4709 = vdwg.mxu0
        %4710 = vmatpush.bf16.msra.mxu0 %v3679
        %4711 = vmatpush.bf16.msra.mxu0 %v3675
        %4712 = vmatpush.bf16.msra.mxu0 %v3671
        %4713 = vmatpush.bf16.msra.mxu0 %v3667
        %4714 = vmatpush.bf16.msra.mxu0 %v3663
        %4715 = vmatpush.bf16.msra.mxu0 %v3659
        %4716 = vmatpush.bf16.msra.mxu0 %v3655
        %4717 = vmatpush.bf16.msra.mxu0 %v3651
        %4718 = vmatmul.bf16.gmra.mxu0 %v2070
        %v4719 = vpop.f32.mrf.mxu0
        %v4720 = vadd.f32 %v4707, %v4719
        %v4721 = vpop.f32.mrf.mxu0
        %4722 = vdwg.mxu0
        %4723 = vmatpush.bf16.msra.mxu0 %v3711
        %4724 = vmatpush.bf16.msra.mxu0 %v3707
        %4725 = vmatpush.bf16.msra.mxu0 %v3703
        %4726 = vmatpush.bf16.msra.mxu0 %v3699
        %4727 = vmatpush.bf16.msra.mxu0 %v3695
        %4728 = vmatpush.bf16.msra.mxu0 %v3691
        %4729 = vmatpush.bf16.msra.mxu0 %v3687
        %4730 = vmatpush.bf16.msra.mxu0 %v3683
        %4731 = vmatmul.bf16.gmra.mxu0 %v2071
        %v4732 = vpop.f32.mrf.mxu0
        %v4733 = vadd.f32 %v4720, %v4732
        %v4734 = vpop.f32.mrf.mxu0
        %4735 = vdwg.mxu0
        %4736 = vmatpush.bf16.msra.mxu0 %v3743
        %4737 = vmatpush.bf16.msra.mxu0 %v3739
        %4738 = vmatpush.bf16.msra.mxu0 %v3735
        %4739 = vmatpush.bf16.msra.mxu0 %v3731
        %4740 = vmatpush.bf16.msra.mxu0 %v3727
        %4741 = vmatpush.bf16.msra.mxu0 %v3723
        %4742 = vmatpush.bf16.msra.mxu0 %v3719
        %4743 = vmatpush.bf16.msra.mxu0 %v3715
        %4744 = vmatmul.bf16.gmra.mxu0 %v2072
        %v4745 = vpop.f32.mrf.mxu0
        %v4746 = vadd.f32 %v4733, %v4745
        %v4747 = vpop.f32.mrf.mxu0
        %4748 = vdwg.mxu0
        %4749 = vmatpush.bf16.msra.mxu0 %v3775
        %4750 = vmatpush.bf16.msra.mxu0 %v3771
        %4751 = vmatpush.bf16.msra.mxu0 %v3767
        %4752 = vmatpush.bf16.msra.mxu0 %v3763
        %4753 = vmatpush.bf16.msra.mxu0 %v3759
        %4754 = vmatpush.bf16.msra.mxu0 %v3755
        %4755 = vmatpush.bf16.msra.mxu0 %v3751
        %4756 = vmatpush.bf16.msra.mxu0 %v3747
        %4757 = vmatmul.bf16.gmra.mxu0 %v2073
        %v4758 = vpop.f32.mrf.mxu0
        %v4759 = vadd.f32 %v4746, %v4758
        %v4760 = vpop.f32.mrf.mxu0
        %4761 = vdwg.mxu0
        %4762 = vmatpush.bf16.msra.mxu0 %v3807
        %4763 = vmatpush.bf16.msra.mxu0 %v3803
        %4764 = vmatpush.bf16.msra.mxu0 %v3799
        %4765 = vmatpush.bf16.msra.mxu0 %v3795
        %4766 = vmatpush.bf16.msra.mxu0 %v3791
        %4767 = vmatpush.bf16.msra.mxu0 %v3787
        %4768 = vmatpush.bf16.msra.mxu0 %v3783
        %4769 = vmatpush.bf16.msra.mxu0 %v3779
        %4770 = vmatmul.bf16.gmra.mxu0 %v2074
        %v4771 = vpop.f32.mrf.mxu0
        %v4772 = vadd.f32 %v4759, %v4771
        %v4773 = vpop.f32.mrf.mxu0
        %4774 = vdwg.mxu0
        %4775 = vmatpush.bf16.msra.mxu0 %v3839
        %4776 = vmatpush.bf16.msra.mxu0 %v3835
        %4777 = vmatpush.bf16.msra.mxu0 %v3831
        %4778 = vmatpush.bf16.msra.mxu0 %v3827
        %4779 = vmatpush.bf16.msra.mxu0 %v3823
        %4780 = vmatpush.bf16.msra.mxu0 %v3819
        %4781 = vmatpush.bf16.msra.mxu0 %v3815
        %4782 = vmatpush.bf16.msra.mxu0 %v3811
        %4783 = vmatmul.bf16.gmra.mxu0 %v2075
        %v4784 = vpop.f32.mrf.mxu0
        %v4785 = vadd.f32 %v4772, %v4784
        %v4786 = vpop.f32.mrf.mxu0
        %4787 = vdwg.mxu0
        %4788 = vmatpush.bf16.msra.mxu0 %v3871
        %4789 = vmatpush.bf16.msra.mxu0 %v3867
        %4790 = vmatpush.bf16.msra.mxu0 %v3863
        %4791 = vmatpush.bf16.msra.mxu0 %v3859
        %4792 = vmatpush.bf16.msra.mxu0 %v3855
        %4793 = vmatpush.bf16.msra.mxu0 %v3851
        %4794 = vmatpush.bf16.msra.mxu0 %v3847
        %4795 = vmatpush.bf16.msra.mxu0 %v3843
        %4796 = vmatmul.bf16.gmra.mxu0 %v2076
        %v4797 = vpop.f32.mrf.mxu0
        %v4798 = vadd.f32 %v4785, %v4797
        %v4799 = vpop.f32.mrf.mxu0
        %4800 = vdwg.mxu0
        %4801 = vmatpush.bf16.msra.mxu0 %v3903
        %4802 = vmatpush.bf16.msra.mxu0 %v3899
        %4803 = vmatpush.bf16.msra.mxu0 %v3895
        %4804 = vmatpush.bf16.msra.mxu0 %v3891
        %4805 = vmatpush.bf16.msra.mxu0 %v3887
        %4806 = vmatpush.bf16.msra.mxu0 %v3883
        %4807 = vmatpush.bf16.msra.mxu0 %v3879
        %4808 = vmatpush.bf16.msra.mxu0 %v3875
        %4809 = vmatmul.bf16.gmra.mxu0 %v2077
        %v4810 = vpop.f32.mrf.mxu0
        %v4811 = vadd.f32 %v4798, %v4810
        %v4812 = vpop.f32.mrf.mxu0
        %4813 = vdwg.mxu0
        %4814 = vmatpush.bf16.msra.mxu0 %v3935
        %4815 = vmatpush.bf16.msra.mxu0 %v3931
        %4816 = vmatpush.bf16.msra.mxu0 %v3927
        %4817 = vmatpush.bf16.msra.mxu0 %v3923
        %4818 = vmatpush.bf16.msra.mxu0 %v3919
        %4819 = vmatpush.bf16.msra.mxu0 %v3915
        %4820 = vmatpush.bf16.msra.mxu0 %v3911
        %4821 = vmatpush.bf16.msra.mxu0 %v3907
        %4822 = vmatmul.bf16.gmra.mxu0 %v2078
        %v4823 = vpop.f32.mrf.mxu0
        %v4824 = vadd.f32 %v4811, %v4823
        %v4825 = vpop.f32.mrf.mxu0
        %4826 = vdwg.mxu0
        %4827 = vmatpush.bf16.msra.mxu0 %v3967
        %4828 = vmatpush.bf16.msra.mxu0 %v3963
        %4829 = vmatpush.bf16.msra.mxu0 %v3959
        %4830 = vmatpush.bf16.msra.mxu0 %v3955
        %4831 = vmatpush.bf16.msra.mxu0 %v3951
        %4832 = vmatpush.bf16.msra.mxu0 %v3947
        %4833 = vmatpush.bf16.msra.mxu0 %v3943
        %4834 = vmatpush.bf16.msra.mxu0 %v3939
        %4835 = vmatmul.bf16.gmra.mxu0 %v2079
        %v4836 = vpop.f32.mrf.mxu0
        %v4837 = vadd.f32 %v4824, %v4836
        %v4838 = vpop.f32.mrf.mxu0
        %4839 = vdwg.mxu0
        %4840 = vmatpush.bf16.msra.mxu0 %v3999
        %4841 = vmatpush.bf16.msra.mxu0 %v3995
        %4842 = vmatpush.bf16.msra.mxu0 %v3991
        %4843 = vmatpush.bf16.msra.mxu0 %v3987
        %4844 = vmatpush.bf16.msra.mxu0 %v3983
        %4845 = vmatpush.bf16.msra.mxu0 %v3979
        %4846 = vmatpush.bf16.msra.mxu0 %v3975
        %4847 = vmatpush.bf16.msra.mxu0 %v3971
        %4848 = vmatmul.bf16.gmra.mxu0 %v2080
        %v4849 = vpop.f32.mrf.mxu0
        %v4850 = vadd.f32 %v4837, %v4849
        %v4851 = vpop.f32.mrf.mxu0
        %4852 = vdwg.mxu0
        %4853 = vmatpush.bf16.msra.mxu0 %v3648
        %4854 = vmatpush.bf16.msra.mxu0 %v3644
        %4855 = vmatpush.bf16.msra.mxu0 %v3640
        %4856 = vmatpush.bf16.msra.mxu0 %v3636
        %4857 = vmatpush.bf16.msra.mxu0 %v3632
        %4858 = vmatpush.bf16.msra.mxu0 %v3628
        %4859 = vmatpush.bf16.msra.mxu0 %v3624
        %4860 = vmatpush.bf16.msra.mxu0 %v3620
        %4861 = vmatmul.bf16.gmra.mxu0 %v2069
        %v4862 = vpop.f32.mrf.mxu0
        %v4863 = vadd.f32 0.0, %v4862
        %v4864 = vpop.f32.mrf.mxu0
        %4865 = vdwg.mxu0
        %4866 = vmatpush.bf16.msra.mxu0 %v3680
        %4867 = vmatpush.bf16.msra.mxu0 %v3676
        %4868 = vmatpush.bf16.msra.mxu0 %v3672
        %4869 = vmatpush.bf16.msra.mxu0 %v3668
        %4870 = vmatpush.bf16.msra.mxu0 %v3664
        %4871 = vmatpush.bf16.msra.mxu0 %v3660
        %4872 = vmatpush.bf16.msra.mxu0 %v3656
        %4873 = vmatpush.bf16.msra.mxu0 %v3652
        %4874 = vmatmul.bf16.gmra.mxu0 %v2070
        %v4875 = vpop.f32.mrf.mxu0
        %v4876 = vadd.f32 %v4863, %v4875
        %v4877 = vpop.f32.mrf.mxu0
        %4878 = vdwg.mxu0
        %4879 = vmatpush.bf16.msra.mxu0 %v3712
        %4880 = vmatpush.bf16.msra.mxu0 %v3708
        %4881 = vmatpush.bf16.msra.mxu0 %v3704
        %4882 = vmatpush.bf16.msra.mxu0 %v3700
        %4883 = vmatpush.bf16.msra.mxu0 %v3696
        %4884 = vmatpush.bf16.msra.mxu0 %v3692
        %4885 = vmatpush.bf16.msra.mxu0 %v3688
        %4886 = vmatpush.bf16.msra.mxu0 %v3684
        %4887 = vmatmul.bf16.gmra.mxu0 %v2071
        %v4888 = vpop.f32.mrf.mxu0
        %v4889 = vadd.f32 %v4876, %v4888
        %v4890 = vpop.f32.mrf.mxu0
        %4891 = vdwg.mxu0
        %4892 = vmatpush.bf16.msra.mxu0 %v3744
        %4893 = vmatpush.bf16.msra.mxu0 %v3740
        %4894 = vmatpush.bf16.msra.mxu0 %v3736
        %4895 = vmatpush.bf16.msra.mxu0 %v3732
        %4896 = vmatpush.bf16.msra.mxu0 %v3728
        %4897 = vmatpush.bf16.msra.mxu0 %v3724
        %4898 = vmatpush.bf16.msra.mxu0 %v3720
        %4899 = vmatpush.bf16.msra.mxu0 %v3716
        %4900 = vmatmul.bf16.gmra.mxu0 %v2072
        %v4901 = vpop.f32.mrf.mxu0
        %v4902 = vadd.f32 %v4889, %v4901
        %v4903 = vpop.f32.mrf.mxu0
        %4904 = vdwg.mxu0
        %4905 = vmatpush.bf16.msra.mxu0 %v3776
        %4906 = vmatpush.bf16.msra.mxu0 %v3772
        %4907 = vmatpush.bf16.msra.mxu0 %v3768
        %4908 = vmatpush.bf16.msra.mxu0 %v3764
        %4909 = vmatpush.bf16.msra.mxu0 %v3760
        %4910 = vmatpush.bf16.msra.mxu0 %v3756
        %4911 = vmatpush.bf16.msra.mxu0 %v3752
        %4912 = vmatpush.bf16.msra.mxu0 %v3748
        %4913 = vmatmul.bf16.gmra.mxu0 %v2073
        %v4914 = vpop.f32.mrf.mxu0
        %v4915 = vadd.f32 %v4902, %v4914
        %v4916 = vpop.f32.mrf.mxu0
        %4917 = vdwg.mxu0
        %4918 = vmatpush.bf16.msra.mxu0 %v3808
        %4919 = vmatpush.bf16.msra.mxu0 %v3804
        %4920 = vmatpush.bf16.msra.mxu0 %v3800
        %4921 = vmatpush.bf16.msra.mxu0 %v3796
        %4922 = vmatpush.bf16.msra.mxu0 %v3792
        %4923 = vmatpush.bf16.msra.mxu0 %v3788
        %4924 = vmatpush.bf16.msra.mxu0 %v3784
        %4925 = vmatpush.bf16.msra.mxu0 %v3780
        %4926 = vmatmul.bf16.gmra.mxu0 %v2074
        %v4927 = vpop.f32.mrf.mxu0
        %v4928 = vadd.f32 %v4915, %v4927
        %v4929 = vpop.f32.mrf.mxu0
        %4930 = vdwg.mxu0
        %4931 = vmatpush.bf16.msra.mxu0 %v3840
        %4932 = vmatpush.bf16.msra.mxu0 %v3836
        %4933 = vmatpush.bf16.msra.mxu0 %v3832
        %4934 = vmatpush.bf16.msra.mxu0 %v3828
        %4935 = vmatpush.bf16.msra.mxu0 %v3824
        %4936 = vmatpush.bf16.msra.mxu0 %v3820
        %4937 = vmatpush.bf16.msra.mxu0 %v3816
        %4938 = vmatpush.bf16.msra.mxu0 %v3812
        %4939 = vmatmul.bf16.gmra.mxu0 %v2075
        %v4940 = vpop.f32.mrf.mxu0
        %v4941 = vadd.f32 %v4928, %v4940
        %v4942 = vpop.f32.mrf.mxu0
        %4943 = vdwg.mxu0
        %4944 = vmatpush.bf16.msra.mxu0 %v3872
        %4945 = vmatpush.bf16.msra.mxu0 %v3868
        %4946 = vmatpush.bf16.msra.mxu0 %v3864
        %4947 = vmatpush.bf16.msra.mxu0 %v3860
        %4948 = vmatpush.bf16.msra.mxu0 %v3856
        %4949 = vmatpush.bf16.msra.mxu0 %v3852
        %4950 = vmatpush.bf16.msra.mxu0 %v3848
        %4951 = vmatpush.bf16.msra.mxu0 %v3844
        %4952 = vmatmul.bf16.gmra.mxu0 %v2076
        %v4953 = vpop.f32.mrf.mxu0
        %v4954 = vadd.f32 %v4941, %v4953
        %v4955 = vpop.f32.mrf.mxu0
        %4956 = vdwg.mxu0
        %4957 = vmatpush.bf16.msra.mxu0 %v3904
        %4958 = vmatpush.bf16.msra.mxu0 %v3900
        %4959 = vmatpush.bf16.msra.mxu0 %v3896
        %4960 = vmatpush.bf16.msra.mxu0 %v3892
        %4961 = vmatpush.bf16.msra.mxu0 %v3888
        %4962 = vmatpush.bf16.msra.mxu0 %v3884
        %4963 = vmatpush.bf16.msra.mxu0 %v3880
        %4964 = vmatpush.bf16.msra.mxu0 %v3876
        %4965 = vmatmul.bf16.gmra.mxu0 %v2077
        %v4966 = vpop.f32.mrf.mxu0
        %v4967 = vadd.f32 %v4954, %v4966
        %v4968 = vpop.f32.mrf.mxu0
        %4969 = vdwg.mxu0
        %4970 = vmatpush.bf16.msra.mxu0 %v3936
        %4971 = vmatpush.bf16.msra.mxu0 %v3932
        %4972 = vmatpush.bf16.msra.mxu0 %v3928
        %4973 = vmatpush.bf16.msra.mxu0 %v3924
        %4974 = vmatpush.bf16.msra.mxu0 %v3920
        %4975 = vmatpush.bf16.msra.mxu0 %v3916
        %4976 = vmatpush.bf16.msra.mxu0 %v3912
        %4977 = vmatpush.bf16.msra.mxu0 %v3908
        %4978 = vmatmul.bf16.gmra.mxu0 %v2078
        %v4979 = vpop.f32.mrf.mxu0
        %v4980 = vadd.f32 %v4967, %v4979
        %v4981 = vpop.f32.mrf.mxu0
        %4982 = vdwg.mxu0
        %4983 = vmatpush.bf16.msra.mxu0 %v3968
        %4984 = vmatpush.bf16.msra.mxu0 %v3964
        %4985 = vmatpush.bf16.msra.mxu0 %v3960
        %4986 = vmatpush.bf16.msra.mxu0 %v3956
        %4987 = vmatpush.bf16.msra.mxu0 %v3952
        %4988 = vmatpush.bf16.msra.mxu0 %v3948
        %4989 = vmatpush.bf16.msra.mxu0 %v3944
        %4990 = vmatpush.bf16.msra.mxu0 %v3940
        %4991 = vmatmul.bf16.gmra.mxu0 %v2079
        %v4992 = vpop.f32.mrf.mxu0
        %v4993 = vadd.f32 %v4980, %v4992
        %v4994 = vpop.f32.mrf.mxu0
        %4995 = vdwg.mxu0
        %4996 = vmatpush.bf16.msra.mxu0 %v4000
        %4997 = vmatpush.bf16.msra.mxu0 %v3996
        %4998 = vmatpush.bf16.msra.mxu0 %v3992
        %4999 = vmatpush.bf16.msra.mxu0 %v3988
        %5000 = vmatpush.bf16.msra.mxu0 %v3984
        %5001 = vmatpush.bf16.msra.mxu0 %v3980
        %5002 = vmatpush.bf16.msra.mxu0 %v3976
        %5003 = vmatpush.bf16.msra.mxu0 %v3972
        %5004 = vmatmul.bf16.gmra.mxu0 %v2080
        %v5005 = vpop.f32.mrf.mxu0
        %v5006 = vadd.f32 %v4993, %v5005
        %v5007 = vpop.f32.mrf.mxu0
        %5008 = vdwg.mxu0
        %v5009 = vld [vmem:[%s424] sm:$0xf]
        %v5011 = vperm.slane %v5009, 0
        %v5012 = vperm.slane %v5009, 1
        %v5013 = vperm.slane %v5009, 2
        %v5014 = vperm.slane %v5009, 3
        %v5019 = vmul.f32 %v5011, %v4538
        %v5020 = vmul.f32 %v5012, %v4694
        %v5021 = vmul.f32 %v5013, %v4850
        %v5022 = vmul.f32 %v5014, %v5006
        %v5023 = vld [vmem:[%s434] sm:$0xf]
        %v5025 = vperm.slane %v5023, 0
        %v5026 = vperm.slane %v5023, 1
        %v5027 = vperm.slane %v5023, 2
        %v5028 = vperm.slane %v5023, 3
        %v5033 = vadd.f32 %v5019, %v5025
        %v5034 = vadd.f32 %v5020, %v5026
        %v5035 = vadd.f32 %v5021, %v5027
        %v5036 = vadd.f32 %v5022, %v5028
        %s5037 = smul.u32 %s36, 8
        %v5038 = vlaneseq
        %v5039 = vshrl.u32 %v5038, 7
        %v5040 = vstv %s5037
        %v5041 = vadd.s32 %v5040, %v5039
        %vm5042 = vcmp.lt.s32.totalorder %v5041, 4
        %v5043 = vsel %vm5042, %v5033, 0.0
        %v5044 = vsel %vm5042, %v5034, 0.0
        %v5045 = vsel %vm5042, %v5035, 0.0
        %v5046 = vsel %vm5042, %v5036, 0.0
        %v5047 = vld [vmem:[#allocation2] sm:$0xf]
        %v5048 = vrot.slane %v5043, 4
        %v5049 = vadd.f32 %v5043, %v5048
        %v5050 = vrot.slane %v5049, 2
        %v5051 = vadd.f32 %v5049, %v5050
        %v5052 = vrot.slane %v5051, 1
        %v5053 = vadd.f32 %v5051, %v5052
        %v5054 = vrot.slane %v5044, 4
        %v5055 = vadd.f32 %v5044, %v5054
        %v5056 = vrot.slane %v5055, 2
        %v5057 = vadd.f32 %v5055, %v5056
        %v5058 = vrot.slane %v5057, 1
        %v5059 = vadd.f32 %v5057, %v5058
        %v5060 = vrot.slane %v5045, 4
        %v5061 = vadd.f32 %v5045, %v5060
        %v5062 = vrot.slane %v5061, 2
        %v5063 = vadd.f32 %v5061, %v5062
        %v5064 = vrot.slane %v5063, 1
        %v5065 = vadd.f32 %v5063, %v5064
        %v5066 = vrot.slane %v5046, 4
        %v5067 = vadd.f32 %v5046, %v5066
        %v5068 = vrot.slane %v5067, 2
        %v5069 = vadd.f32 %v5067, %v5068
        %v5070 = vrot.slane %v5069, 1
        %v5071 = vadd.f32 %v5069, %v5070
        %v5076 = vrot.slane %v5059, 7
        %v5077 = vrot.slane %v5065, 6
        %v5078 = vrot.slane %v5071, 5
        %vm5079 = vcmask 1040384
        %v5080 = vsel %vm5079, %v5053, %v5076
        %vm5081 = vcmask 1042434
        %v5082 = vsel %vm5081, %v5077, %v5078
        %vm5083 = vcmask 1041408
        %v5084 = vsel %vm5083, %v5080, %v5082
        %v5086 = vadd.f32 %v5047, %v5084
        %v5087 = vlaneseq
        %vm5088 = vcmp.ge.s32.totalorder %v5087, 0
        %vm5089 = vcmp.lt.s32.totalorder %v5087, 512
        %vm5090 = vmand %vm5088, %vm5089
        %5091 = vst.msk [vmem:[#allocation2] sm:$0xf] %vm5090, %v5086
        // Predicated region
        $region81: #{tpu_custom_call.1} parent=47 // pred_check
          %p5092 = pneg %p496
        $region82: #{tpu_custom_call.1} parent=47 // pred_check_branch
          %5094 = sbr.rel (%p5092) target = $region84
        $region83: #{tpu_custom_call.1} parent=47 // pred_region
          %v5095 = vld [vmem:[#allocation2] sm:$0xf]
          %v5096 = vmul.f32 %v5095, 0.25
          %5097 = vst.msk [vmem:[%s495] sm:$0xf] %vm5090, %v5096
        $region84: #{tpu_custom_call.1} parent=47 // pred_fallthru
          _
        %s5098 = sand.u32 %s225, 1
        %s5099 = scalar_lea.sflag [#allocation5], %s5098
        %s5100 = sand.u32 %s225, 1
        %s5101 = smul.addr %s5100, 4
        %s5102 = scalar_lea.vmem [#allocation15], %s5101
        // Predicated region
        $region85: #{tpu_custom_call.1} parent=47 // pred_check
          %p5103 = pneg %p235
        $region86: #{tpu_custom_call.1} parent=47 // pred_check_branch
          %5105 = sbr.rel (%p5103) target = $region88
        $region87: #{tpu_custom_call.1} parent=47 // pred_region
          %5107 = vsyncadd %s5099, 0
          %s5108 = smul.addr %s35, 4
          %s5109 = scalar_lea.hbm %s7, %s5108
          %s5111 = sshll.u32 %s5102, 4
          %s5112 = int_to_ptr.vmem [resolvable:$true] %s5111
          %s5113 = sshll.u32 %s5109, 4
          %s5114 = int_to_ptr.hbm [resolvable:$true] %s5113
          %5116 = dma.vmem_to_hbm [thread:$0]  %s5112, 64, %s5114, %s5099
        $region88: #{tpu_custom_call.1} parent=47 // pred_fallthru
          _
      $region48: #{tpu_custom_call.1} parent=5 // pred_fallthru
        _
      %p5117 = scmp.le.s32.totalorder 2, %s26
      // Predicated region
      $region89: #{tpu_custom_call.1} parent=5 // pred_check
        %p5118 = pneg %p5117
      $region90: #{tpu_custom_call.1} parent=5 // pred_check_branch
        %5120 = sbr.rel (%p5118) target = $region92
      $region91: #{tpu_custom_call.1} parent=5 // pred_region
        %s5121 = ssub.s32 %s26, 2
        // Predicated region
        $region93: #{tpu_custom_call.1} parent=91 // pred_check
          %p5122 = pneg %p241
        $region94: #{tpu_custom_call.1} parent=91 // pred_check_branch
          %5124 = sbr.rel (%p5122) target = $region96
        $region95: #{tpu_custom_call.1} parent=91 // pred_region
          %s5125 = sand.u32 %s226, 1
          %s5126 = scalar_lea.sflag [#allocation5], %s5125
          %s5127 = sand.u32 %s226, 1
          %s5128 = smul.addr %s5127, 4
          %s5129 = scalar_lea.vmem [#allocation15], %s5128
          %5131 = dma.done %s5126, 64
        $region96: #{tpu_custom_call.1} parent=91 // pred_fallthru
          _
      $region92: #{tpu_custom_call.1} parent=5 // pred_fallthru
        _
    $region6: #{tpu_custom_call.1} parent=1 // loop_footer
      %s30 = sadd.s32 1, %s26
    $region7: #{tpu_custom_call.1} parent=1 // loop_footer_branch
      %25 = sbr.rel target = $region3
    $region8: #{tpu_custom_call.1} parent=1 // loop_exit
      _
    %5132 = vsyncpa [#allocation4], 1
    %s5133 = scalar_lea.sflag [#allocation4], 1
    %5134 = vsyncpa %s5133, 1
    %5135 = vsyncpa [#allocation7], 1
    %s5136 = scalar_lea.sflag [#allocation7], 1
    %5137 = vsyncpa %s5136, 1
    %5138 = vsyncpa [#allocation10], 1
    %s5139 = scalar_lea.sflag [#allocation10], 1
    %5140 = vsyncpa %s5139, 1
    %5141 = vsyncpa [#allocation13], 1
    %5142 = vsyncpa [#allocation5], 1
    %s5143 = scalar_lea.sflag [#allocation5], 1
    %5144 = vsyncpa %s5143, 1

</llo_original>
